<compile_context>
chip_gen: v6e
topology: v6e:2x2x1
jax: 0.10.0
libtpu: 0.0.40
codegen_flags: <defaults>
</compile_context>

<pallas_src>
import math
import functools

import jax
import jax.numpy as jnp
from jax.experimental import pallas as pl
from jax.experimental.pallas import tpu as pltpu

# ---- small synthetic config (mirrors MBartConfig structure, scaled down) ----
D_MODEL = 32          # hidden size
N_HEADS = 4           # decoder_attention_heads
HEAD_DIM = D_MODEL // N_HEADS
FFN_DIM = 64          # decoder_ffn_dim
N_LAYERS = 2          # decoder_layer
VOCAB = 64            # len(tokenizer) (synthetic)
MAX_POS = 32          # max_position_embeddings
LN_EPS = 1e-5
NEG_INF = float(jnp.finfo(jnp.float32).min)
INV_SQRT2 = 0.7071067811865476

# row indices of the packed per-layer vector block
(R_LN1G, R_LN1B, R_LN2G, R_LN2B, R_LN3G, R_LN3B,
 R_BQKV, R_BO, R_CBQ, R_CBKV, R_CBO, R_B1, R_B2) = range(13)
N_VEC_ROWS = 13


# ----------------------------- kernel helpers --------------------------------

def _layernorm(x, g, b):
    # f32 LayerNorm (VPU/EUP path kept in f32; TODO(synk): bf16 on v6e/v7x)
    mean = jnp.mean(x, axis=-1, keepdims=True)
    var = jnp.mean(jnp.square(x - mean), axis=-1, keepdims=True)
    return (x - mean) * jax.lax.rsqrt(var + LN_EPS) * g + b


def _attend(qh, kh, vh, bias):
    """qh: (Tq, H, Dh) already query-scaled; kh/vh: (Tk, H, Dh); bias: (Tq, Tk) or None.
    All heads batched into one pair of einsums -> one MXU stream, no per-head
    masked stores."""
    s = jnp.einsum('qhd,khd->hqk',
                   qh.astype(jnp.bfloat16), kh.astype(jnp.bfloat16),
                   preferred_element_type=jnp.float32)
    if bias is not None:
        s = s + bias[None, :, :]
    m = jnp.max(s, axis=-1, keepdims=True)
    p = jnp.exp(s - m)                                  # f32 softmax
    denom = jnp.sum(p, axis=-1, keepdims=True)
    p = p * pl.reciprocal(denom, approx=True)           # EUP slot, frees VALU
    return jnp.einsum('hqk,khd->qhd',
                      p.astype(jnp.bfloat16), vh.astype(jnp.bfloat16),
                      preferred_element_type=jnp.float32)


# ----------------------------- fused decoder kernel ---------------------------

def _decoder_kernel(
    x0_ref, enc_ref, mask_ref, gvec_ref, lvec_ref,
    wqkv_ref, wo_ref, cwq_ref, cwkv_ref, cwo_ref, w1_ref, w2_ref, lm_w_ref,
    logits_ref,
    x_scr,
    *, T, S, H, Dh, F,
):
    D = H * Dh
    lyr = pl.program_id(1)

    gv = gvec_ref[...]          # (4, D):  emb_g, emb_b, final_g, final_b
    lv = lvec_ref[...]          # (13, W): packed per-layer LN / bias rows

    # layernorm_embedding runs once, right before layer 0 of this batch block
    @pl.when(lyr == 0)
    def _():
        x_scr[...] = _layernorm(x0_ref[...], gv[0:1, :], gv[1:2, :])

    x = x_scr[...]

    # causal + padding additive bias built in-kernel (no (B,T,T) HBM stream)
    q_idx = jax.lax.broadcasted_iota(jnp.int32, (T, T), 0)
    k_idx = jax.lax.broadcasted_iota(jnp.int32, (T, T), 1)
    allowed = (q_idx >= k_idx) & (mask_ref[...] > 0)          # (T,T) & (1,T)
    bias = jnp.where(allowed, 0.0, NEG_INF).astype(jnp.float32)

    # ---------------- self attention (causal, pre-LN) ----------------
    # query scale is folded into wqkv / bqkv offline (prepare_params)
    h = _layernorm(x, lv[R_LN1G:R_LN1G + 1, :D], lv[R_LN1B:R_LN1B + 1, :D])
    qkv = jnp.dot(h.astype(jnp.bfloat16), wqkv_ref[...],
                  preferred_element_type=jnp.float32) + lv[R_BQKV:R_BQKV + 1, :3 * D]
    q = qkv[:, :D].reshape(T, H, Dh)
    k = qkv[:, D:2 * D].reshape(T, H, Dh)
    v = qkv[:, 2 * D:].reshape(T, H, Dh)
    ctx = _attend(q, k, v, bias).reshape(T, D)
    x = x + (jnp.dot(ctx.astype(jnp.bfloat16), wo_ref[...],
                     preferred_element_type=jnp.float32) + lv[R_BO:R_BO + 1, :D])

    # ---------------- cross attention with encoder states ----------------
    h = _layernorm(x, lv[R_LN2G:R_LN2G + 1, :D], lv[R_LN2B:R_LN2B + 1, :D])
    q2 = (jnp.dot(h.astype(jnp.bfloat16), cwq_ref[...],
                  preferred_element_type=jnp.float32)
          + lv[R_CBQ:R_CBQ + 1, :D]).reshape(T, H, Dh)
    kv = jnp.dot(enc_ref[...], cwkv_ref[...],
                 preferred_element_type=jnp.float32) + lv[R_CBKV:R_CBKV + 1, :2 * D]
    k2 = kv[:, :D].reshape(S, H, Dh)
    v2 = kv[:, D:].reshape(S, H, Dh)
    ctx2 = _attend(q2, k2, v2, None).reshape(T, D)
    x = x + (jnp.dot(ctx2.astype(jnp.bfloat16), cwo_ref[...],
                     preferred_element_type=jnp.float32) + lv[R_CBO:R_CBO + 1, :D])

    # ---------------- feed forward (exact-erf GELU, pre-LN) ----------------
    h = _layernorm(x, lv[R_LN3G:R_LN3G + 1, :D], lv[R_LN3B:R_LN3B + 1, :D])
    h1 = jnp.dot(h.astype(jnp.bfloat16), w1_ref[...],
                 preferred_element_type=jnp.float32) + lv[R_B1:R_B1 + 1, :F]
    h1 = 0.5 * h1 * (1.0 + jax.lax.erf(h1 * INV_SQRT2))       # f32 GELU
    h2 = jnp.dot(h1.astype(jnp.bfloat16), w2_ref[...],
                 preferred_element_type=jnp.float32) + lv[R_B2:R_B2 + 1, :D]
    x = x + h2

    x_scr[...] = x

    # final layer norm (add_final_layer_norm=True) + lm_head (bias=False)
    # TODO(synk): at real vocab sizes this needs a lane-dense vocab-tiled grid axis.
    @pl.when(lyr == pl.num_programs(1) - 1)
    def _():
        xf = _layernorm(x, gv[2:3, :], gv[3:4, :])
        logits_ref[...] = jnp.dot(xf.astype(jnp.bfloat16), lm_w_ref[...],
                                  preferred_element_type=jnp.float32)


# ------------------------------ forward wrapper --------------------------------

def bart_decoder_forward(params, input_ids, encoder_hidden_states, attention_mask=None):
    """Reproduces BARTDecoder.forward (eval mode, labels=None, no KV cache):
       MBart decoder (pre-LN, causal self-attn + cross-attn + exact GELU FFN,
       scale_embedding, learned pos-emb with offset 2, final layer norm) + lm_head.
    """
    B, T = input_ids.shape
    S = encoder_hidden_states.shape[1]
    D = D_MODEL

    # embeddings (gather = glue): tokens * sqrt(d_model) + learned positions (offset 2)
    tok = jnp.take(params["embed_tokens"], input_ids, axis=0) * math.sqrt(D_MODEL)
    pos = params["embed_positions"][jnp.arange(T) + 2]
    x0 = (tok + pos[None, :, :]).astype(jnp.float32)              # (B, T, D)

    if attention_mask is None:
        mask = jnp.ones((B, 1, T), jnp.int32)
    else:
        mask = attention_mask.astype(jnp.int32).reshape(B, 1, T)

    enc = encoder_hidden_states.astype(jnp.bfloat16)              # (B, S, D)

    n_rows, W = params["lvec"].shape[-2], params["lvec"].shape[-1]
    kernel = functools.partial(_decoder_kernel, T=T, S=S,
                               H=N_HEADS, Dh=HEAD_DIM, F=FFN_DIM)

    def batch_block(shape):          # indexed by batch block, constant over layers
        return pl.BlockSpec((None,) + shape, lambda b, l: (b,) + (0,) * len(shape))

    def layer_block(shape):          # layer-stacked weight, squeezed layer dim
        return pl.BlockSpec((None,) + shape, lambda b, l: (l,) + (0,) * len(shape))

    def const_block(shape):          # resident across all grid iterations
        return pl.BlockSpec(shape, lambda b, l: (0,) * len(shape))

    in_specs = [
        batch_block((T, D)),                 # x0
        batch_block((S, D)),                 # encoder states (bf16)
        batch_block((1, T)),                 # attention mask rows
        const_block((4, D)),                 # packed emb/final LN vectors
        layer_block((n_rows, W)),            # packed per-layer LN/bias vectors
        layer_block((D, 3 * D)),             # fused qkv weight (q-scale folded)
        layer_block((D, D)),                 # self out proj
        layer_block((D, D)),                 # cross q (scale folded)
        layer_block((D, 2 * D)),             # fused cross kv
        layer_block((D, D)),                 # cross out proj
        layer_block((D, FFN_DIM)),           # ffn w1
        layer_block((FFN_DIM, D)),           # ffn w2
        const_block((D, VOCAB)),             # lm_head (no bias)
    ]

    logits = pl.pallas_call(
        kernel,
        grid=(B, N_LAYERS),
        in_specs=in_specs,
        out_specs=batch_block((T, VOCAB)),
        out_shape=jax.ShapeDtypeStruct((B, T, VOCAB), jnp.float32),
        scratch_shapes=[
            pltpu.VMEM((T, D), jnp.float32),   # residual stream, carried over layers
        ],
        compiler_params=pltpu.CompilerParams(
            dimension_semantics=("parallel", "arbitrary"),   # batch across TCs (v7x)
            vmem_limit_bytes=64 * 1024 * 1024),
    )(
        x0, enc, mask, params["gvec"], params["lvec"],
        params["wqkv"], params["wo"], params["cwq"], params["cwkv"], params["cwo"],
        params["w1"], params["w2"], params["lm_head_w"],
    )
    # TODO(synk): CrossEntropyLoss(ignore_index=-100) branch when labels is given
    # is not implemented (test path uses labels=None, matching generation usage).
    return logits


# ---------------------------- parameter init / prep ----------------------------

def init_params(key):
    """Natural stacked per-layer weights (matmul weights bf16); a real checkpoint
    load would concatenate q/k/v into wqkv and cross k/v into cwkv the same way."""
    D, F, L = D_MODEL, FFN_DIM, N_LAYERS
    ks = jax.random.split(key, 10)
    wf32 = lambda kk, shape: jax.random.normal(kk, shape, jnp.float32) * 0.02
    wbf16 = lambda kk, shape: wf32(kk, shape).astype(jnp.bfloat16)
    zeros = lambda *s: jnp.zeros(s, jnp.float32)
    ones = lambda *s: jnp.ones(s, jnp.float32)

    layers = {
        "ln1_g": ones(L, 1, D), "ln1_b": zeros(L, 1, D),
        "wqkv": wbf16(ks[3], (L, D, 3 * D)), "bqkv": zeros(L, 1, 3 * D),
        "wo": wbf16(ks[4], (L, D, D)), "bo": zeros(L, 1, D),
        "ln2_g": ones(L, 1, D), "ln2_b": zeros(L, 1, D),
        "cwq": wbf16(ks[5], (L, D, D)), "cbq": zeros(L, 1, D),
        "cwkv": wbf16(ks[6], (L, D, 2 * D)), "cbkv": zeros(L, 1, 2 * D),
        "cwo": wbf16(ks[7], (L, D, D)), "cbo": zeros(L, 1, D),
        "ln3_g": ones(L, 1, D), "ln3_b": zeros(L, 1, D),
        "w1": wbf16(ks[8], (L, D, F)), "b1": zeros(L, 1, F),
        "w2": wbf16(ks[9], (L, F, D)), "b2": zeros(L, 1, D),
    }
    return {
        "embed_tokens": wf32(ks[0], (VOCAB, D)),
        "embed_positions": wf32(ks[1], (MAX_POS + 2, D)),   # +2 = MBart pos offset
        "ln_emb_g": ones(1, D), "ln_emb_b": zeros(1, D),
        "lnf_g": ones(1, D), "lnf_b": zeros(1, D),
        "lm_head_w": wbf16(ks[2], (D, VOCAB)),               # lm_head has bias=False
        "layers": layers,
    }


def prepare_params(raw):
    """One-time offline transforms: fold the query scale (head_dim**-0.5) into
    wqkv/bqkv Q columns and cwq/cbq, and pack the many tiny LN/bias vectors into
    single per-layer / global blocks (cuts DMA descriptor count ~3x)."""
    D, F = D_MODEL, FFN_DIM
    scale = HEAD_DIM ** -0.5
    L = raw["layers"]

    qscale = jnp.concatenate(
        [jnp.full((D,), scale, jnp.float32), jnp.ones((2 * D,), jnp.float32)])
    wqkv = (L["wqkv"].astype(jnp.float32) * qscale[None, None, :]).astype(jnp.bfloat16)
    bqkv = L["bqkv"] * qscale[None, None, :]
    cwq = (L["cwq"].astype(jnp.float32) * scale).astype(jnp.bfloat16)
    cbq = L["cbq"] * scale

    W = max(3 * D, 2 * D, F, D)

    def row(a):  # (L, 1, n) -> (L, 1, W) zero-padded
        return jnp.pad(a.astype(jnp.float32),
                       ((0, 0), (0, 0), (0, W - a.shape[-1])))

    lvec = jnp.concatenate([
        row(L["ln1_g"]), row(L["ln1_b"]),
        row(L["ln2_g"]), row(L["ln2_b"]),
        row(L["ln3_g"]), row(L["ln3_b"]),
        row(bqkv), row(L["bo"]), row(cbq), row(L["cbkv"]), row(L["cbo"]),
        row(L["b1"]), row(L["b2"]),
    ], axis=1)                                              # (L, 13, W)
    assert lvec.shape[1] == N_VEC_ROWS

    gvec = jnp.concatenate([raw["ln_emb_g"], raw["ln_emb_b"],
                            raw["lnf_g"], raw["lnf_b"]], axis=0)   # (4, D)

    return {
        "embed_tokens": raw["embed_tokens"],
        "embed_positions": raw["embed_positions"],
        "gvec": gvec, "lvec": lvec,
        "wqkv": wqkv, "wo": L["wo"],
        "cwq": cwq, "cwkv": L["cwkv"], "cwo": L["cwo"],
        "w1": L["w1"], "w2": L["w2"],
        "lm_head_w": raw["lm_head_w"],
    }


# --------------------------------- main ---------------------------------------

if __name__ == "__main__":
    key = jax.random.PRNGKey(0)
    pkey, ikey, ekey = jax.random.split(key, 3)

    params = prepare_params(init_params(pkey))   # offline weight prep (not per-call)

    B, T, S = 2, 8, 16
    input_ids = jax.random.randint(ikey, (B, T), 0, VOCAB, dtype=jnp.int32)
    encoder_hidden_states = jax.random.normal(ekey, (B, S, D_MODEL), jnp.float32)
    attention_mask = jnp.ones((B, T), jnp.int32)  # input_ids.ne(pad_token_id)

    fwd = jax.jit(bart_decoder_forward)
    logits = fwd(params, input_ids, encoder_hidden_states, attention_mask)
    jax.block_until_ready(logits)

    assert logits.shape == (B, T, VOCAB), logits.shape
    assert logits.dtype == jnp.float32
    assert bool(jnp.all(jnp.isfinite(logits)))
    print("KERNEL_OK")
</pallas_src>

<mosaic_0001>
module attributes {stable_mosaic.version = 11 : i64} {
  func.func @_decoder_kernel(%arg0: i32, %arg1: i32, %arg2: memref<1x8x32xf32, #tpu.memory_space<vmem>>, %arg3: memref<1x16x32xbf16, #tpu.memory_space<vmem>>, %arg4: memref<1x1x8xi32, #tpu.memory_space<vmem>>, %arg5: memref<4x32xf32, #tpu.memory_space<vmem>>, %arg6: memref<1x13x96xf32, #tpu.memory_space<vmem>>, %arg7: memref<1x32x96xbf16, #tpu.memory_space<vmem>>, %arg8: memref<1x32x32xbf16, #tpu.memory_space<vmem>>, %arg9: memref<1x32x32xbf16, #tpu.memory_space<vmem>>, %arg10: memref<1x32x64xbf16, #tpu.memory_space<vmem>>, %arg11: memref<1x32x32xbf16, #tpu.memory_space<vmem>>, %arg12: memref<1x32x64xbf16, #tpu.memory_space<vmem>>, %arg13: memref<1x64x32xbf16, #tpu.memory_space<vmem>>, %arg14: memref<32x64xbf16, #tpu.memory_space<vmem>>, %arg15: memref<1x8x64xf32, #tpu.memory_space<vmem>>, %arg16: memref<8x32xf32, #tpu.memory_space<vmem>>) attributes {dimension_semantics = [#tpu.dimension_semantics<parallel>, #tpu.dimension_semantics<arbitrary>], iteration_bounds = array<i64: 2, 2>, scalar_prefetch = 0 : i64, scratch_operands = 1 : i64, tpu.core_type = #tpu.core_type<tc>, window_params = [{transform_indices = @transform_0, window_bounds = array<i64: 1, 8, 32>}, {transform_indices = @transform_1, window_bounds = array<i64: 1, 16, 32>}, {transform_indices = @transform_2, window_bounds = array<i64: 1, 1, 8>}, {pipeline_mode = #tpu.pipeline_mode<synchronous>, transform_indices = @transform_3, window_bounds = array<i64: 4, 32>}, {transform_indices = @transform_4, window_bounds = array<i64: 1, 13, 96>}, {transform_indices = @transform_5, window_bounds = array<i64: 1, 32, 96>}, {transform_indices = @transform_6, window_bounds = array<i64: 1, 32, 32>}, {transform_indices = @transform_7, window_bounds = array<i64: 1, 32, 32>}, {transform_indices = @transform_8, window_bounds = array<i64: 1, 32, 64>}, {transform_indices = @transform_9, window_bounds = array<i64: 1, 32, 32>}, {transform_indices = @transform_10, window_bounds = array<i64: 1, 32, 64>}, {transform_indices = @transform_11, window_bounds = array<i64: 1, 64, 32>}, {pipeline_mode = #tpu.pipeline_mode<synchronous>, transform_indices = @transform_12, window_bounds = array<i64: 32, 64>}, {transform_indices = @transform_13, window_bounds = array<i64: 1, 8, 64>}]} {
    %c0 = arith.constant 0 : index
    %c0_0 = arith.constant 0 : index
    %0 = vector.load %arg5[%c0, %c0_0] : memref<4x32xf32, #tpu.memory_space<vmem>>, vector<4x32xf32>
    %c0_1 = arith.constant 0 : index
    %c0_2 = arith.constant 0 : index
    %c0_3 = arith.constant 0 : index
    %1 = vector.load %arg6[%c0_1, %c0_2, %c0_3] : memref<1x13x96xf32, #tpu.memory_space<vmem>>, vector<1x13x96xf32>
    %2 = vector.shape_cast %1 : vector<1x13x96xf32> to vector<13x96xf32>
    %c0_i32 = arith.constant 0 : i32
    %3 = arith.cmpi eq, %arg1, %c0_i32 : i32
    %4 = arith.extui %3 : i1 to i32
    %c0_i32_4 = arith.constant 0 : i32
    %5 = arith.cmpi ne, %4, %c0_i32_4 : i32
    scf.if %5 {
      %c0_72 = arith.constant 0 : index
      %c0_73 = arith.constant 0 : index
      %c0_74 = arith.constant 0 : index
      %206 = vector.load %arg2[%c0_72, %c0_73, %c0_74] : memref<1x8x32xf32, #tpu.memory_space<vmem>>, vector<1x8x32xf32>
      %207 = vector.shape_cast %206 : vector<1x8x32xf32> to vector<8x32xf32>
      %208 = vector.extract_strided_slice %0 {offsets = [0, 0], sizes = [1, 32], strides = [1, 1]} : vector<4x32xf32> to vector<1x32xf32>
      %209 = vector.extract_strided_slice %0 {offsets = [1, 0], sizes = [1, 32], strides = [1, 1]} : vector<4x32xf32> to vector<1x32xf32>
      %cst_75 = arith.constant dense<0.000000e+00> : vector<8xf32>
      %210 = vector.multi_reduction <add>, %207, %cst_75 [1] : vector<8x32xf32> to vector<8xf32>
      %211 = vector.shape_cast %210 : vector<8xf32> to vector<8x1xf32>
      %cst_76 = arith.constant 3.200000e+01 : f32
      %212 = vector.broadcast %cst_76 : f32 to vector<8x1xf32>
      %213 = arith.divf %211, %212 : vector<8x1xf32>
      %214 = vector.broadcast %213 : vector<8x1xf32> to vector<8x32xf32>
      %215 = arith.subf %207, %214 : vector<8x32xf32>
      %216 = arith.mulf %215, %215 : vector<8x32xf32>
      %cst_77 = arith.constant dense<0.000000e+00> : vector<8xf32>
      %217 = vector.multi_reduction <add>, %216, %cst_77 [1] : vector<8x32xf32> to vector<8xf32>
      %218 = vector.shape_cast %217 : vector<8xf32> to vector<8x1xf32>
      %cst_78 = arith.constant 3.200000e+01 : f32
      %219 = vector.broadcast %cst_78 : f32 to vector<8x1xf32>
      %220 = arith.divf %218, %219 : vector<8x1xf32>
      %221 = vector.broadcast %213 : vector<8x1xf32> to vector<8x32xf32>
      %222 = arith.subf %207, %221 : vector<8x32xf32>
      %cst_79 = arith.constant 9.99999974E-6 : f32
      %223 = vector.broadcast %cst_79 : f32 to vector<8x1xf32>
      %224 = arith.addf %220, %223 : vector<8x1xf32>
      %225 = math.rsqrt %224 : vector<8x1xf32>
      %226 = vector.broadcast %225 : vector<8x1xf32> to vector<8x32xf32>
      %227 = arith.mulf %222, %226 : vector<8x32xf32>
      %228 = vector.broadcast %208 : vector<1x32xf32> to vector<8x32xf32>
      %229 = arith.mulf %227, %228 : vector<8x32xf32>
      %230 = vector.broadcast %209 : vector<1x32xf32> to vector<8x32xf32>
      %231 = arith.addf %229, %230 : vector<8x32xf32>
      %c0_80 = arith.constant 0 : index
      %c0_81 = arith.constant 0 : index
      %232 = vector.load %arg16[%c0_80, %c0_81] : memref<8x32xf32, #tpu.memory_space<vmem>>, vector<8x32xf32>
      tpu.vector_store %arg16[%c0_80, %c0_81], %231 {strides = array<i32>} : memref<8x32xf32, #tpu.memory_space<vmem>>, vector<8x32xf32>,
    } else {
    }
    %c0_5 = arith.constant 0 : index
    %c0_6 = arith.constant 0 : index
    %6 = vector.load %arg16[%c0_5, %c0_6] : memref<8x32xf32, #tpu.memory_space<vmem>>, vector<8x32xf32>
    %7 = tpu.iota {dimensions = array<i32: 0>} : vector<8x8xi32>
    %8 = tpu.iota {dimensions = array<i32: 1>} : vector<8x8xi32>
    %9 = arith.cmpi sge, %7, %8 : vector<8x8xi32>
    %c0_7 = arith.constant 0 : index
    %c0_8 = arith.constant 0 : index
    %c0_9 = arith.constant 0 : index
    %10 = vector.load %arg4[%c0_7, %c0_8, %c0_9] : memref<1x1x8xi32, #tpu.memory_space<vmem>>, vector<1x1x8xi32>
    %11 = vector.shape_cast %10 : vector<1x1x8xi32> to vector<1x8xi32>
    %c0_i32_10 = arith.constant 0 : i32
    %12 = vector.broadcast %c0_i32_10 : i32 to vector<1x8xi32>
    %13 = arith.cmpi sgt, %11, %12 : vector<1x8xi32>
    %14 = vector.broadcast %13 : vector<1x8xi1> to vector<8x8xi1>
    %15 = arith.andi %9, %14 : vector<8x8xi1>
    %cst = arith.constant 0.000000e+00 : f32
    %cst_11 = arith.constant -3.40282347E+38 : f32
    %16 = vector.broadcast %cst : f32 to vector<8x8xf32>
    %17 = vector.broadcast %cst_11 : f32 to vector<8x8xf32>
    %18 = arith.select %15, %16, %17 : vector<8x8xi1>, vector<8x8xf32>
    %19 = vector.extract_strided_slice %2 {offsets = [0, 0], sizes = [1, 32], strides = [1, 1]} : vector<13x96xf32> to vector<1x32xf32>
    %20 = vector.extract_strided_slice %2 {offsets = [1, 0], sizes = [1, 32], strides = [1, 1]} : vector<13x96xf32> to vector<1x32xf32>
    %cst_12 = arith.constant dense<0.000000e+00> : vector<8xf32>
    %21 = vector.multi_reduction <add>, %6, %cst_12 [1] : vector<8x32xf32> to vector<8xf32>
    %22 = vector.shape_cast %21 : vector<8xf32> to vector<8x1xf32>
    %cst_13 = arith.constant 3.200000e+01 : f32
    %23 = vector.broadcast %cst_13 : f32 to vector<8x1xf32>
    %24 = arith.divf %22, %23 : vector<8x1xf32>
    %25 = vector.broadcast %24 : vector<8x1xf32> to vector<8x32xf32>
    %26 = arith.subf %6, %25 : vector<8x32xf32>
    %27 = arith.mulf %26, %26 : vector<8x32xf32>
    %cst_14 = arith.constant dense<0.000000e+00> : vector<8xf32>
    %28 = vector.multi_reduction <add>, %27, %cst_14 [1] : vector<8x32xf32> to vector<8xf32>
    %29 = vector.shape_cast %28 : vector<8xf32> to vector<8x1xf32>
    %cst_15 = arith.constant 3.200000e+01 : f32
    %30 = vector.broadcast %cst_15 : f32 to vector<8x1xf32>
    %31 = arith.divf %29, %30 : vector<8x1xf32>
    %32 = vector.broadcast %24 : vector<8x1xf32> to vector<8x32xf32>
    %33 = arith.subf %6, %32 : vector<8x32xf32>
    %cst_16 = arith.constant 9.99999974E-6 : f32
    %34 = vector.broadcast %cst_16 : f32 to vector<8x1xf32>
    %35 = arith.addf %31, %34 : vector<8x1xf32>
    %36 = math.rsqrt %35 : vector<8x1xf32>
    %37 = vector.broadcast %36 : vector<8x1xf32> to vector<8x32xf32>
    %38 = arith.mulf %33, %37 : vector<8x32xf32>
    %39 = vector.broadcast %19 : vector<1x32xf32> to vector<8x32xf32>
    %40 = arith.mulf %38, %39 : vector<8x32xf32>
    %41 = vector.broadcast %20 : vector<1x32xf32> to vector<8x32xf32>
    %42 = arith.addf %40, %41 : vector<8x32xf32>
    %43 = arith.truncf %42 : vector<8x32xf32> to vector<8x32xbf16>
    %c0_17 = arith.constant 0 : index
    %c0_18 = arith.constant 0 : index
    %c0_19 = arith.constant 0 : index
    %44 = vector.load %arg7[%c0_17, %c0_18, %c0_19] : memref<1x32x96xbf16, #tpu.memory_space<vmem>>, vector<1x32x96xbf16>
    %45 = vector.shape_cast %44 : vector<1x32x96xbf16> to vector<32x96xbf16>
    %cst_20 = arith.constant dense<0.000000e+00> : vector<8x96xf32>
    %46 = tpu.matmul %43, %45, %cst_20 {dimension_numbers = #tpu.dot_dimension_numbers<[1], [0], [0], [1], [0, 0, 1, 1], [], []>} : vector<8x32xbf16>, vector<32x96xbf16>, vector<8x96xf32> -> vector<8x96xf32>
    %47 = vector.extract_strided_slice %2 {offsets = [6, 0], sizes = [1, 96], strides = [1, 1]} : vector<13x96xf32> to vector<1x96xf32>
    %48 = vector.broadcast %47 : vector<1x96xf32> to vector<8x96xf32>
    %49 = arith.addf %46, %48 : vector<8x96xf32>
    %50 = vector.extract_strided_slice %49 {offsets = [0, 0], sizes = [8, 32], strides = [1, 1]} : vector<8x96xf32> to vector<8x32xf32>
    %51 = vector.shape_cast %50 : vector<8x32xf32> to vector<8x4x8xf32>
    %52 = vector.extract_strided_slice %49 {offsets = [0, 32], sizes = [8, 32], strides = [1, 1]} : vector<8x96xf32> to vector<8x32xf32>
    %53 = vector.shape_cast %52 : vector<8x32xf32> to vector<8x4x8xf32>
    %54 = vector.extract_strided_slice %49 {offsets = [0, 64], sizes = [8, 32], strides = [1, 1]} : vector<8x96xf32> to vector<8x32xf32>
    %55 = vector.shape_cast %54 : vector<8x32xf32> to vector<8x4x8xf32>
    %56 = arith.truncf %51 : vector<8x4x8xf32> to vector<8x4x8xbf16>
    %57 = arith.truncf %53 : vector<8x4x8xf32> to vector<8x4x8xbf16>
    "tpu.trace_start"() <{level = 10 : i32, message = "qhd,khd->hqk"}> : () -> ()
    %cst_21 = arith.constant dense<0.000000e+00> : vector<4x8x8xf32>
    %58 = tpu.matmul %56, %57, %cst_21 {dimension_numbers = #tpu.dot_dimension_numbers<[2], [2], [0], [0], [0, 1, 0, 0, 1, 0], [1], [1]>} : vector<8x4x8xbf16>, vector<8x4x8xbf16>, vector<4x8x8xf32> -> vector<4x8x8xf32>
    "tpu.trace_stop"() : () -> ()
    %59 = vector.shape_cast %18 : vector<8x8xf32> to vector<1x8x8xf32>
    %60 = vector.broadcast %59 : vector<1x8x8xf32> to vector<4x8x8xf32>
    %61 = arith.addf %58, %60 : vector<4x8x8xf32>
    %cst_22 = arith.constant dense<0xFF800000> : vector<4x8xf32>
    %62 = vector.multi_reduction <maximumf>, %61, %cst_22 [2] : vector<4x8x8xf32> to vector<4x8xf32>
    %63 = vector.shape_cast %62 : vector<4x8xf32> to vector<4x8x1xf32>
    %64 = vector.broadcast %63 : vector<4x8x1xf32> to vector<4x8x8xf32>
    %65 = arith.subf %61, %64 : vector<4x8x8xf32>
    %66 = math.exp %65 : vector<4x8x8xf32>
    %cst_23 = arith.constant dense<0.000000e+00> : vector<4x8xf32>
    %67 = vector.multi_reduction <add>, %66, %cst_23 [2] : vector<4x8x8xf32> to vector<4x8xf32>
    %68 = vector.shape_cast %67 : vector<4x8xf32> to vector<4x8x1xf32>
    %69 = tpu.reciprocal %68 {approx = true} : vector<4x8x1xf32> -> vector<4x8x1xf32>
    %70 = vector.broadcast %69 : vector<4x8x1xf32> to vector<4x8x8xf32>
    %71 = arith.mulf %66, %70 : vector<4x8x8xf32>
    %72 = arith.truncf %71 : vector<4x8x8xf32> to vector<4x8x8xbf16>
    %73 = arith.truncf %55 : vector<8x4x8xf32> to vector<8x4x8xbf16>
    "tpu.trace_start"() <{level = 10 : i32, message = "hqk,khd->qhd"}> : () -> ()
    %cst_24 = arith.constant dense<0.000000e+00> : vector<4x8x8xf32>
    %74 = tpu.matmul %73, %72, %cst_24 {dimension_numbers = #tpu.dot_dimension_numbers<[0], [2], [2], [1], [0, 1, 0, 2, 1, 1], [1], [0]>} : vector<8x4x8xbf16>, vector<4x8x8xbf16>, vector<4x8x8xf32> -> vector<4x8x8xf32>
    %75 = tpu.transpose %74, [2, 0, 1] : vector<4x8x8xf32> -> vector<8x4x8xf32>
    "tpu.trace_stop"() : () -> ()
    %76 = vector.shape_cast %75 : vector<8x4x8xf32> to vector<8x32xf32>
    %77 = arith.truncf %76 : vector<8x32xf32> to vector<8x32xbf16>
    %c0_25 = arith.constant 0 : index
    %c0_26 = arith.constant 0 : index
    %c0_27 = arith.constant 0 : index
    %78 = vector.load %arg8[%c0_25, %c0_26, %c0_27] : memref<1x32x32xbf16, #tpu.memory_space<vmem>>, vector<1x32x32xbf16>
    %79 = vector.shape_cast %78 : vector<1x32x32xbf16> to vector<32x32xbf16>
    %cst_28 = arith.constant dense<0.000000e+00> : vector<8x32xf32>
    %80 = tpu.matmul %77, %79, %cst_28 {dimension_numbers = #tpu.dot_dimension_numbers<[1], [0], [0], [1], [0, 0, 1, 1], [], []>} : vector<8x32xbf16>, vector<32x32xbf16>, vector<8x32xf32> -> vector<8x32xf32>
    %81 = vector.extract_strided_slice %2 {offsets = [7, 0], sizes = [1, 32], strides = [1, 1]} : vector<13x96xf32> to vector<1x32xf32>
    %82 = vector.broadcast %81 : vector<1x32xf32> to vector<8x32xf32>
    %83 = arith.addf %80, %82 : vector<8x32xf32>
    %84 = arith.addf %6, %83 : vector<8x32xf32>
    %85 = vector.extract_strided_slice %2 {offsets = [2, 0], sizes = [1, 32], strides = [1, 1]} : vector<13x96xf32> to vector<1x32xf32>
    %86 = vector.extract_strided_slice %2 {offsets = [3, 0], sizes = [1, 32], strides = [1, 1]} : vector<13x96xf32> to vector<1x32xf32>
    %cst_29 = arith.constant dense<0.000000e+00> : vector<8xf32>
    %87 = vector.multi_reduction <add>, %84, %cst_29 [1] : vector<8x32xf32> to vector<8xf32>
    %88 = vector.shape_cast %87 : vector<8xf32> to vector<8x1xf32>
    %cst_30 = arith.constant 3.200000e+01 : f32
    %89 = vector.broadcast %cst_30 : f32 to vector<8x1xf32>
    %90 = arith.divf %88, %89 : vector<8x1xf32>
    %91 = vector.broadcast %90 : vector<8x1xf32> to vector<8x32xf32>
    %92 = arith.subf %84, %91 : vector<8x32xf32>
    %93 = arith.mulf %92, %92 : vector<8x32xf32>
    %cst_31 = arith.constant dense<0.000000e+00> : vector<8xf32>
    %94 = vector.multi_reduction <add>, %93, %cst_31 [1] : vector<8x32xf32> to vector<8xf32>
    %95 = vector.shape_cast %94 : vector<8xf32> to vector<8x1xf32>
    %cst_32 = arith.constant 3.200000e+01 : f32
    %96 = vector.broadcast %cst_32 : f32 to vector<8x1xf32>
    %97 = arith.divf %95, %96 : vector<8x1xf32>
    %98 = vector.broadcast %90 : vector<8x1xf32> to vector<8x32xf32>
    %99 = arith.subf %84, %98 : vector<8x32xf32>
    %cst_33 = arith.constant 9.99999974E-6 : f32
    %100 = vector.broadcast %cst_33 : f32 to vector<8x1xf32>
    %101 = arith.addf %97, %100 : vector<8x1xf32>
    %102 = math.rsqrt %101 : vector<8x1xf32>
    %103 = vector.broadcast %102 : vector<8x1xf32> to vector<8x32xf32>
    %104 = arith.mulf %99, %103 : vector<8x32xf32>
    %105 = vector.broadcast %85 : vector<1x32xf32> to vector<8x32xf32>
    %106 = arith.mulf %104, %105 : vector<8x32xf32>
    %107 = vector.broadcast %86 : vector<1x32xf32> to vector<8x32xf32>
    %108 = arith.addf %106, %107 : vector<8x32xf32>
    %109 = arith.truncf %108 : vector<8x32xf32> to vector<8x32xbf16>
    %c0_34 = arith.constant 0 : index
    %c0_35 = arith.constant 0 : index
    %c0_36 = arith.constant 0 : index
    %110 = vector.load %arg9[%c0_34, %c0_35, %c0_36] : memref<1x32x32xbf16, #tpu.memory_space<vmem>>, vector<1x32x32xbf16>
    %111 = vector.shape_cast %110 : vector<1x32x32xbf16> to vector<32x32xbf16>
    %cst_37 = arith.constant dense<0.000000e+00> : vector<8x32xf32>
    %112 = tpu.matmul %109, %111, %cst_37 {dimension_numbers = #tpu.dot_dimension_numbers<[1], [0], [0], [1], [0, 0, 1, 1], [], []>} : vector<8x32xbf16>, vector<32x32xbf16>, vector<8x32xf32> -> vector<8x32xf32>
    %113 = vector.extract_strided_slice %2 {offsets = [8, 0], sizes = [1, 32], strides = [1, 1]} : vector<13x96xf32> to vector<1x32xf32>
    %114 = vector.broadcast %113 : vector<1x32xf32> to vector<8x32xf32>
    %115 = arith.addf %112, %114 : vector<8x32xf32>
    %116 = vector.shape_cast %115 : vector<8x32xf32> to vector<8x4x8xf32>
    %c0_38 = arith.constant 0 : index
    %c0_39 = arith.constant 0 : index
    %c0_40 = arith.constant 0 : index
    %117 = vector.load %arg3[%c0_38, %c0_39, %c0_40] : memref<1x16x32xbf16, #tpu.memory_space<vmem>>, vector<1x16x32xbf16>
    %118 = vector.shape_cast %117 : vector<1x16x32xbf16> to vector<16x32xbf16>
    %c0_41 = arith.constant 0 : index
    %c0_42 = arith.constant 0 : index
    %c0_43 = arith.constant 0 : index
    %119 = vector.load %arg10[%c0_41, %c0_42, %c0_43] : memref<1x32x64xbf16, #tpu.memory_space<vmem>>, vector<1x32x64xbf16>
    %120 = vector.shape_cast %119 : vector<1x32x64xbf16> to vector<32x64xbf16>
    %cst_44 = arith.constant dense<0.000000e+00> : vector<16x64xf32>
    %121 = tpu.matmul %118, %120, %cst_44 {dimension_numbers = #tpu.dot_dimension_numbers<[1], [0], [0], [1], [0, 0, 1, 1], [], []>} : vector<16x32xbf16>, vector<32x64xbf16>, vector<16x64xf32> -> vector<16x64xf32>
    %122 = vector.extract_strided_slice %2 {offsets = [9, 0], sizes = [1, 64], strides = [1, 1]} : vector<13x96xf32> to vector<1x64xf32>
    %123 = vector.broadcast %122 : vector<1x64xf32> to vector<16x64xf32>
    %124 = arith.addf %121, %123 : vector<16x64xf32>
    %125 = vector.extract_strided_slice %124 {offsets = [0, 0], sizes = [16, 32], strides = [1, 1]} : vector<16x64xf32> to vector<16x32xf32>
    %126 = vector.shape_cast %125 : vector<16x32xf32> to vector<16x4x8xf32>
    %127 = vector.extract_strided_slice %124 {offsets = [0, 32], sizes = [16, 32], strides = [1, 1]} : vector<16x64xf32> to vector<16x32xf32>
    %128 = vector.shape_cast %127 : vector<16x32xf32> to vector<16x4x8xf32>
    %129 = arith.truncf %116 : vector<8x4x8xf32> to vector<8x4x8xbf16>
    %130 = arith.truncf %126 : vector<16x4x8xf32> to vector<16x4x8xbf16>
    "tpu.trace_start"() <{level = 10 : i32, message = "qhd,khd->hqk"}> : () -> ()
    %cst_45 = arith.constant dense<0.000000e+00> : vector<4x8x16xf32>
    %131 = tpu.matmul %129, %130, %cst_45 {dimension_numbers = #tpu.dot_dimension_numbers<[2], [2], [0], [0], [0, 1, 0, 0, 1, 0], [1], [1]>} : vector<8x4x8xbf16>, vector<16x4x8xbf16>, vector<4x8x16xf32> -> vector<4x8x16xf32>
    "tpu.trace_stop"() : () -> ()
    %cst_46 = arith.constant dense<0xFF800000> : vector<4x8xf32>
    %132 = vector.multi_reduction <maximumf>, %131, %cst_46 [2] : vector<4x8x16xf32> to vector<4x8xf32>
    %133 = vector.shape_cast %132 : vector<4x8xf32> to vector<4x8x1xf32>
    %134 = vector.broadcast %133 : vector<4x8x1xf32> to vector<4x8x16xf32>
    %135 = arith.subf %131, %134 : vector<4x8x16xf32>
    %136 = math.exp %135 : vector<4x8x16xf32>
    %cst_47 = arith.constant dense<0.000000e+00> : vector<4x8xf32>
    %137 = vector.multi_reduction <add>, %136, %cst_47 [2] : vector<4x8x16xf32> to vector<4x8xf32>
    %138 = vector.shape_cast %137 : vector<4x8xf32> to vector<4x8x1xf32>
    %139 = tpu.reciprocal %138 {approx = true} : vector<4x8x1xf32> -> vector<4x8x1xf32>
    %140 = vector.broadcast %139 : vector<4x8x1xf32> to vector<4x8x16xf32>
    %141 = arith.mulf %136, %140 : vector<4x8x16xf32>
    %142 = arith.truncf %141 : vector<4x8x16xf32> to vector<4x8x16xbf16>
    %143 = arith.truncf %128 : vector<16x4x8xf32> to vector<16x4x8xbf16>
    "tpu.trace_start"() <{level = 10 : i32, message = "hqk,khd->qhd"}> : () -> ()
    %cst_48 = arith.constant dense<0.000000e+00> : vector<4x8x8xf32>
    %144 = tpu.matmul %143, %142, %cst_48 {dimension_numbers = #tpu.dot_dimension_numbers<[0], [2], [2], [1], [0, 1, 0, 2, 1, 1], [1], [0]>} : vector<16x4x8xbf16>, vector<4x8x16xbf16>, vector<4x8x8xf32> -> vector<4x8x8xf32>
    %145 = tpu.transpose %144, [2, 0, 1] : vector<4x8x8xf32> -> vector<8x4x8xf32>
    "tpu.trace_stop"() : () -> ()
    %146 = vector.shape_cast %145 : vector<8x4x8xf32> to vector<8x32xf32>
    %147 = arith.truncf %146 : vector<8x32xf32> to vector<8x32xbf16>
    %c0_49 = arith.constant 0 : index
    %c0_50 = arith.constant 0 : index
    %c0_51 = arith.constant 0 : index
    %148 = vector.load %arg11[%c0_49, %c0_50, %c0_51] : memref<1x32x32xbf16, #tpu.memory_space<vmem>>, vector<1x32x32xbf16>
    %149 = vector.shape_cast %148 : vector<1x32x32xbf16> to vector<32x32xbf16>
    %cst_52 = arith.constant dense<0.000000e+00> : vector<8x32xf32>
    %150 = tpu.matmul %147, %149, %cst_52 {dimension_numbers = #tpu.dot_dimension_numbers<[1], [0], [0], [1], [0, 0, 1, 1], [], []>} : vector<8x32xbf16>, vector<32x32xbf16>, vector<8x32xf32> -> vector<8x32xf32>
    %151 = vector.extract_strided_slice %2 {offsets = [10, 0], sizes = [1, 32], strides = [1, 1]} : vector<13x96xf32> to vector<1x32xf32>
    %152 = vector.broadcast %151 : vector<1x32xf32> to vector<8x32xf32>
    %153 = arith.addf %150, %152 : vector<8x32xf32>
    %154 = arith.addf %84, %153 : vector<8x32xf32>
    %155 = vector.extract_strided_slice %2 {offsets = [4, 0], sizes = [1, 32], strides = [1, 1]} : vector<13x96xf32> to vector<1x32xf32>
    %156 = vector.extract_strided_slice %2 {offsets = [5, 0], sizes = [1, 32], strides = [1, 1]} : vector<13x96xf32> to vector<1x32xf32>
    %cst_53 = arith.constant dense<0.000000e+00> : vector<8xf32>
    %157 = vector.multi_reduction <add>, %154, %cst_53 [1] : vector<8x32xf32> to vector<8xf32>
    %158 = vector.shape_cast %157 : vector<8xf32> to vector<8x1xf32>
    %cst_54 = arith.constant 3.200000e+01 : f32
    %159 = vector.broadcast %cst_54 : f32 to vector<8x1xf32>
    %160 = arith.divf %158, %159 : vector<8x1xf32>
    %161 = vector.broadcast %160 : vector<8x1xf32> to vector<8x32xf32>
    %162 = arith.subf %154, %161 : vector<8x32xf32>
    %163 = arith.mulf %162, %162 : vector<8x32xf32>
    %cst_55 = arith.constant dense<0.000000e+00> : vector<8xf32>
    %164 = vector.multi_reduction <add>, %163, %cst_55 [1] : vector<8x32xf32> to vector<8xf32>
    %165 = vector.shape_cast %164 : vector<8xf32> to vector<8x1xf32>
    %cst_56 = arith.constant 3.200000e+01 : f32
    %166 = vector.broadcast %cst_56 : f32 to vector<8x1xf32>
    %167 = arith.divf %165, %166 : vector<8x1xf32>
    %168 = vector.broadcast %160 : vector<8x1xf32> to vector<8x32xf32>
    %169 = arith.subf %154, %168 : vector<8x32xf32>
    %cst_57 = arith.constant 9.99999974E-6 : f32
    %170 = vector.broadcast %cst_57 : f32 to vector<8x1xf32>
    %171 = arith.addf %167, %170 : vector<8x1xf32>
    %172 = math.rsqrt %171 : vector<8x1xf32>
    %173 = vector.broadcast %172 : vector<8x1xf32> to vector<8x32xf32>
    %174 = arith.mulf %169, %173 : vector<8x32xf32>
    %175 = vector.broadcast %155 : vector<1x32xf32> to vector<8x32xf32>
    %176 = arith.mulf %174, %175 : vector<8x32xf32>
    %177 = vector.broadcast %156 : vector<1x32xf32> to vector<8x32xf32>
    %178 = arith.addf %176, %177 : vector<8x32xf32>
    %179 = arith.truncf %178 : vector<8x32xf32> to vector<8x32xbf16>
    %c0_58 = arith.constant 0 : index
    %c0_59 = arith.constant 0 : index
    %c0_60 = arith.constant 0 : index
    %180 = vector.load %arg12[%c0_58, %c0_59, %c0_60] : memref<1x32x64xbf16, #tpu.memory_space<vmem>>, vector<1x32x64xbf16>
    %181 = vector.shape_cast %180 : vector<1x32x64xbf16> to vector<32x64xbf16>
    %cst_61 = arith.constant dense<0.000000e+00> : vector<8x64xf32>
    %182 = tpu.matmul %179, %181, %cst_61 {dimension_numbers = #tpu.dot_dimension_numbers<[1], [0], [0], [1], [0, 0, 1, 1], [], []>} : vector<8x32xbf16>, vector<32x64xbf16>, vector<8x64xf32> -> vector<8x64xf32>
    %183 = vector.extract_strided_slice %2 {offsets = [11, 0], sizes = [1, 64], strides = [1, 1]} : vector<13x96xf32> to vector<1x64xf32>
    %184 = vector.broadcast %183 : vector<1x64xf32> to vector<8x64xf32>
    %185 = arith.addf %182, %184 : vector<8x64xf32>
    %cst_62 = arith.constant 5.000000e-01 : f32
    %186 = vector.broadcast %cst_62 : f32 to vector<8x64xf32>
    %187 = arith.mulf %186, %185 : vector<8x64xf32>
    %cst_63 = arith.constant 0.707106769 : f32
    %188 = vector.broadcast %cst_63 : f32 to vector<8x64xf32>
    %189 = arith.mulf %185, %188 : vector<8x64xf32>
    %190 = math.erf %189 : vector<8x64xf32>
    %cst_64 = arith.constant 1.000000e+00 : f32
    %191 = vector.broadcast %cst_64 : f32 to vector<8x64xf32>
    %192 = arith.addf %191, %190 : vector<8x64xf32>
    %193 = arith.mulf %187, %192 : vector<8x64xf32>
    %194 = arith.truncf %193 : vector<8x64xf32> to vector<8x64xbf16>
    %c0_65 = arith.constant 0 : index
    %c0_66 = arith.constant 0 : index
    %c0_67 = arith.constant 0 : index
    %195 = vector.load %arg13[%c0_65, %c0_66, %c0_67] : memref<1x64x32xbf16, #tpu.memory_space<vmem>>, vector<1x64x32xbf16>
    %196 = vector.shape_cast %195 : vector<1x64x32xbf16> to vector<64x32xbf16>
    %cst_68 = arith.constant dense<0.000000e+00> : vector<8x32xf32>
    %197 = tpu.matmul %194, %196, %cst_68 {dimension_numbers = #tpu.dot_dimension_numbers<[1], [0], [0], [1], [0, 0, 1, 1], [], []>} : vector<8x64xbf16>, vector<64x32xbf16>, vector<8x32xf32> -> vector<8x32xf32>
    %198 = vector.extract_strided_slice %2 {offsets = [12, 0], sizes = [1, 32], strides = [1, 1]} : vector<13x96xf32> to vector<1x32xf32>
    %199 = vector.broadcast %198 : vector<1x32xf32> to vector<8x32xf32>
    %200 = arith.addf %197, %199 : vector<8x32xf32>
    %201 = arith.addf %154, %200 : vector<8x32xf32>
    %c0_69 = arith.constant 0 : index
    %c0_70 = arith.constant 0 : index
    %202 = vector.load %arg16[%c0_69, %c0_70] : memref<8x32xf32, #tpu.memory_space<vmem>>, vector<8x32xf32>
    tpu.vector_store %arg16[%c0_69, %c0_70], %201 {strides = array<i32>} : memref<8x32xf32, #tpu.memory_space<vmem>>, vector<8x32xf32>,
    %c1_i32 = arith.constant 1 : i32
    %203 = arith.cmpi eq, %arg1, %c1_i32 : i32
    %204 = arith.extui %203 : i1 to i32
    %c0_i32_71 = arith.constant 0 : i32
    %205 = arith.cmpi ne, %204, %c0_i32_71 : i32
    scf.if %205 {
      %206 = vector.extract_strided_slice %0 {offsets = [2, 0], sizes = [1, 32], strides = [1, 1]} : vector<4x32xf32> to vector<1x32xf32>
      %207 = vector.extract_strided_slice %0 {offsets = [3, 0], sizes = [1, 32], strides = [1, 1]} : vector<4x32xf32> to vector<1x32xf32>
      %cst_72 = arith.constant dense<0.000000e+00> : vector<8xf32>
      %208 = vector.multi_reduction <add>, %201, %cst_72 [1] : vector<8x32xf32> to vector<8xf32>
      %209 = vector.shape_cast %208 : vector<8xf32> to vector<8x1xf32>
      %cst_73 = arith.constant 3.200000e+01 : f32
      %210 = vector.broadcast %cst_73 : f32 to vector<8x1xf32>
      %211 = arith.divf %209, %210 : vector<8x1xf32>
      %212 = vector.broadcast %211 : vector<8x1xf32> to vector<8x32xf32>
      %213 = arith.subf %201, %212 : vector<8x32xf32>
      %214 = arith.mulf %213, %213 : vector<8x32xf32>
      %cst_74 = arith.constant dense<0.000000e+00> : vector<8xf32>
      %215 = vector.multi_reduction <add>, %214, %cst_74 [1] : vector<8x32xf32> to vector<8xf32>
      %216 = vector.shape_cast %215 : vector<8xf32> to vector<8x1xf32>
      %cst_75 = arith.constant 3.200000e+01 : f32
      %217 = vector.broadcast %cst_75 : f32 to vector<8x1xf32>
      %218 = arith.divf %216, %217 : vector<8x1xf32>
      %219 = vector.broadcast %211 : vector<8x1xf32> to vector<8x32xf32>
      %220 = arith.subf %201, %219 : vector<8x32xf32>
      %cst_76 = arith.constant 9.99999974E-6 : f32
      %221 = vector.broadcast %cst_76 : f32 to vector<8x1xf32>
      %222 = arith.addf %218, %221 : vector<8x1xf32>
      %223 = math.rsqrt %222 : vector<8x1xf32>
      %224 = vector.broadcast %223 : vector<8x1xf32> to vector<8x32xf32>
      %225 = arith.mulf %220, %224 : vector<8x32xf32>
      %226 = vector.broadcast %206 : vector<1x32xf32> to vector<8x32xf32>
      %227 = arith.mulf %225, %226 : vector<8x32xf32>
      %228 = vector.broadcast %207 : vector<1x32xf32> to vector<8x32xf32>
      %229 = arith.addf %227, %228 : vector<8x32xf32>
      %230 = arith.truncf %229 : vector<8x32xf32> to vector<8x32xbf16>
      %c0_77 = arith.constant 0 : index
      %c0_78 = arith.constant 0 : index
      %231 = vector.load %arg14[%c0_77, %c0_78] : memref<32x64xbf16, #tpu.memory_space<vmem>>, vector<32x64xbf16>
      %cst_79 = arith.constant dense<0.000000e+00> : vector<8x64xf32>
      %232 = tpu.matmul %230, %231, %cst_79 {dimension_numbers = #tpu.dot_dimension_numbers<[1], [0], [0], [1], [0, 0, 1, 1], [], []>} : vector<8x32xbf16>, vector<32x64xbf16>, vector<8x64xf32> -> vector<8x64xf32>
      %c0_80 = arith.constant 0 : index
      %c0_81 = arith.constant 0 : index
      %c0_82 = arith.constant 0 : index
      %233 = vector.load %arg15[%c0_80, %c0_81, %c0_82] : memref<1x8x64xf32, #tpu.memory_space<vmem>>, vector<1x8x64xf32>
      %234 = vector.shape_cast %233 : vector<1x8x64xf32> to vector<8x64xf32>
      %235 = vector.shape_cast %232 : vector<8x64xf32> to vector<1x8x64xf32>
      tpu.vector_store %arg15[%c0_80, %c0_81, %c0_82], %235 {strides = array<i32>} : memref<1x8x64xf32, #tpu.memory_space<vmem>>, vector<1x8x64xf32>,
    } else {
    }
    return
  }
  func.func @transform_0(%arg0: i32, %arg1: i32) -> (i32, i32, i32) {
    %c0_i32 = arith.constant 0 : i32
    %c0_i32_0 = arith.constant 0 : i32
    %c0_i32_1 = arith.constant 0 : i32
    return %arg0, %c0_i32, %c0_i32_0 : i32, i32, i32
  }
  func.func @transform_1(%arg0: i32, %arg1: i32) -> (i32, i32, i32) {
    %c0_i32 = arith.constant 0 : i32
    %c0_i32_0 = arith.constant 0 : i32
    %c0_i32_1 = arith.constant 0 : i32
    return %arg0, %c0_i32, %c0_i32_0 : i32, i32, i32
  }
  func.func @transform_2(%arg0: i32, %arg1: i32) -> (i32, i32, i32) {
    %c0_i32 = arith.constant 0 : i32
    %c0_i32_0 = arith.constant 0 : i32
    %c0_i32_1 = arith.constant 0 : i32
    return %arg0, %c0_i32, %c0_i32_0 : i32, i32, i32
  }
  func.func @transform_3(%arg0: i32, %arg1: i32) -> (i32, i32) {
    %c0_i32 = arith.constant 0 : i32
    %c0_i32_0 = arith.constant 0 : i32
    %c0_i32_1 = arith.constant 0 : i32
    return %c0_i32, %c0_i32_0 : i32, i32
  }
  func.func @transform_4(%arg0: i32, %arg1: i32) -> (i32, i32, i32) {
    %c0_i32 = arith.constant 0 : i32
    %c0_i32_0 = arith.constant 0 : i32
    %c0_i32_1 = arith.constant 0 : i32
    return %arg1, %c0_i32, %c0_i32_0 : i32, i32, i32
  }
  func.func @transform_5(%arg0: i32, %arg1: i32) -> (i32, i32, i32) {
    %c0_i32 = arith.constant 0 : i32
    %c0_i32_0 = arith.constant 0 : i32
    %c0_i32_1 = arith.constant 0 : i32
    return %arg1, %c0_i32, %c0_i32_0 : i32, i32, i32
  }
  func.func @transform_6(%arg0: i32, %arg1: i32) -> (i32, i32, i32) {
    %c0_i32 = arith.constant 0 : i32
    %c0_i32_0 = arith.constant 0 : i32
    %c0_i32_1 = arith.constant 0 : i32
    return %arg1, %c0_i32, %c0_i32_0 : i32, i32, i32
  }
  func.func @transform_7(%arg0: i32, %arg1: i32) -> (i32, i32, i32) {
    %c0_i32 = arith.constant 0 : i32
    %c0_i32_0 = arith.constant 0 : i32
    %c0_i32_1 = arith.constant 0 : i32
    return %arg1, %c0_i32, %c0_i32_0 : i32, i32, i32
  }
  func.func @transform_8(%arg0: i32, %arg1: i32) -> (i32, i32, i32) {
    %c0_i32 = arith.constant 0 : i32
    %c0_i32_0 = arith.constant 0 : i32
    %c0_i32_1 = arith.constant 0 : i32
    return %arg1, %c0_i32, %c0_i32_0 : i32, i32, i32
  }
  func.func @transform_9(%arg0: i32, %arg1: i32) -> (i32, i32, i32) {
    %c0_i32 = arith.constant 0 : i32
    %c0_i32_0 = arith.constant 0 : i32
    %c0_i32_1 = arith.constant 0 : i32
    return %arg1, %c0_i32, %c0_i32_0 : i32, i32, i32
  }
  func.func @transform_10(%arg0: i32, %arg1: i32) -> (i32, i32, i32) {
    %c0_i32 = arith.constant 0 : i32
    %c0_i32_0 = arith.constant 0 : i32
    %c0_i32_1 = arith.constant 0 : i32
    return %arg1, %c0_i32, %c0_i32_0 : i32, i32, i32
  }
  func.func @transform_11(%arg0: i32, %arg1: i32) -> (i32, i32, i32) {
    %c0_i32 = arith.constant 0 : i32
    %c0_i32_0 = arith.constant 0 : i32
    %c0_i32_1 = arith.constant 0 : i32
    return %arg1, %c0_i32, %c0_i32_0 : i32, i32, i32
  }
  func.func @transform_12(%arg0: i32, %arg1: i32) -> (i32, i32) {
    %c0_i32 = arith.constant 0 : i32
    %c0_i32_0 = arith.constant 0 : i32
    %c0_i32_1 = arith.constant 0 : i32
    return %c0_i32, %c0_i32_0 : i32, i32
  }
  func.func @transform_13(%arg0: i32, %arg1: i32) -> (i32, i32, i32) {
    %c0_i32 = arith.constant 0 : i32
    %c0_i32_0 = arith.constant 0 : i32
    %c0_i32_1 = arith.constant 0 : i32
    return %arg0, %c0_i32, %c0_i32_0 : i32, i32, i32
  }
}

</mosaic_0001>

<llo_original>
// kernel: bart_decoder_forward.1
$region0: #{bart_decoder_forward.1}
  #allocation0 [shape = 'u32[]', space=smem, size = 0x4, offset = 0x4, fixed_abs, tag = 'smem constant byte address 0x4 - core index']
  #allocation1 [shape = 'u32[144,128]{1,0:T(1,128)}', space=vmem, size = 0x12000, scoped, tag = 'internal scratch']
  #allocation2 [shape = 'f32[8,32]{1,0:T(8,128)}', space=vmem, size = 0x1000, scoped, tag = 'scratch operand']
  %s0 = inlined_call_operand.vmem [shape: f32[2,8,32], index: 0, kind: input, shape index: {}]
  %s1 = inlined_call_operand.vmem [shape: bf16[2,16,32], index: 1, kind: input, shape index: {}]
  %s2 = inlined_call_operand.vmem [shape: s32[2,1,8], index: 2, kind: input, shape index: {}]
  %s3 = inlined_call_operand.vmem [shape: f32[4,32], index: 3, kind: input, shape index: {}]
  %s4 = inlined_call_operand.vmem [shape: f32[2,13,96], index: 4, kind: input, shape index: {}]
  %s5 = inlined_call_operand.vmem [shape: bf16[2,32,96], index: 5, kind: input, shape index: {}]
  %s6 = inlined_call_operand.vmem [shape: bf16[2,32,32], index: 6, kind: input, shape index: {}]
  %s7 = inlined_call_operand.vmem [shape: bf16[2,32,32], index: 7, kind: input, shape index: {}]
  %s8 = inlined_call_operand.vmem [shape: bf16[2,32,64], index: 8, kind: input, shape index: {}]
  %s9 = inlined_call_operand.vmem [shape: bf16[2,32,32], index: 9, kind: input, shape index: {}]
  %s10 = inlined_call_operand.vmem [shape: bf16[2,32,64], index: 10, kind: input, shape index: {}]
  %s11 = inlined_call_operand.vmem [shape: bf16[2,64,32], index: 11, kind: input, shape index: {}]
  %s12 = inlined_call_operand.vmem [shape: bf16[32,64], index: 12, kind: input, shape index: {}]
  %s13 = inlined_call_operand.hbm [shape: f32[2,8,64], index: 13, kind: output, shape index: {}]
  %s14 = sld [smem:[#allocation0]]
  $region93: #{bart_decoder_forward.1} parent=0
    _
  %s16 = ssub.s32 1, %s14
  %s17 = scalar_select 0, %s16, %s14
  $region1: #{bart_decoder_forward.1} parent=0
    #allocation3 [shape = 'u8[8192]{0}', space=vmem, size = 0x2000, scoped, tag = 'output window, operand 0']
    #allocation4 [shape = 's32[2]{0}', space=sflag, size = 0x8, scoped, tag = 'scoped memory for bart_decoder_forward.1']
    %18 = vsyncpa [#allocation4], 0
    %s19 = scalar_lea.sflag [#allocation4], 1
    %20 = vsyncpa %s19, 0
    loop: start=0, step=1, limit=6
    $region2: #{bart_decoder_forward.1} parent=1 // loop_pre_header
      _
    $region3: #{bart_decoder_forward.1} parent=1 // loop_header
      %s22 = sphi 0, %s26
      %p23 = scmp.ge.s32.totalorder %s22, 6
      %s29 = sphi 0, %s41
      %s30 = sphi 0, %s37
      %s31 = sphi 0, %s29
      %s32 = sphi 0, %s30
      %s33 = sphi 0, %s31
      %s34 = sphi 0, %s32
      %s44 = sphi 0, %s46
      %s47 = sphi 0, %s44
      %s48 = sphi 0, %s47
      %s64 = sphi 0, %s48
      %s70 = sphi 0, %s72
      %s73 = sphi 0, %s70
      %s74 = sphi 0, %s73
      %s90 = sphi 0, %s74
      %s96 = sphi 0, %s98
      %s99 = sphi 0, %s96
      %s100 = sphi 0, %s99
      %s116 = sphi 0, %s100
      %s120 = sphi 0, %s120
      %s122 = sphi 0, %s120
      %s123 = sphi 0, %s122
      %s137 = sphi 0, %s123
      %s143 = sphi 0, %s145
      %s146 = sphi 0, %s143
      %s147 = sphi 0, %s146
      %s163 = sphi 0, %s147
      %s169 = sphi 0, %s171
      %s172 = sphi 0, %s169
      %s173 = sphi 0, %s172
      %s189 = sphi 0, %s173
      %s195 = sphi 0, %s197
      %s198 = sphi 0, %s195
      %s199 = sphi 0, %s198
      %s215 = sphi 0, %s199
      %s221 = sphi 0, %s223
      %s224 = sphi 0, %s221
      %s225 = sphi 0, %s224
      %s241 = sphi 0, %s225
      %s247 = sphi 0, %s249
      %s250 = sphi 0, %s247
      %s251 = sphi 0, %s250
      %s267 = sphi 0, %s251
      %s273 = sphi 0, %s275
      %s276 = sphi 0, %s273
      %s277 = sphi 0, %s276
      %s293 = sphi 0, %s277
      %s299 = sphi 0, %s301
      %s302 = sphi 0, %s299
      %s303 = sphi 0, %s302
      %s319 = sphi 0, %s303
      %s325 = sphi 0, %s327
      %s328 = sphi 0, %s325
      %s329 = sphi 0, %s328
      %s345 = sphi 0, %s329
      %s349 = sphi 0, %s349
      %s351 = sphi 0, %s349
      %s352 = sphi 0, %s351
      %s366 = sphi 0, %s352
      %s372 = sphi 0, %s374
      %s375 = sphi 0, %s372
      %s376 = sphi 0, %s375
      %s392 = sphi 0, %s376
    $region4: #{bart_decoder_forward.1} parent=1 // loop_header_branch
      %25 = sbr.rel (%p23) target = $region8
    $region5: #{bart_decoder_forward.1} parent=1 // loop_body
      %s27 = ssub.s32 %s22, 1
      %s28 = ssub.s32 %s22, 2
      %s35 = sadd.s32 1, %s30
      %p36 = scmp.ge.s32.totalorder %s35, 2
      %s37 = scalar_select %p36, 0, %s35
      %s38 = sadd.s32 1, %s29
      %s39 = scalar_select %p36, %s38, %s29
      %p40 = scmp.ge.s32.totalorder %s39, 2
      %s41 = scalar_select %p40, 0, %s39
      %s42 = ssub.s32 %s29, %s41
      %p43 = scmp.eq.s32.totalorder %s42, 0
      %s45 = sadd.s32 %s44, 1
      %s46 = scalar_select %p43, %s44, %s45
      %p49 = pneg %p43
      %p50 = scmp.eq.s32.totalorder %s22, 3
      %p51 = por %p49, %p50
      %p52 = scmp.ne.s32.totalorder %s44, %s47
      %p53 = scmp.eq.s32.totalorder %s22, 0
      %p54 = por %p52, %p53
      %p55 = scmp.ne.s32.totalorder %s44, %s47
      %p56 = scmp.eq.s32.totalorder %s27, 3
      %p57 = por %p55, %p56
      %p58 = scmp.ne.s32.totalorder %s47, %s48
      %p59 = scmp.eq.s32.totalorder %s27, 0
      %p60 = por %p58, %p59
      %p61 = scmp.ne.s32.totalorder %s47, %s48
      %p62 = scmp.eq.s32.totalorder %s28, 3
      %p63 = por %p61, %p62
      %p65 = scmp.ne.s32.totalorder %s48, %s64
      %p66 = scmp.eq.s32.totalorder %s28, 0
      %p67 = por %p65, %p66
      %s68 = ssub.s32 %s29, %s41
      %p69 = scmp.eq.s32.totalorder %s68, 0
      %s71 = sadd.s32 %s70, 1
      %s72 = scalar_select %p69, %s70, %s71
      %p75 = pneg %p69
      %p76 = scmp.eq.s32.totalorder %s22, 3
      %p77 = por %p75, %p76
      %p78 = scmp.ne.s32.totalorder %s70, %s73
      %p79 = scmp.eq.s32.totalorder %s22, 0
      %p80 = por %p78, %p79
      %p81 = scmp.ne.s32.totalorder %s70, %s73
      %p82 = scmp.eq.s32.totalorder %s27, 3
      %p83 = por %p81, %p82
      %p84 = scmp.ne.s32.totalorder %s73, %s74
      %p85 = scmp.eq.s32.totalorder %s27, 0
      %p86 = por %p84, %p85
      %p87 = scmp.ne.s32.totalorder %s73, %s74
      %p88 = scmp.eq.s32.totalorder %s28, 3
      %p89 = por %p87, %p88
      %p91 = scmp.ne.s32.totalorder %s74, %s90
      %p92 = scmp.eq.s32.totalorder %s28, 0
      %p93 = por %p91, %p92
      %s94 = ssub.s32 %s29, %s41
      %p95 = scmp.eq.s32.totalorder %s94, 0
      %s97 = sadd.s32 %s96, 1
      %s98 = scalar_select %p95, %s96, %s97
      %p101 = pneg %p95
      %p102 = scmp.eq.s32.totalorder %s22, 3
      %p103 = por %p101, %p102
      %p104 = scmp.ne.s32.totalorder %s96, %s99
      %p105 = scmp.eq.s32.totalorder %s22, 0
      %p106 = por %p104, %p105
      %p107 = scmp.ne.s32.totalorder %s96, %s99
      %p108 = scmp.eq.s32.totalorder %s27, 3
      %p109 = por %p107, %p108
      %p110 = scmp.ne.s32.totalorder %s99, %s100
      %p111 = scmp.eq.s32.totalorder %s27, 0
      %p112 = por %p110, %p111
      %p113 = scmp.ne.s32.totalorder %s99, %s100
      %p114 = scmp.eq.s32.totalorder %s28, 3
      %p115 = por %p113, %p114
      %p117 = scmp.ne.s32.totalorder %s100, %s116
      %p118 = scmp.eq.s32.totalorder %s28, 0
      %p119 = por %p117, %p118
      %s121 = sadd.s32 %s120, 1
      %p124 = scmp.eq.s32.totalorder %s22, 3
      %p125 = scmp.ne.s32.totalorder %s120, %s122
      %p126 = scmp.eq.s32.totalorder %s22, 0
      %p127 = por %p125, %p126
      %p128 = scmp.ne.s32.totalorder %s120, %s122
      %p129 = scmp.eq.s32.totalorder %s27, 3
      %p130 = por %p128, %p129
      %p131 = scmp.ne.s32.totalorder %s122, %s123
      %p132 = scmp.eq.s32.totalorder %s27, 0
      %p133 = por %p131, %p132
      %p134 = scmp.ne.s32.totalorder %s122, %s123
      %p135 = scmp.eq.s32.totalorder %s28, 3
      %p136 = por %p134, %p135
      %p138 = scmp.ne.s32.totalorder %s123, %s137
      %p139 = scmp.eq.s32.totalorder %s28, 0
      %p140 = por %p138, %p139
      %s141 = ssub.s32 %s30, %s37
      %p142 = scmp.eq.s32.totalorder %s141, 0
      %s144 = sadd.s32 %s143, 1
      %s145 = scalar_select %p142, %s143, %s144
      %p148 = pneg %p142
      %p149 = scmp.eq.s32.totalorder %s22, 3
      %p150 = por %p148, %p149
      %p151 = scmp.ne.s32.totalorder %s143, %s146
      %p152 = scmp.eq.s32.totalorder %s22, 0
      %p153 = por %p151, %p152
      %p154 = scmp.ne.s32.totalorder %s143, %s146
      %p155 = scmp.eq.s32.totalorder %s27, 3
      %p156 = por %p154, %p155
      %p157 = scmp.ne.s32.totalorder %s146, %s147
      %p158 = scmp.eq.s32.totalorder %s27, 0
      %p159 = por %p157, %p158
      %p160 = scmp.ne.s32.totalorder %s146, %s147
      %p161 = scmp.eq.s32.totalorder %s28, 3
      %p162 = por %p160, %p161
      %p164 = scmp.ne.s32.totalorder %s147, %s163
      %p165 = scmp.eq.s32.totalorder %s28, 0
      %p166 = por %p164, %p165
      %s167 = ssub.s32 %s30, %s37
      %p168 = scmp.eq.s32.totalorder %s167, 0
      %s170 = sadd.s32 %s169, 1
      %s171 = scalar_select %p168, %s169, %s170
      %p174 = pneg %p168
      %p175 = scmp.eq.s32.totalorder %s22, 3
      %p176 = por %p174, %p175
      %p177 = scmp.ne.s32.totalorder %s169, %s172
      %p178 = scmp.eq.s32.totalorder %s22, 0
      %p179 = por %p177, %p178
      %p180 = scmp.ne.s32.totalorder %s169, %s172
      %p181 = scmp.eq.s32.totalorder %s27, 3
      %p182 = por %p180, %p181
      %p183 = scmp.ne.s32.totalorder %s172, %s173
      %p184 = scmp.eq.s32.totalorder %s27, 0
      %p185 = por %p183, %p184
      %p186 = scmp.ne.s32.totalorder %s172, %s173
      %p187 = scmp.eq.s32.totalorder %s28, 3
      %p188 = por %p186, %p187
      %p190 = scmp.ne.s32.totalorder %s173, %s189
      %p191 = scmp.eq.s32.totalorder %s28, 0
      %p192 = por %p190, %p191
      %s193 = ssub.s32 %s30, %s37
      %p194 = scmp.eq.s32.totalorder %s193, 0
      %s196 = sadd.s32 %s195, 1
      %s197 = scalar_select %p194, %s195, %s196
      %p200 = pneg %p194
      %p201 = scmp.eq.s32.totalorder %s22, 3
      %p202 = por %p200, %p201
      %p203 = scmp.ne.s32.totalorder %s195, %s198
      %p204 = scmp.eq.s32.totalorder %s22, 0
      %p205 = por %p203, %p204
      %p206 = scmp.ne.s32.totalorder %s195, %s198
      %p207 = scmp.eq.s32.totalorder %s27, 3
      %p208 = por %p206, %p207
      %p209 = scmp.ne.s32.totalorder %s198, %s199
      %p210 = scmp.eq.s32.totalorder %s27, 0
      %p211 = por %p209, %p210
      %p212 = scmp.ne.s32.totalorder %s198, %s199
      %p213 = scmp.eq.s32.totalorder %s28, 3
      %p214 = por %p212, %p213
      %p216 = scmp.ne.s32.totalorder %s199, %s215
      %p217 = scmp.eq.s32.totalorder %s28, 0
      %p218 = por %p216, %p217
      %s219 = ssub.s32 %s30, %s37
      %p220 = scmp.eq.s32.totalorder %s219, 0
      %s222 = sadd.s32 %s221, 1
      %s223 = scalar_select %p220, %s221, %s222
      %p226 = pneg %p220
      %p227 = scmp.eq.s32.totalorder %s22, 3
      %p228 = por %p226, %p227
      %p229 = scmp.ne.s32.totalorder %s221, %s224
      %p230 = scmp.eq.s32.totalorder %s22, 0
      %p231 = por %p229, %p230
      %p232 = scmp.ne.s32.totalorder %s221, %s224
      %p233 = scmp.eq.s32.totalorder %s27, 3
      %p234 = por %p232, %p233
      %p235 = scmp.ne.s32.totalorder %s224, %s225
      %p236 = scmp.eq.s32.totalorder %s27, 0
      %p237 = por %p235, %p236
      %p238 = scmp.ne.s32.totalorder %s224, %s225
      %p239 = scmp.eq.s32.totalorder %s28, 3
      %p240 = por %p238, %p239
      %p242 = scmp.ne.s32.totalorder %s225, %s241
      %p243 = scmp.eq.s32.totalorder %s28, 0
      %p244 = por %p242, %p243
      %s245 = ssub.s32 %s30, %s37
      %p246 = scmp.eq.s32.totalorder %s245, 0
      %s248 = sadd.s32 %s247, 1
      %s249 = scalar_select %p246, %s247, %s248
      %p252 = pneg %p246
      %p253 = scmp.eq.s32.totalorder %s22, 3
      %p254 = por %p252, %p253
      %p255 = scmp.ne.s32.totalorder %s247, %s250
      %p256 = scmp.eq.s32.totalorder %s22, 0
      %p257 = por %p255, %p256
      %p258 = scmp.ne.s32.totalorder %s247, %s250
      %p259 = scmp.eq.s32.totalorder %s27, 3
      %p260 = por %p258, %p259
      %p261 = scmp.ne.s32.totalorder %s250, %s251
      %p262 = scmp.eq.s32.totalorder %s27, 0
      %p263 = por %p261, %p262
      %p264 = scmp.ne.s32.totalorder %s250, %s251
      %p265 = scmp.eq.s32.totalorder %s28, 3
      %p266 = por %p264, %p265
      %p268 = scmp.ne.s32.totalorder %s251, %s267
      %p269 = scmp.eq.s32.totalorder %s28, 0
      %p270 = por %p268, %p269
      %s271 = ssub.s32 %s30, %s37
      %p272 = scmp.eq.s32.totalorder %s271, 0
      %s274 = sadd.s32 %s273, 1
      %s275 = scalar_select %p272, %s273, %s274
      %p278 = pneg %p272
      %p279 = scmp.eq.s32.totalorder %s22, 3
      %p280 = por %p278, %p279
      %p281 = scmp.ne.s32.totalorder %s273, %s276
      %p282 = scmp.eq.s32.totalorder %s22, 0
      %p283 = por %p281, %p282
      %p284 = scmp.ne.s32.totalorder %s273, %s276
      %p285 = scmp.eq.s32.totalorder %s27, 3
      %p286 = por %p284, %p285
      %p287 = scmp.ne.s32.totalorder %s276, %s277
      %p288 = scmp.eq.s32.totalorder %s27, 0
      %p289 = por %p287, %p288
      %p290 = scmp.ne.s32.totalorder %s276, %s277
      %p291 = scmp.eq.s32.totalorder %s28, 3
      %p292 = por %p290, %p291
      %p294 = scmp.ne.s32.totalorder %s277, %s293
      %p295 = scmp.eq.s32.totalorder %s28, 0
      %p296 = por %p294, %p295
      %s297 = ssub.s32 %s30, %s37
      %p298 = scmp.eq.s32.totalorder %s297, 0
      %s300 = sadd.s32 %s299, 1
      %s301 = scalar_select %p298, %s299, %s300
      %p304 = pneg %p298
      %p305 = scmp.eq.s32.totalorder %s22, 3
      %p306 = por %p304, %p305
      %p307 = scmp.ne.s32.totalorder %s299, %s302
      %p308 = scmp.eq.s32.totalorder %s22, 0
      %p309 = por %p307, %p308
      %p310 = scmp.ne.s32.totalorder %s299, %s302
      %p311 = scmp.eq.s32.totalorder %s27, 3
      %p312 = por %p310, %p311
      %p313 = scmp.ne.s32.totalorder %s302, %s303
      %p314 = scmp.eq.s32.totalorder %s27, 0
      %p315 = por %p313, %p314
      %p316 = scmp.ne.s32.totalorder %s302, %s303
      %p317 = scmp.eq.s32.totalorder %s28, 3
      %p318 = por %p316, %p317
      %p320 = scmp.ne.s32.totalorder %s303, %s319
      %p321 = scmp.eq.s32.totalorder %s28, 0
      %p322 = por %p320, %p321
      %s323 = ssub.s32 %s30, %s37
      %p324 = scmp.eq.s32.totalorder %s323, 0
      %s326 = sadd.s32 %s325, 1
      %s327 = scalar_select %p324, %s325, %s326
      %p330 = pneg %p324
      %p331 = scmp.eq.s32.totalorder %s22, 3
      %p332 = por %p330, %p331
      %p333 = scmp.ne.s32.totalorder %s325, %s328
      %p334 = scmp.eq.s32.totalorder %s22, 0
      %p335 = por %p333, %p334
      %p336 = scmp.ne.s32.totalorder %s325, %s328
      %p337 = scmp.eq.s32.totalorder %s27, 3
      %p338 = por %p336, %p337
      %p339 = scmp.ne.s32.totalorder %s328, %s329
      %p340 = scmp.eq.s32.totalorder %s27, 0
      %p341 = por %p339, %p340
      %p342 = scmp.ne.s32.totalorder %s328, %s329
      %p343 = scmp.eq.s32.totalorder %s28, 3
      %p344 = por %p342, %p343
      %p346 = scmp.ne.s32.totalorder %s329, %s345
      %p347 = scmp.eq.s32.totalorder %s28, 0
      %p348 = por %p346, %p347
      %s350 = sadd.s32 %s349, 1
      %p353 = scmp.eq.s32.totalorder %s22, 3
      %p354 = scmp.ne.s32.totalorder %s349, %s351
      %p355 = scmp.eq.s32.totalorder %s22, 0
      %p356 = por %p354, %p355
      %p357 = scmp.ne.s32.totalorder %s349, %s351
      %p358 = scmp.eq.s32.totalorder %s27, 3
      %p359 = por %p357, %p358
      %p360 = scmp.ne.s32.totalorder %s351, %s352
      %p361 = scmp.eq.s32.totalorder %s27, 0
      %p362 = por %p360, %p361
      %p363 = scmp.ne.s32.totalorder %s351, %s352
      %p364 = scmp.eq.s32.totalorder %s28, 3
      %p365 = por %p363, %p364
      %p367 = scmp.ne.s32.totalorder %s352, %s366
      %p368 = scmp.eq.s32.totalorder %s28, 0
      %p369 = por %p367, %p368
      %s370 = ssub.s32 %s29, %s41
      %p371 = scmp.eq.s32.totalorder %s370, 0
      %s373 = sadd.s32 %s372, 1
      %s374 = scalar_select %p371, %s372, %s373
      %p377 = pneg %p371
      %p378 = scmp.eq.s32.totalorder %s22, 3
      %p379 = por %p377, %p378
      %p380 = scmp.ne.s32.totalorder %s372, %s375
      %p381 = scmp.eq.s32.totalorder %s22, 0
      %p382 = por %p380, %p381
      %p383 = scmp.ne.s32.totalorder %s372, %s375
      %p384 = scmp.eq.s32.totalorder %s27, 3
      %p385 = por %p383, %p384
      %p386 = scmp.ne.s32.totalorder %s375, %s376
      %p387 = scmp.eq.s32.totalorder %s27, 0
      %p388 = por %p386, %p387
      %p389 = scmp.ne.s32.totalorder %s375, %s376
      %p390 = scmp.eq.s32.totalorder %s28, 3
      %p391 = por %p389, %p390
      %p393 = scmp.ne.s32.totalorder %s376, %s392
      %p394 = scmp.eq.s32.totalorder %s28, 0
      %p395 = por %p393, %p394
      %p396 = scmp.le.s32.totalorder 1, %s22
      %p397 = scmp.lt.s32.totalorder %s22, 5
      %p398 = pnand %p396, %p397
      %p399 = pneg %p398
      // Predicated region
      $region9: #{bart_decoder_forward.1} parent=5 // pred_check
        _
      $region10: #{bart_decoder_forward.1} parent=5 // pred_check_branch
        %401 = sbr.rel (%p398) target = $region12
      $region11: #{bart_decoder_forward.1} parent=5 // pred_region
        %s402 = ssub.s32 %s22, 1
        // Predicated region
        $region13: #{bart_decoder_forward.1} parent=11 // pred_check
          %p403 = pneg %p133
        $region14: #{bart_decoder_forward.1} parent=11 // pred_check_branch
          %405 = sbr.rel (%p403) target = $region16
        $region15: #{bart_decoder_forward.1} parent=11 // pred_region
          _
        $region16: #{bart_decoder_forward.1} parent=11 // pred_fallthru
          _
        // Predicated region
        $region17: #{bart_decoder_forward.1} parent=11 // pred_check
          %p406 = pneg %p362
        $region18: #{bart_decoder_forward.1} parent=11 // pred_check_branch
          %408 = sbr.rel (%p406) target = $region20
        $region19: #{bart_decoder_forward.1} parent=11 // pred_region
          _
        $region20: #{bart_decoder_forward.1} parent=11 // pred_fallthru
          _
      $region12: #{bart_decoder_forward.1} parent=5 // pred_fallthru
        _
      %p409 = scmp.lt.s32.totalorder %s22, 4
      // Predicated region
      $region21: #{bart_decoder_forward.1} parent=5 // pred_check
        %p410 = pneg %p409
      $region22: #{bart_decoder_forward.1} parent=5 // pred_check_branch
        %412 = sbr.rel (%p410) target = $region24
      $region23: #{bart_decoder_forward.1} parent=5 // pred_region
        // Predicated region
        $region25: #{bart_decoder_forward.1} parent=23 // pred_check
          %p413 = pneg %p54
        $region26: #{bart_decoder_forward.1} parent=23 // pred_check_branch
          %415 = sbr.rel (%p413) target = $region28
        $region27: #{bart_decoder_forward.1} parent=23 // pred_region
          %p416 = scmp.lt.s32.totalorder %s29, 1
          %s417 = scalar_select %p416, %s29, 1
          %s418 = smul.addr %s417, 8
          %s419 = scalar_lea.vmem %s0, %s418
        $region28: #{bart_decoder_forward.1} parent=23 // pred_fallthru
          _
        // Predicated region
        $region29: #{bart_decoder_forward.1} parent=23 // pred_check
          %p420 = pneg %p80
        $region30: #{bart_decoder_forward.1} parent=23 // pred_check_branch
          %422 = sbr.rel (%p420) target = $region32
        $region31: #{bart_decoder_forward.1} parent=23 // pred_region
          %p423 = scmp.lt.s32.totalorder %s29, 1
          %s424 = scalar_select %p423, %s29, 1
          %s425 = smul.addr %s424, 2
          %s426 = smul.addr %s425, 4
          %s427 = scalar_lea.vmem %s1, %s426
        $region32: #{bart_decoder_forward.1} parent=23 // pred_fallthru
          _
        // Predicated region
        $region33: #{bart_decoder_forward.1} parent=23 // pred_check
          %p428 = pneg %p106
        $region34: #{bart_decoder_forward.1} parent=23 // pred_check_branch
          %430 = sbr.rel (%p428) target = $region36
        $region35: #{bart_decoder_forward.1} parent=23 // pred_region
          %p431 = scmp.lt.s32.totalorder %s29, 1
          %s432 = scalar_select %p431, %s29, 1
          %s433 = scalar_lea.vmem %s2, %s432
        $region36: #{bart_decoder_forward.1} parent=23 // pred_fallthru
          _
        // Predicated region
        $region37: #{bart_decoder_forward.1} parent=23 // pred_check
          %p434 = pneg %p153
        $region38: #{bart_decoder_forward.1} parent=23 // pred_check_branch
          %436 = sbr.rel (%p434) target = $region40
        $region39: #{bart_decoder_forward.1} parent=23 // pred_region
          %p437 = scmp.lt.s32.totalorder %s30, 1
          %s438 = scalar_select %p437, %s30, 1
          %s439 = smul.addr %s438, 2
          %s440 = smul.addr %s439, 8
          %s441 = scalar_lea.vmem %s4, %s440
        $region40: #{bart_decoder_forward.1} parent=23 // pred_fallthru
          _
        // Predicated region
        $region41: #{bart_decoder_forward.1} parent=23 // pred_check
          %p442 = pneg %p179
        $region42: #{bart_decoder_forward.1} parent=23 // pred_check_branch
          %444 = sbr.rel (%p442) target = $region44
        $region43: #{bart_decoder_forward.1} parent=23 // pred_region
          %p445 = scmp.lt.s32.totalorder %s30, 1
          %s446 = scalar_select %p445, %s30, 1
          %s447 = smul.addr %s446, 4
          %s448 = smul.addr %s447, 4
          %s449 = scalar_lea.vmem %s5, %s448
        $region44: #{bart_decoder_forward.1} parent=23 // pred_fallthru
          _
        // Predicated region
        $region45: #{bart_decoder_forward.1} parent=23 // pred_check
          %p450 = pneg %p205
        $region46: #{bart_decoder_forward.1} parent=23 // pred_check_branch
          %452 = sbr.rel (%p450) target = $region48
        $region47: #{bart_decoder_forward.1} parent=23 // pred_region
          %p453 = scmp.lt.s32.totalorder %s30, 1
          %s454 = scalar_select %p453, %s30, 1
          %s455 = smul.addr %s454, 4
          %s456 = smul.addr %s455, 4
          %s457 = scalar_lea.vmem %s6, %s456
        $region48: #{bart_decoder_forward.1} parent=23 // pred_fallthru
          _
        // Predicated region
        $region49: #{bart_decoder_forward.1} parent=23 // pred_check
          %p458 = pneg %p231
        $region50: #{bart_decoder_forward.1} parent=23 // pred_check_branch
          %460 = sbr.rel (%p458) target = $region52
        $region51: #{bart_decoder_forward.1} parent=23 // pred_region
          %p461 = scmp.lt.s32.totalorder %s30, 1
          %s462 = scalar_select %p461, %s30, 1
          %s463 = smul.addr %s462, 4
          %s464 = smul.addr %s463, 4
          %s465 = scalar_lea.vmem %s7, %s464
        $region52: #{bart_decoder_forward.1} parent=23 // pred_fallthru
          _
        // Predicated region
        $region53: #{bart_decoder_forward.1} parent=23 // pred_check
          %p466 = pneg %p257
        $region54: #{bart_decoder_forward.1} parent=23 // pred_check_branch
          %468 = sbr.rel (%p466) target = $region56
        $region55: #{bart_decoder_forward.1} parent=23 // pred_region
          %p469 = scmp.lt.s32.totalorder %s30, 1
          %s470 = scalar_select %p469, %s30, 1
          %s471 = smul.addr %s470, 4
          %s472 = smul.addr %s471, 4
          %s473 = scalar_lea.vmem %s8, %s472
        $region56: #{bart_decoder_forward.1} parent=23 // pred_fallthru
          _
        // Predicated region
        $region57: #{bart_decoder_forward.1} parent=23 // pred_check
          %p474 = pneg %p283
        $region58: #{bart_decoder_forward.1} parent=23 // pred_check_branch
          %476 = sbr.rel (%p474) target = $region60
        $region59: #{bart_decoder_forward.1} parent=23 // pred_region
          %p477 = scmp.lt.s32.totalorder %s30, 1
          %s478 = scalar_select %p477, %s30, 1
          %s479 = smul.addr %s478, 4
          %s480 = smul.addr %s479, 4
          %s481 = scalar_lea.vmem %s9, %s480
        $region60: #{bart_decoder_forward.1} parent=23 // pred_fallthru
          _
        // Predicated region
        $region61: #{bart_decoder_forward.1} parent=23 // pred_check
          %p482 = pneg %p309
        $region62: #{bart_decoder_forward.1} parent=23 // pred_check_branch
          %484 = sbr.rel (%p482) target = $region64
        $region63: #{bart_decoder_forward.1} parent=23 // pred_region
          %p485 = scmp.lt.s32.totalorder %s30, 1
          %s486 = scalar_select %p485, %s30, 1
          %s487 = smul.addr %s486, 4
          %s488 = smul.addr %s487, 4
          %s489 = scalar_lea.vmem %s10, %s488
        $region64: #{bart_decoder_forward.1} parent=23 // pred_fallthru
          _
        // Predicated region
        $region65: #{bart_decoder_forward.1} parent=23 // pred_check
          %p490 = pneg %p335
        $region66: #{bart_decoder_forward.1} parent=23 // pred_check_branch
          %492 = sbr.rel (%p490) target = $region68
        $region67: #{bart_decoder_forward.1} parent=23 // pred_region
          %p493 = scmp.lt.s32.totalorder %s30, 1
          %s494 = scalar_select %p493, %s30, 1
          %s495 = smul.addr %s494, 8
          %s496 = smul.addr %s495, 4
          %s497 = scalar_lea.vmem %s11, %s496
        $region68: #{bart_decoder_forward.1} parent=23 // pred_fallthru
          _
      $region24: #{bart_decoder_forward.1} parent=5 // pred_fallthru
        _
      %p498 = scmp.le.s32.totalorder 1, %s22
      %p499 = scmp.lt.s32.totalorder %s22, 5
      %p500 = pnand %p498, %p499
      %p501 = pneg %p500
      // Predicated region
      $region69: #{bart_decoder_forward.1} parent=5 // pred_check
        _
      $region70: #{bart_decoder_forward.1} parent=5 // pred_check_branch
        %503 = sbr.rel (%p500) target = $region72
      $region71: #{bart_decoder_forward.1} parent=5 // pred_region
        %s504 = ssub.s32 %s22, 1
        %p505 = scmp.lt.s32.totalorder %s31, 1
        %s506 = scalar_select %p505, %s31, 1
        %s507 = smul.addr %s506, 8
        %s508 = scalar_lea.vmem %s0, %s507
        %p509 = pneg %p60
        %p510 = pneg %p57
        %p511 = scmp.lt.s32.totalorder %s31, 1
        %s512 = scalar_select %p511, %s31, 1
        %s513 = smul.addr %s512, 2
        %s514 = smul.addr %s513, 4
        %s515 = scalar_lea.vmem %s1, %s514
        %p516 = pneg %p86
        %p517 = pneg %p83
        %p518 = scmp.lt.s32.totalorder %s31, 1
        %s519 = scalar_select %p518, %s31, 1
        %s520 = scalar_lea.vmem %s2, %s519
        %p521 = pneg %p112
        %p522 = pneg %p109
        %p523 = pneg %p133
        %p524 = pneg %p130
        %p525 = scmp.lt.s32.totalorder %s32, 1
        %s526 = scalar_select %p525, %s32, 1
        %s527 = smul.addr %s526, 2
        %s528 = smul.addr %s527, 8
        %s529 = scalar_lea.vmem %s4, %s528
        %p530 = pneg %p159
        %p531 = pneg %p156
        %p532 = scmp.lt.s32.totalorder %s32, 1
        %s533 = scalar_select %p532, %s32, 1
        %s534 = smul.addr %s533, 4
        %s535 = smul.addr %s534, 4
        %s536 = scalar_lea.vmem %s5, %s535
        %p537 = pneg %p185
        %p538 = pneg %p182
        %p539 = scmp.lt.s32.totalorder %s32, 1
        %s540 = scalar_select %p539, %s32, 1
        %s541 = smul.addr %s540, 4
        %s542 = smul.addr %s541, 4
        %s543 = scalar_lea.vmem %s6, %s542
        %p544 = pneg %p211
        %p545 = pneg %p208
        %p546 = scmp.lt.s32.totalorder %s32, 1
        %s547 = scalar_select %p546, %s32, 1
        %s548 = smul.addr %s547, 4
        %s549 = smul.addr %s548, 4
        %s550 = scalar_lea.vmem %s7, %s549
        %p551 = pneg %p237
        %p552 = pneg %p234
        %p553 = scmp.lt.s32.totalorder %s32, 1
        %s554 = scalar_select %p553, %s32, 1
        %s555 = smul.addr %s554, 4
        %s556 = smul.addr %s555, 4
        %s557 = scalar_lea.vmem %s8, %s556
        %p558 = pneg %p263
        %p559 = pneg %p260
        %p560 = scmp.lt.s32.totalorder %s32, 1
        %s561 = scalar_select %p560, %s32, 1
        %s562 = smul.addr %s561, 4
        %s563 = smul.addr %s562, 4
        %s564 = scalar_lea.vmem %s9, %s563
        %p565 = pneg %p289
        %p566 = pneg %p286
        %p567 = scmp.lt.s32.totalorder %s32, 1
        %s568 = scalar_select %p567, %s32, 1
        %s569 = smul.addr %s568, 4
        %s570 = smul.addr %s569, 4
        %s571 = scalar_lea.vmem %s10, %s570
        %p572 = pneg %p315
        %p573 = pneg %p312
        %p574 = scmp.lt.s32.totalorder %s32, 1
        %s575 = scalar_select %p574, %s32, 1
        %s576 = smul.addr %s575, 8
        %s577 = smul.addr %s576, 4
        %s578 = scalar_lea.vmem %s11, %s577
        %p579 = pneg %p341
        %p580 = pneg %p338
        %p581 = pneg %p362
        %p582 = pneg %p359
        %p583 = pneg %p388
        %p584 = pneg %p385
        %s585 = sand.u32 %s375, 1
        %s586 = scalar_lea.sflag [#allocation4], %s585
        %s587 = sand.u32 %s375, 1
        %s588 = smul.addr %s587, 8
        %s589 = scalar_lea.vmem [#allocation3], %s588
        %p590 = scmp.lt.s32.totalorder %s31, 1
        %s591 = scalar_select %p590, %s31, 1
        %s592 = smul.addr %s591, 8
        %s593 = scalar_lea.vmem %s0, %s592
        %p594 = scmp.lt.s32.totalorder %s31, 1
        %s595 = scalar_select %p594, %s31, 1
        %s596 = smul.addr %s595, 2
        %s597 = smul.addr %s596, 4
        %s598 = scalar_lea.vmem %s1, %s597
        %p599 = scmp.lt.s32.totalorder %s31, 1
        %s600 = scalar_select %p599, %s31, 1
        %s601 = scalar_lea.vmem %s2, %s600
        %p602 = scmp.lt.s32.totalorder %s32, 1
        %s603 = scalar_select %p602, %s32, 1
        %s604 = smul.addr %s603, 2
        %s605 = smul.addr %s604, 8
        %s606 = scalar_lea.vmem %s4, %s605
        %p607 = scmp.lt.s32.totalorder %s32, 1
        %s608 = scalar_select %p607, %s32, 1
        %s609 = smul.addr %s608, 4
        %s610 = smul.addr %s609, 4
        %s611 = scalar_lea.vmem %s5, %s610
        %p612 = scmp.lt.s32.totalorder %s32, 1
        %s613 = scalar_select %p612, %s32, 1
        %s614 = smul.addr %s613, 4
        %s615 = smul.addr %s614, 4
        %s616 = scalar_lea.vmem %s6, %s615
        %p617 = scmp.lt.s32.totalorder %s32, 1
        %s618 = scalar_select %p617, %s32, 1
        %s619 = smul.addr %s618, 4
        %s620 = smul.addr %s619, 4
        %s621 = scalar_lea.vmem %s7, %s620
        %p622 = scmp.lt.s32.totalorder %s32, 1
        %s623 = scalar_select %p622, %s32, 1
        %s624 = smul.addr %s623, 4
        %s625 = smul.addr %s624, 4
        %s626 = scalar_lea.vmem %s8, %s625
        %p627 = scmp.lt.s32.totalorder %s32, 1
        %s628 = scalar_select %p627, %s32, 1
        %s629 = smul.addr %s628, 4
        %s630 = smul.addr %s629, 4
        %s631 = scalar_lea.vmem %s9, %s630
        %p632 = scmp.lt.s32.totalorder %s32, 1
        %s633 = scalar_select %p632, %s32, 1
        %s634 = smul.addr %s633, 4
        %s635 = smul.addr %s634, 4
        %s636 = scalar_lea.vmem %s10, %s635
        %p637 = scmp.lt.s32.totalorder %s32, 1
        %s638 = scalar_select %p637, %s32, 1
        %s639 = smul.addr %s638, 8
        %s640 = smul.addr %s639, 4
        %s641 = scalar_lea.vmem %s11, %s640
        %v643 = vld [vmem:[%s3] sm:$0xf]
        %v644 = vld [vmem:[%s606] sm:$0xff]
        %v645 = vld [vmem:[%s606 + $0x8] sm:$0x1f]
        %p646 = scmp.eq.s32.totalorder %s32, 0
        // Predicated region
        $region73: #{bart_decoder_forward.1} parent=71 // pred_check
          %p647 = pneg %p646
        $region74: #{bart_decoder_forward.1} parent=71 // pred_check_branch
          %649 = sbr.rel (%p647) target = $region76
        $region75: #{bart_decoder_forward.1} parent=71 // pred_region
          %v650 = vld [vmem:[%s593] sm:$0xff]
          %vm651 = vcmask 261120
          %v652 = vsel %vm651, %v650, 0.0
          %653 = vadd.xlane.f32.xlu0 %v652
          %v654 = vpop.xlane.xlu0 %653
          %v655 = vrcp.pop 32.0
          %v656 = vmul.f32 %v654, %v655
          %v657 = vsub.f32 %v650, %v656
          %v658 = vmul.f32 %v657, %v657
          %v659 = vsel %vm651, %v658, 0.0
          %660 = vadd.xlane.f32.xlu0 %v659
          %v661 = vpop.xlane.xlu0 %660
          %v662 = vmul.f32 %v661, %v655
          %v663 = vadd.f32 %v662, 1e-05
          %v664 = vrsqrt.pop %v663
          %v665 = vmul.f32 %v657, %v664
          %v666 = vlaneseq
          %v667 = vshrl.u32 %v666, 7
          %v668 = vsub.s32 0, %v667
          %v669 = vrot.slane %v643, %v668
          %v670 = vmul.f32 %v665, %v669
          %v671 = vlaneseq
          %v672 = vshrl.u32 %v671, 7
          %v673 = vsub.s32 1, %v672
          %v674 = vrot.slane %v643, %v673
          %v675 = vadd.f32 %v670, %v674
          %676 = vst.msk [vmem:[#allocation2] sm:$0xff] %vm651, %v675
        $region76: #{bart_decoder_forward.1} parent=71 // pred_fallthru
          _
        %v677 = vld [vmem:[#allocation2] sm:$0xff]
        %v678 = vlaneseq
        %v679 = vshrl.u32 %v678, 7
        %v680 = vlaneseq
        %v681 = vand.u32 %v680, 127
        %vm682 = vcmp.ge.s32.totalorder %v679, %v681
        %v683 = vld [vmem:[%s601] sm:$0x1]
        %vm684 = vcmp.gt.s32.totalorder %v683, 0
        %v685 = vsel %vm684, 1, 0
        %v686 = vlaneseq
        %v687 = vshrl.u32 %v686, 7
        %v688 = vsub.s32 0, %v687
        %v689 = vrot.slane %v685, %v688
        %vm690 = vcmp.eq.s32.totalorder %v689, 1
        %vm691 = vmand %vm682, %vm690
        %v692 = vsel %vm691, 0.0, -3.4028235e+38
        %vm693 = vcmask 261120
        %v694 = vsel %vm693, %v677, 0.0
        %695 = vadd.xlane.f32.xlu0 %v694
        %v696 = vpop.xlane.xlu0 %695
        %v697 = vrcp.pop 32.0
        %v698 = vmul.f32 %v696, %v697
        %v699 = vsub.f32 %v677, %v698
        %v700 = vmul.f32 %v699, %v699
        %v701 = vsel %vm693, %v700, 0.0
        %702 = vadd.xlane.f32.xlu0 %v701
        %v703 = vpop.xlane.xlu0 %702
        %v704 = vmul.f32 %v703, %v697
        %v705 = vadd.f32 %v704, 1e-05
        %v706 = vrsqrt.pop %v705
        %v707 = vmul.f32 %v699, %v706
        %v708 = vlaneseq
        %v709 = vshrl.u32 %v708, 7
        %v710 = vsub.s32 0, %v709
        %v711 = vrot.slane %v644, %v710
        %v712 = vmul.f32 %v707, %v711
        %v713 = vlaneseq
        %v714 = vshrl.u32 %v713, 7
        %v715 = vsub.s32 1, %v714
        %v716 = vrot.slane %v644, %v715
        %v717 = vadd.f32 %v712, %v716
        %v718 = vpack.c.bf16 %v717, %v717
        %v719 = vld [vmem:[%s611] sm:$0xf]
        %v720 = vld [vmem:[%s611 + $0x4] sm:$0xf]
        %v721 = vld [vmem:[%s611 + $0x8] sm:$0xf]
        %v722 = vld [vmem:[%s611 + $0xc] sm:$0xf]
        %v723 = vlaneseq
        %v724 = vshrl.u32 %v723, 7
        %v725 = vsub.s32 6, %v724
        %v726 = vrot.slane %v644, %v725
        %v731 = vunpack.c.l.b16 %v719
        %v732 = vunpack.c.l.b16 %v720
        %v733 = vunpack.c.l.b16 %v721
        %v734 = vunpack.c.l.b16 %v722
        %v735 = vpack.c.b16 %v732, %v731
        %v736 = vpack.c.b16 %v734, %v733
        %v740 = vsel %vm693, %v718, 0
        %742 = vmatprep.subr.bf16.mxu0 0
        %743 = vmatpush1.bf16.msra.mxu0 0
        %744 = vmatprep.subr.bf16.mxu0 0
        %745 = vmatpush1.bf16.msra.mxu0 0
        %746 = vmatprep.subr.bf16.mxu0 0
        %747 = vmatpush1.bf16.msra.mxu0 0
        %748 = vmatprep.subr.bf16.mxu0 0
        %749 = vmatpush1.bf16.msra.mxu0 0
        %750 = vmatprep.subr.bf16.mxu0 0
        %751 = vmatpush1.bf16.msra.mxu0 0
        %752 = vmatprep.subr.bf16.mxu0 0
        %753 = vmatpush1.bf16.msra.mxu0 0
        %754 = vmatprep.subr.bf16.mxu0 0
        %755 = vmatpush1.bf16.msra.mxu0 %v736
        %756 = vmatprep.subr.bf16.mxu0 0
        %757 = vmatpush1.bf16.msra.mxu0 %v735
        %758 = vmatprep.subr.bf16.mxu0 0
        %759 = vmatpush2.bf16.msra.mxu0 0
        %760 = vmatprep.subr.bf16.mxu0 0
        %761 = vmatpush2.bf16.msra.mxu0 0
        %762 = vmatprep.subr.bf16.mxu0 0
        %763 = vmatpush2.bf16.msra.mxu0 0
        %764 = vmatprep.subr.bf16.mxu0 0
        %765 = vmatpush2.bf16.msra.mxu0 0
        %766 = vmatprep.subr.bf16.mxu0 0
        %767 = vmatpush2.bf16.msra.mxu0 0
        %768 = vmatprep.subr.bf16.mxu0 0
        %769 = vmatpush2.bf16.msra.mxu0 0
        %770 = vmatprep.subr.bf16.mxu0 0
        %771 = vmatpush2.bf16.msra.mxu0 0
        %772 = vmatprep.subr.bf16.mxu0 0
        %773 = vmatpush2.bf16.msra.mxu0 0
        %774 = vmatprep.mubr.bf16.mxu0 0
        %775 = vmatmul.mubr.bf16.gmra.mxu0 %v740
        %v776 = vpop.f32.mrf.mxu0
        %v777 = vadd.f32 %v726, %v776
        %v778 = vpop.f32.mrf.mxu0
        %v779 = vpop.f32.mrf.mxu0
        %v780 = vpop.f32.mrf.mxu0
        %781 = vdwg.mxu0
        %783 = vrot.lane.b32.xlu0 %v777, 120
        %v784 = vpop.permute.xlu0 %783
        %786 = vrot.lane.b32.xlu0 %v777, 112
        %v787 = vpop.permute.xlu0 %786
        %789 = vrot.lane.b32.xlu0 %v777, 104
        %v790 = vpop.permute.xlu0 %789
        %v792 = vcombine.low %v777, %v787
        %v793 = vcombine.high %v777, %v787
        %v795 = vunpack.c.l.s4 1983009808
        %v796 = vunpack.c.0.s8 %v795
        %v797 = vlaneseq
        %v798 = vshrl.u32 %v797, 7
        %v799 = vsub.s32 %v796, %v798
        %v800 = vrot.slane %v792, %v799
        %v802 = vunpack.c.l.s4 1983009808
        %v803 = vunpack.c.0.s8 %v802
        %v804 = vlaneseq
        %v805 = vshrl.u32 %v804, 7
        %v806 = vsub.s32 %v803, %v805
        %v807 = vrot.slane %v793, %v806
        %v808 = vcombine.low %v784, %v790
        %v809 = vcombine.high %v784, %v790
        %v811 = vunpack.c.l.s4 1983009808
        %v812 = vunpack.c.0.s8 %v811
        %v813 = vlaneseq
        %v814 = vshrl.u32 %v813, 7
        %v815 = vsub.s32 %v812, %v814
        %v816 = vrot.slane %v808, %v815
        %v818 = vunpack.c.l.s4 1983009808
        %v819 = vunpack.c.0.s8 %v818
        %v820 = vlaneseq
        %v821 = vshrl.u32 %v820, 7
        %v822 = vsub.s32 %v819, %v821
        %v823 = vrot.slane %v809, %v822
        %v824 = vcombine.low %v800, %v816
        %v825 = vcombine.high %v800, %v816
        %v827 = vunpack.c.l.s4 1934713408
        %v828 = vunpack.c.0.s8 %v827
        %v829 = vlaneseq
        %v830 = vshrl.u32 %v829, 7
        %v831 = vsub.s32 %v828, %v830
        %v832 = vrot.slane %v824, %v831
        %v834 = vunpack.c.l.s4 1934713408
        %v835 = vunpack.c.0.s8 %v834
        %v836 = vlaneseq
        %v837 = vshrl.u32 %v836, 7
        %v838 = vsub.s32 %v835, %v837
        %v839 = vrot.slane %v825, %v838
        %v840 = vcombine.low %v807, %v823
        %v841 = vcombine.high %v807, %v823
        %v843 = vunpack.c.l.s4 1934713408
        %v844 = vunpack.c.0.s8 %v843
        %v845 = vlaneseq
        %v846 = vshrl.u32 %v845, 7
        %v847 = vsub.s32 %v844, %v846
        %v848 = vrot.slane %v840, %v847
        %v850 = vunpack.c.l.s4 1934713408
        %v851 = vunpack.c.0.s8 %v850
        %v852 = vlaneseq
        %v853 = vshrl.u32 %v852, 7
        %v854 = vsub.s32 %v851, %v853
        %v855 = vrot.slane %v841, %v854
        %v856 = vcombine.high %v832, 0.0
        %v857 = vcombine.high %v839, 0.0
        %v858 = vcombine.high %v848, 0.0
        %v859 = vcombine.high %v855, 0.0
        %860 = vrot.lane.b32.xlu0 %v777, 96
        %v861 = vpop.permute.xlu0 %860
        %862 = vrot.lane.b32.xlu0 %v784, 96
        %v863 = vpop.permute.xlu0 %862
        %864 = vrot.lane.b32.xlu0 %v787, 96
        %v865 = vpop.permute.xlu0 %864
        %866 = vrot.lane.b32.xlu0 %v790, 96
        %v867 = vpop.permute.xlu0 %866
        %v872 = vcombine.low %v861, %v865
        %v873 = vcombine.high %v861, %v865
        %v875 = vunpack.c.l.s4 1983009808
        %v876 = vunpack.c.0.s8 %v875
        %v877 = vlaneseq
        %v878 = vshrl.u32 %v877, 7
        %v879 = vsub.s32 %v876, %v878
        %v880 = vrot.slane %v872, %v879
        %v882 = vunpack.c.l.s4 1983009808
        %v883 = vunpack.c.0.s8 %v882
        %v884 = vlaneseq
        %v885 = vshrl.u32 %v884, 7
        %v886 = vsub.s32 %v883, %v885
        %v887 = vrot.slane %v873, %v886
        %v888 = vcombine.low %v863, %v867
        %v889 = vcombine.high %v863, %v867
        %v891 = vunpack.c.l.s4 1983009808
        %v892 = vunpack.c.0.s8 %v891
        %v893 = vlaneseq
        %v894 = vshrl.u32 %v893, 7
        %v895 = vsub.s32 %v892, %v894
        %v896 = vrot.slane %v888, %v895
        %v898 = vunpack.c.l.s4 1983009808
        %v899 = vunpack.c.0.s8 %v898
        %v900 = vlaneseq
        %v901 = vshrl.u32 %v900, 7
        %v902 = vsub.s32 %v899, %v901
        %v903 = vrot.slane %v889, %v902
        %v904 = vcombine.low %v880, %v896
        %v905 = vcombine.high %v880, %v896
        %v907 = vunpack.c.l.s4 1934713408
        %v908 = vunpack.c.0.s8 %v907
        %v909 = vlaneseq
        %v910 = vshrl.u32 %v909, 7
        %v911 = vsub.s32 %v908, %v910
        %v912 = vrot.slane %v904, %v911
        %v914 = vunpack.c.l.s4 1934713408
        %v915 = vunpack.c.0.s8 %v914
        %v916 = vlaneseq
        %v917 = vshrl.u32 %v916, 7
        %v918 = vsub.s32 %v915, %v917
        %v919 = vrot.slane %v905, %v918
        %v920 = vcombine.low %v887, %v903
        %v921 = vcombine.high %v887, %v903
        %v923 = vunpack.c.l.s4 1934713408
        %v924 = vunpack.c.0.s8 %v923
        %v925 = vlaneseq
        %v926 = vshrl.u32 %v925, 7
        %v927 = vsub.s32 %v924, %v926
        %v928 = vrot.slane %v920, %v927
        %v930 = vunpack.c.l.s4 1934713408
        %v931 = vunpack.c.0.s8 %v930
        %v932 = vlaneseq
        %v933 = vshrl.u32 %v932, 7
        %v934 = vsub.s32 %v931, %v933
        %v935 = vrot.slane %v921, %v934
        %v936 = vcombine.high %v912, 0.0
        %v937 = vcombine.high %v919, 0.0
        %v938 = vcombine.high %v928, 0.0
        %v939 = vcombine.high %v935, 0.0
        %940 = vrot.lane.b32.xlu0 %v777, 64
        %v941 = vpop.permute.xlu0 %940
        %942 = vrot.lane.b32.xlu0 %v784, 64
        %v943 = vpop.permute.xlu0 %942
        %944 = vrot.lane.b32.xlu0 %v787, 64
        %v945 = vpop.permute.xlu0 %944
        %946 = vrot.lane.b32.xlu0 %v790, 64
        %v947 = vpop.permute.xlu0 %946
        %v952 = vcombine.low %v941, %v945
        %v953 = vcombine.high %v941, %v945
        %v955 = vunpack.c.l.s4 1983009808
        %v956 = vunpack.c.0.s8 %v955
        %v957 = vlaneseq
        %v958 = vshrl.u32 %v957, 7
        %v959 = vsub.s32 %v956, %v958
        %v960 = vrot.slane %v952, %v959
        %v962 = vunpack.c.l.s4 1983009808
        %v963 = vunpack.c.0.s8 %v962
        %v964 = vlaneseq
        %v965 = vshrl.u32 %v964, 7
        %v966 = vsub.s32 %v963, %v965
        %v967 = vrot.slane %v953, %v966
        %v968 = vcombine.low %v943, %v947
        %v969 = vcombine.high %v943, %v947
        %v971 = vunpack.c.l.s4 1983009808
        %v972 = vunpack.c.0.s8 %v971
        %v973 = vlaneseq
        %v974 = vshrl.u32 %v973, 7
        %v975 = vsub.s32 %v972, %v974
        %v976 = vrot.slane %v968, %v975
        %v978 = vunpack.c.l.s4 1983009808
        %v979 = vunpack.c.0.s8 %v978
        %v980 = vlaneseq
        %v981 = vshrl.u32 %v980, 7
        %v982 = vsub.s32 %v979, %v981
        %v983 = vrot.slane %v969, %v982
        %v984 = vcombine.low %v960, %v976
        %v985 = vcombine.high %v960, %v976
        %v987 = vunpack.c.l.s4 1934713408
        %v988 = vunpack.c.0.s8 %v987
        %v989 = vlaneseq
        %v990 = vshrl.u32 %v989, 7
        %v991 = vsub.s32 %v988, %v990
        %v992 = vrot.slane %v984, %v991
        %v994 = vunpack.c.l.s4 1934713408
        %v995 = vunpack.c.0.s8 %v994
        %v996 = vlaneseq
        %v997 = vshrl.u32 %v996, 7
        %v998 = vsub.s32 %v995, %v997
        %v999 = vrot.slane %v985, %v998
        %v1000 = vcombine.low %v967, %v983
        %v1001 = vcombine.high %v967, %v983
        %v1003 = vunpack.c.l.s4 1934713408
        %v1004 = vunpack.c.0.s8 %v1003
        %v1005 = vlaneseq
        %v1006 = vshrl.u32 %v1005, 7
        %v1007 = vsub.s32 %v1004, %v1006
        %v1008 = vrot.slane %v1000, %v1007
        %v1010 = vunpack.c.l.s4 1934713408
        %v1011 = vunpack.c.0.s8 %v1010
        %v1012 = vlaneseq
        %v1013 = vshrl.u32 %v1012, 7
        %v1014 = vsub.s32 %v1011, %v1013
        %v1015 = vrot.slane %v1001, %v1014
        %v1016 = vcombine.high %v992, 0.0
        %v1017 = vcombine.high %v999, 0.0
        %v1018 = vcombine.high %v1008, 0.0
        %v1019 = vcombine.high %v1015, 0.0
        %v1020 = vpack.c.bf16 %v832, %v832
        %v1021 = vpack.c.bf16 %v856, %v856
        %v1022 = vpack.c.bf16 %v839, %v839
        %v1023 = vpack.c.bf16 %v857, %v857
        %v1024 = vpack.c.bf16 %v848, %v848
        %v1025 = vpack.c.bf16 %v858, %v858
        %v1026 = vpack.c.bf16 %v855, %v855
        %v1027 = vpack.c.bf16 %v859, %v859
        %v1028 = vpack.c.bf16 %v912, %v912
        %v1029 = vpack.c.bf16 %v936, %v936
        %v1030 = vpack.c.bf16 %v919, %v919
        %v1031 = vpack.c.bf16 %v937, %v937
        %v1032 = vpack.c.bf16 %v928, %v928
        %v1033 = vpack.c.bf16 %v938, %v938
        %v1034 = vpack.c.bf16 %v935, %v935
        %v1035 = vpack.c.bf16 %v939, %v939
        %v1036 = vcombine.low %v1020, %v1024
        %v1038 = vunpack.c.l.s4 1983009808
        %v1039 = vunpack.c.0.s8 %v1038
        %v1040 = vlaneseq
        %v1041 = vshrl.u32 %v1040, 7
        %v1042 = vsub.s32 %v1039, %v1041
        %v1043 = vrot.slane %v1036, %v1042
        %v1044 = vcombine.low %v1022, %v1026
        %v1046 = vunpack.c.l.s4 1983009808
        %v1047 = vunpack.c.0.s8 %v1046
        %v1048 = vlaneseq
        %v1049 = vshrl.u32 %v1048, 7
        %v1050 = vsub.s32 %v1047, %v1049
        %v1051 = vrot.slane %v1044, %v1050
        %v1052 = vcombine.low %v1043, %v1051
        %v1054 = vunpack.c.l.s4 1934713408
        %v1055 = vunpack.c.0.s8 %v1054
        %v1056 = vlaneseq
        %v1057 = vshrl.u32 %v1056, 7
        %v1058 = vsub.s32 %v1055, %v1057
        %v1059 = vrot.slane %v1052, %v1058
        %v1060 = vcombine.high %v1059, 0
        %v1061 = vcombine.low %v1021, %v1025
        %v1063 = vunpack.c.l.s4 1983009808
        %v1064 = vunpack.c.0.s8 %v1063
        %v1065 = vlaneseq
        %v1066 = vshrl.u32 %v1065, 7
        %v1067 = vsub.s32 %v1064, %v1066
        %v1068 = vrot.slane %v1061, %v1067
        %v1069 = vcombine.low %v1023, %v1027
        %v1071 = vunpack.c.l.s4 1983009808
        %v1072 = vunpack.c.0.s8 %v1071
        %v1073 = vlaneseq
        %v1074 = vshrl.u32 %v1073, 7
        %v1075 = vsub.s32 %v1072, %v1074
        %v1076 = vrot.slane %v1069, %v1075
        %v1077 = vcombine.low %v1068, %v1076
        %v1079 = vunpack.c.l.s4 1934713408
        %v1080 = vunpack.c.0.s8 %v1079
        %v1081 = vlaneseq
        %v1082 = vshrl.u32 %v1081, 7
        %v1083 = vsub.s32 %v1080, %v1082
        %v1084 = vrot.slane %v1077, %v1083
        %v1085 = vcombine.high %v1084, 0
        %v1088 = vpack.i.b16 %v1084, %v1059
        %v1089 = vshrl.u32 %v1059, 16
        %v1090 = vshrl.u32 %v1084, 16
        %v1091 = vpack.i.b16 %v1090, %v1089
        %v1094 = vpack.i.b16 %v1085, %v1060
        %v1095 = vshrl.u32 %v1060, 16
        %v1096 = vshrl.u32 %v1085, 16
        %v1097 = vpack.i.b16 %v1096, %v1095
        %1098 = vxpose.xlu0.c.b16.start [1/8] %v1028, 128
        %1099 = vxpose.xlu0.c.b16.cont [2/8] 0, 128
        %1100 = vxpose.xlu0.c.b16.cont [3/8] 0, 128
        %1101 = vxpose.xlu0.c.b16.cont [4/8] 0, 128
        %1102 = vxpose.xlu0.c.b16.cont [5/8] 0, 128
        %1103 = vxpose.xlu0.c.b16.cont [6/8] 0, 128
        %1104 = vxpose.xlu0.c.b16.cont [7/8] 0, 128
        %1105 = vxpose.xlu0.c.b16.end [8/8] 0, 128
        %v1106 = vpop.trf.xlu0
        %v1107 = vpop.trf.xlu0
        %v1108 = vpop.trf.xlu0
        %v1109 = vpop.trf.xlu0
        %v1110 = vpop.trf.xlu0
        %v1111 = vpop.trf.xlu0
        %v1112 = vpop.trf.xlu0
        %v1113 = vpop.trf.xlu0
        %1114 = vxpose.xlu0.c.b16.start [1/8] %v1029, 128
        %1115 = vxpose.xlu0.c.b16.cont [2/8] 0, 128
        %1116 = vxpose.xlu0.c.b16.cont [3/8] 0, 128
        %1117 = vxpose.xlu0.c.b16.cont [4/8] 0, 128
        %1118 = vxpose.xlu0.c.b16.cont [5/8] 0, 128
        %1119 = vxpose.xlu0.c.b16.cont [6/8] 0, 128
        %1120 = vxpose.xlu0.c.b16.cont [7/8] 0, 128
        %1121 = vxpose.xlu0.c.b16.end [8/8] 0, 128
        %v1122 = vpop.trf.xlu0
        %v1123 = vpop.trf.xlu0
        %v1124 = vpop.trf.xlu0
        %v1125 = vpop.trf.xlu0
        %v1126 = vpop.trf.xlu0
        %v1127 = vpop.trf.xlu0
        %v1128 = vpop.trf.xlu0
        %v1129 = vpop.trf.xlu0
        %1130 = vxpose.xlu0.c.b16.start [1/8] %v1030, 128
        %1131 = vxpose.xlu0.c.b16.cont [2/8] 0, 128
        %1132 = vxpose.xlu0.c.b16.cont [3/8] 0, 128
        %1133 = vxpose.xlu0.c.b16.cont [4/8] 0, 128
        %1134 = vxpose.xlu0.c.b16.cont [5/8] 0, 128
        %1135 = vxpose.xlu0.c.b16.cont [6/8] 0, 128
        %1136 = vxpose.xlu0.c.b16.cont [7/8] 0, 128
        %1137 = vxpose.xlu0.c.b16.end [8/8] 0, 128
        %v1138 = vpop.trf.xlu0
        %v1139 = vpop.trf.xlu0
        %v1140 = vpop.trf.xlu0
        %v1141 = vpop.trf.xlu0
        %v1142 = vpop.trf.xlu0
        %v1143 = vpop.trf.xlu0
        %v1144 = vpop.trf.xlu0
        %v1145 = vpop.trf.xlu0
        %1146 = vxpose.xlu0.c.b16.start [1/8] %v1031, 128
        %1147 = vxpose.xlu0.c.b16.cont [2/8] 0, 128
        %1148 = vxpose.xlu0.c.b16.cont [3/8] 0, 128
        %1149 = vxpose.xlu0.c.b16.cont [4/8] 0, 128
        %1150 = vxpose.xlu0.c.b16.cont [5/8] 0, 128
        %1151 = vxpose.xlu0.c.b16.cont [6/8] 0, 128
        %1152 = vxpose.xlu0.c.b16.cont [7/8] 0, 128
        %1153 = vxpose.xlu0.c.b16.end [8/8] 0, 128
        %v1154 = vpop.trf.xlu0
        %v1155 = vpop.trf.xlu0
        %v1156 = vpop.trf.xlu0
        %v1157 = vpop.trf.xlu0
        %v1158 = vpop.trf.xlu0
        %v1159 = vpop.trf.xlu0
        %v1160 = vpop.trf.xlu0
        %v1161 = vpop.trf.xlu0
        %1162 = vxpose.xlu0.c.b16.start [1/8] %v1032, 128
        %1163 = vxpose.xlu0.c.b16.cont [2/8] 0, 128
        %1164 = vxpose.xlu0.c.b16.cont [3/8] 0, 128
        %1165 = vxpose.xlu0.c.b16.cont [4/8] 0, 128
        %1166 = vxpose.xlu0.c.b16.cont [5/8] 0, 128
        %1167 = vxpose.xlu0.c.b16.cont [6/8] 0, 128
        %1168 = vxpose.xlu0.c.b16.cont [7/8] 0, 128
        %1169 = vxpose.xlu0.c.b16.end [8/8] 0, 128
        %v1170 = vpop.trf.xlu0
        %v1171 = vpop.trf.xlu0
        %v1172 = vpop.trf.xlu0
        %v1173 = vpop.trf.xlu0
        %v1174 = vpop.trf.xlu0
        %v1175 = vpop.trf.xlu0
        %v1176 = vpop.trf.xlu0
        %v1177 = vpop.trf.xlu0
        %1178 = vxpose.xlu0.c.b16.start [1/8] %v1033, 128
        %1179 = vxpose.xlu0.c.b16.cont [2/8] 0, 128
        %1180 = vxpose.xlu0.c.b16.cont [3/8] 0, 128
        %1181 = vxpose.xlu0.c.b16.cont [4/8] 0, 128
        %1182 = vxpose.xlu0.c.b16.cont [5/8] 0, 128
        %1183 = vxpose.xlu0.c.b16.cont [6/8] 0, 128
        %1184 = vxpose.xlu0.c.b16.cont [7/8] 0, 128
        %1185 = vxpose.xlu0.c.b16.end [8/8] 0, 128
        %v1186 = vpop.trf.xlu0
        %v1187 = vpop.trf.xlu0
        %v1188 = vpop.trf.xlu0
        %v1189 = vpop.trf.xlu0
        %v1190 = vpop.trf.xlu0
        %v1191 = vpop.trf.xlu0
        %v1192 = vpop.trf.xlu0
        %v1193 = vpop.trf.xlu0
        %1194 = vxpose.xlu0.c.b16.start [1/8] %v1034, 128
        %1195 = vxpose.xlu0.c.b16.cont [2/8] 0, 128
        %1196 = vxpose.xlu0.c.b16.cont [3/8] 0, 128
        %1197 = vxpose.xlu0.c.b16.cont [4/8] 0, 128
        %1198 = vxpose.xlu0.c.b16.cont [5/8] 0, 128
        %1199 = vxpose.xlu0.c.b16.cont [6/8] 0, 128
        %1200 = vxpose.xlu0.c.b16.cont [7/8] 0, 128
        %1201 = vxpose.xlu0.c.b16.end [8/8] 0, 128
        %v1202 = vpop.trf.xlu0
        %v1203 = vpop.trf.xlu0
        %v1204 = vpop.trf.xlu0
        %v1205 = vpop.trf.xlu0
        %v1206 = vpop.trf.xlu0
        %v1207 = vpop.trf.xlu0
        %v1208 = vpop.trf.xlu0
        %v1209 = vpop.trf.xlu0
        %1210 = vxpose.xlu0.c.b16.start [1/8] %v1035, 128
        %1211 = vxpose.xlu0.c.b16.cont [2/8] 0, 128
        %1212 = vxpose.xlu0.c.b16.cont [3/8] 0, 128
        %1213 = vxpose.xlu0.c.b16.cont [4/8] 0, 128
        %1214 = vxpose.xlu0.c.b16.cont [5/8] 0, 128
        %1215 = vxpose.xlu0.c.b16.cont [6/8] 0, 128
        %1216 = vxpose.xlu0.c.b16.cont [7/8] 0, 128
        %1217 = vxpose.xlu0.c.b16.end [8/8] 0, 128
        %v1218 = vpop.trf.xlu0
        %v1219 = vpop.trf.xlu0
        %v1220 = vpop.trf.xlu0
        %v1221 = vpop.trf.xlu0
        %v1222 = vpop.trf.xlu0
        %v1223 = vpop.trf.xlu0
        %v1224 = vpop.trf.xlu0
        %v1225 = vpop.trf.xlu0
        %v1226 = vcombine.low %v1106, %v1170
        %v1228 = vunpack.c.l.s4 1983009808
        %v1229 = vunpack.c.0.s8 %v1228
        %v1230 = vlaneseq
        %v1231 = vshrl.u32 %v1230, 7
        %v1232 = vsub.s32 %v1229, %v1231
        %v1233 = vrot.slane %v1226, %v1232
        %v1234 = vcombine.low %v1138, %v1202
        %v1236 = vunpack.c.l.s4 1983009808
        %v1237 = vunpack.c.0.s8 %v1236
        %v1238 = vlaneseq
        %v1239 = vshrl.u32 %v1238, 7
        %v1240 = vsub.s32 %v1237, %v1239
        %v1241 = vrot.slane %v1234, %v1240
        %v1242 = vcombine.low %v1233, %v1241
        %v1243 = vcombine.high %v1233, %v1241
        %v1245 = vunpack.c.l.s4 1934713408
        %v1246 = vunpack.c.0.s8 %v1245
        %v1247 = vlaneseq
        %v1248 = vshrl.u32 %v1247, 7
        %v1249 = vsub.s32 %v1246, %v1248
        %v1250 = vrot.slane %v1242, %v1249
        %v1252 = vunpack.c.l.s4 1934713408
        %v1253 = vunpack.c.0.s8 %v1252
        %v1254 = vlaneseq
        %v1255 = vshrl.u32 %v1254, 7
        %v1256 = vsub.s32 %v1253, %v1255
        %v1257 = vrot.slane %v1243, %v1256
        %v1258 = vcombine.high %v1250, 0
        %v1259 = vcombine.high %v1257, 0
        %v1260 = vcombine.low %v1122, %v1186
        %v1262 = vunpack.c.l.s4 1983009808
        %v1263 = vunpack.c.0.s8 %v1262
        %v1264 = vlaneseq
        %v1265 = vshrl.u32 %v1264, 7
        %v1266 = vsub.s32 %v1263, %v1265
        %v1267 = vrot.slane %v1260, %v1266
        %v1268 = vcombine.low %v1154, %v1218
        %v1270 = vunpack.c.l.s4 1983009808
        %v1271 = vunpack.c.0.s8 %v1270
        %v1272 = vlaneseq
        %v1273 = vshrl.u32 %v1272, 7
        %v1274 = vsub.s32 %v1271, %v1273
        %v1275 = vrot.slane %v1268, %v1274
        %v1276 = vcombine.low %v1267, %v1275
        %v1277 = vcombine.high %v1267, %v1275
        %v1279 = vunpack.c.l.s4 1934713408
        %v1280 = vunpack.c.0.s8 %v1279
        %v1281 = vlaneseq
        %v1282 = vshrl.u32 %v1281, 7
        %v1283 = vsub.s32 %v1280, %v1282
        %v1284 = vrot.slane %v1276, %v1283
        %v1286 = vunpack.c.l.s4 1934713408
        %v1287 = vunpack.c.0.s8 %v1286
        %v1288 = vlaneseq
        %v1289 = vshrl.u32 %v1288, 7
        %v1290 = vsub.s32 %v1287, %v1289
        %v1291 = vrot.slane %v1277, %v1290
        %v1292 = vcombine.high %v1284, 0
        %v1293 = vcombine.high %v1291, 0
        %v1296 = vpack.i.b16 %v1284, %v1250
        %v1298 = vshrl.u32 %v1250, 16
        %v1299 = vshrl.u32 %v1284, 16
        %v1300 = vpack.i.b16 %v1299, %v1298
        %v1304 = vpack.i.b16 %v1292, %v1258
        %v1306 = vshrl.u32 %v1258, 16
        %v1307 = vshrl.u32 %v1292, 16
        %v1308 = vpack.i.b16 %v1307, %v1306
        %v1312 = vpack.i.b16 %v1291, %v1257
        %v1314 = vshrl.u32 %v1257, 16
        %v1315 = vshrl.u32 %v1291, 16
        %v1316 = vpack.i.b16 %v1315, %v1314
        %v1320 = vpack.i.b16 %v1293, %v1259
        %v1322 = vshrl.u32 %v1259, 16
        %v1323 = vshrl.u32 %v1293, 16
        %v1324 = vpack.i.b16 %v1323, %v1322
        %1326 = vxpose.xlu0.c.b16.start [1/8] %v1296, 128
        %1327 = vxpose.xlu0.c.b16.cont [2/8] 0, 128
        %1328 = vxpose.xlu0.c.b16.cont [3/8] 0, 128
        %1329 = vxpose.xlu0.c.b16.cont [4/8] 0, 128
        %1330 = vxpose.xlu0.c.b16.cont [5/8] 0, 128
        %1331 = vxpose.xlu0.c.b16.cont [6/8] 0, 128
        %1332 = vxpose.xlu0.c.b16.cont [7/8] 0, 128
        %1333 = vxpose.xlu0.c.b16.end [8/8] 0, 128
        %v1334 = vpop.trf.xlu0
        %v1335 = vpop.trf.xlu0
        %v1336 = vpop.trf.xlu0
        %v1337 = vpop.trf.xlu0
        %v1338 = vpop.trf.xlu0
        %v1339 = vpop.trf.xlu0
        %v1340 = vpop.trf.xlu0
        %v1341 = vpop.trf.xlu0
        %1342 = vxpose.xlu0.c.b16.start [1/8] %v1300, 128
        %1343 = vxpose.xlu0.c.b16.cont [2/8] 0, 128
        %1344 = vxpose.xlu0.c.b16.cont [3/8] 0, 128
        %1345 = vxpose.xlu0.c.b16.cont [4/8] 0, 128
        %1346 = vxpose.xlu0.c.b16.cont [5/8] 0, 128
        %1347 = vxpose.xlu0.c.b16.cont [6/8] 0, 128
        %1348 = vxpose.xlu0.c.b16.cont [7/8] 0, 128
        %1349 = vxpose.xlu0.c.b16.end [8/8] 0, 128
        %v1350 = vpop.trf.xlu0
        %v1351 = vpop.trf.xlu0
        %v1352 = vpop.trf.xlu0
        %v1353 = vpop.trf.xlu0
        %v1354 = vpop.trf.xlu0
        %v1355 = vpop.trf.xlu0
        %v1356 = vpop.trf.xlu0
        %v1357 = vpop.trf.xlu0
        %1358 = vxpose.xlu0.c.b16.start [1/8] %v1304, 128
        %1359 = vxpose.xlu0.c.b16.cont [2/8] 0, 128
        %1360 = vxpose.xlu0.c.b16.cont [3/8] 0, 128
        %1361 = vxpose.xlu0.c.b16.cont [4/8] 0, 128
        %1362 = vxpose.xlu0.c.b16.cont [5/8] 0, 128
        %1363 = vxpose.xlu0.c.b16.cont [6/8] 0, 128
        %1364 = vxpose.xlu0.c.b16.cont [7/8] 0, 128
        %1365 = vxpose.xlu0.c.b16.end [8/8] 0, 128
        %v1366 = vpop.trf.xlu0
        %v1367 = vpop.trf.xlu0
        %v1368 = vpop.trf.xlu0
        %v1369 = vpop.trf.xlu0
        %v1370 = vpop.trf.xlu0
        %v1371 = vpop.trf.xlu0
        %v1372 = vpop.trf.xlu0
        %v1373 = vpop.trf.xlu0
        %1374 = vxpose.xlu0.c.b16.start [1/8] %v1308, 128
        %1375 = vxpose.xlu0.c.b16.cont [2/8] 0, 128
        %1376 = vxpose.xlu0.c.b16.cont [3/8] 0, 128
        %1377 = vxpose.xlu0.c.b16.cont [4/8] 0, 128
        %1378 = vxpose.xlu0.c.b16.cont [5/8] 0, 128
        %1379 = vxpose.xlu0.c.b16.cont [6/8] 0, 128
        %1380 = vxpose.xlu0.c.b16.cont [7/8] 0, 128
        %1381 = vxpose.xlu0.c.b16.end [8/8] 0, 128
        %v1382 = vpop.trf.xlu0
        %v1383 = vpop.trf.xlu0
        %v1384 = vpop.trf.xlu0
        %v1385 = vpop.trf.xlu0
        %v1386 = vpop.trf.xlu0
        %v1387 = vpop.trf.xlu0
        %v1388 = vpop.trf.xlu0
        %v1389 = vpop.trf.xlu0
        %1390 = vxpose.xlu0.c.b16.start [1/8] %v1312, 128
        %1391 = vxpose.xlu0.c.b16.cont [2/8] 0, 128
        %1392 = vxpose.xlu0.c.b16.cont [3/8] 0, 128
        %1393 = vxpose.xlu0.c.b16.cont [4/8] 0, 128
        %1394 = vxpose.xlu0.c.b16.cont [5/8] 0, 128
        %1395 = vxpose.xlu0.c.b16.cont [6/8] 0, 128
        %1396 = vxpose.xlu0.c.b16.cont [7/8] 0, 128
        %1397 = vxpose.xlu0.c.b16.end [8/8] 0, 128
        %v1398 = vpop.trf.xlu0
        %v1399 = vpop.trf.xlu0
        %v1400 = vpop.trf.xlu0
        %v1401 = vpop.trf.xlu0
        %v1402 = vpop.trf.xlu0
        %v1403 = vpop.trf.xlu0
        %v1404 = vpop.trf.xlu0
        %v1405 = vpop.trf.xlu0
        %1406 = vxpose.xlu0.c.b16.start [1/8] %v1316, 128
        %1407 = vxpose.xlu0.c.b16.cont [2/8] 0, 128
        %1408 = vxpose.xlu0.c.b16.cont [3/8] 0, 128
        %1409 = vxpose.xlu0.c.b16.cont [4/8] 0, 128
        %1410 = vxpose.xlu0.c.b16.cont [5/8] 0, 128
        %1411 = vxpose.xlu0.c.b16.cont [6/8] 0, 128
        %1412 = vxpose.xlu0.c.b16.cont [7/8] 0, 128
        %1413 = vxpose.xlu0.c.b16.end [8/8] 0, 128
        %v1414 = vpop.trf.xlu0
        %v1415 = vpop.trf.xlu0
        %v1416 = vpop.trf.xlu0
        %v1417 = vpop.trf.xlu0
        %v1418 = vpop.trf.xlu0
        %v1419 = vpop.trf.xlu0
        %v1420 = vpop.trf.xlu0
        %v1421 = vpop.trf.xlu0
        %1422 = vxpose.xlu0.c.b16.start [1/8] %v1320, 128
        %1423 = vxpose.xlu0.c.b16.cont [2/8] 0, 128
        %1424 = vxpose.xlu0.c.b16.cont [3/8] 0, 128
        %1425 = vxpose.xlu0.c.b16.cont [4/8] 0, 128
        %1426 = vxpose.xlu0.c.b16.cont [5/8] 0, 128
        %1427 = vxpose.xlu0.c.b16.cont [6/8] 0, 128
        %1428 = vxpose.xlu0.c.b16.cont [7/8] 0, 128
        %1429 = vxpose.xlu0.c.b16.end [8/8] 0, 128
        %v1430 = vpop.trf.xlu0
        %v1431 = vpop.trf.xlu0
        %v1432 = vpop.trf.xlu0
        %v1433 = vpop.trf.xlu0
        %v1434 = vpop.trf.xlu0
        %v1435 = vpop.trf.xlu0
        %v1436 = vpop.trf.xlu0
        %v1437 = vpop.trf.xlu0
        %1438 = vxpose.xlu0.c.b16.start [1/8] %v1324, 128
        %1439 = vxpose.xlu0.c.b16.cont [2/8] 0, 128
        %1440 = vxpose.xlu0.c.b16.cont [3/8] 0, 128
        %1441 = vxpose.xlu0.c.b16.cont [4/8] 0, 128
        %1442 = vxpose.xlu0.c.b16.cont [5/8] 0, 128
        %1443 = vxpose.xlu0.c.b16.cont [6/8] 0, 128
        %1444 = vxpose.xlu0.c.b16.cont [7/8] 0, 128
        %1445 = vxpose.xlu0.c.b16.end [8/8] 0, 128
        %v1446 = vpop.trf.xlu0
        %v1447 = vpop.trf.xlu0
        %v1448 = vpop.trf.xlu0
        %v1449 = vpop.trf.xlu0
        %v1450 = vpop.trf.xlu0
        %v1451 = vpop.trf.xlu0
        %v1452 = vpop.trf.xlu0
        %v1453 = vpop.trf.xlu0
        %v1454 = vcombine.low %v1334, %v1398
        %v1456 = vunpack.c.l.s4 1983009808
        %v1457 = vunpack.c.0.s8 %v1456
        %v1458 = vlaneseq
        %v1459 = vshrl.u32 %v1458, 7
        %v1460 = vsub.s32 %v1457, %v1459
        %v1461 = vrot.slane %v1454, %v1460
        %v1462 = vcombine.low %v1366, %v1430
        %v1464 = vunpack.c.l.s4 1983009808
        %v1465 = vunpack.c.0.s8 %v1464
        %v1466 = vlaneseq
        %v1467 = vshrl.u32 %v1466, 7
        %v1468 = vsub.s32 %v1465, %v1467
        %v1469 = vrot.slane %v1462, %v1468
        %v1470 = vcombine.low %v1461, %v1469
        %v1472 = vunpack.c.l.s4 1934713408
        %v1473 = vunpack.c.0.s8 %v1472
        %v1474 = vlaneseq
        %v1475 = vshrl.u32 %v1474, 7
        %v1476 = vsub.s32 %v1473, %v1475
        %v1477 = vrot.slane %v1470, %v1476
        %v1478 = vcombine.high %v1477, 0
        %v1479 = vcombine.low %v1350, %v1414
        %v1481 = vunpack.c.l.s4 1983009808
        %v1482 = vunpack.c.0.s8 %v1481
        %v1483 = vlaneseq
        %v1484 = vshrl.u32 %v1483, 7
        %v1485 = vsub.s32 %v1482, %v1484
        %v1486 = vrot.slane %v1479, %v1485
        %v1487 = vcombine.low %v1382, %v1446
        %v1489 = vunpack.c.l.s4 1983009808
        %v1490 = vunpack.c.0.s8 %v1489
        %v1491 = vlaneseq
        %v1492 = vshrl.u32 %v1491, 7
        %v1493 = vsub.s32 %v1490, %v1492
        %v1494 = vrot.slane %v1487, %v1493
        %v1495 = vcombine.low %v1486, %v1494
        %v1497 = vunpack.c.l.s4 1934713408
        %v1498 = vunpack.c.0.s8 %v1497
        %v1499 = vlaneseq
        %v1500 = vshrl.u32 %v1499, 7
        %v1501 = vsub.s32 %v1498, %v1500
        %v1502 = vrot.slane %v1495, %v1501
        %v1503 = vcombine.high %v1502, 0
        %v1506 = vpack.i.b16 %v1502, %v1477
        %v1507 = vshrl.u32 %v1477, 16
        %v1508 = vshrl.u32 %v1502, 16
        %v1509 = vpack.i.b16 %v1508, %v1507
        %v1512 = vpack.i.b16 %v1503, %v1478
        %v1513 = vshrl.u32 %v1478, 16
        %v1514 = vshrl.u32 %v1503, 16
        %v1515 = vpack.i.b16 %v1514, %v1513
        %vm1516 = vcmask 64512
        %v1518 = vsel %vm1516, %v1088, 0
        %vm1520 = vcmask 1043456
        %v1522 = vsel %vm1520, %v1506, 0
        %1524 = vmatprep.subr.bf16.mxu0 0
        %1525 = vmatpush1.bf16.msra.mxu0 0
        %1526 = vmatprep.subr.bf16.mxu0 0
        %1527 = vmatpush1.bf16.msra.mxu0 0
        %1528 = vmatprep.subr.bf16.mxu0 0
        %1529 = vmatpush1.bf16.msra.mxu0 0
        %1530 = vmatprep.subr.bf16.mxu0 0
        %1531 = vmatpush1.bf16.msra.mxu0 0
        %1532 = vmatprep.subr.bf16.mxu0 0
        %1533 = vmatpush1.bf16.msra.mxu0 0
        %1534 = vmatprep.subr.bf16.mxu0 0
        %1535 = vmatpush1.bf16.msra.mxu0 0
        %1536 = vmatprep.subr.bf16.mxu0 0
        %1537 = vmatpush1.bf16.msra.mxu0 0
        %1538 = vmatprep.subr.bf16.mxu0 0
        %1539 = vmatpush1.bf16.msra.mxu0 %v1522
        %1540 = vmatprep.subr.bf16.mxu0 0
        %1541 = vmatpush2.bf16.msra.mxu0 0
        %1542 = vmatprep.subr.bf16.mxu0 0
        %1543 = vmatpush2.bf16.msra.mxu0 0
        %1544 = vmatprep.subr.bf16.mxu0 0
        %1545 = vmatpush2.bf16.msra.mxu0 0
        %1546 = vmatprep.subr.bf16.mxu0 0
        %1547 = vmatpush2.bf16.msra.mxu0 0
        %1548 = vmatprep.subr.bf16.mxu0 0
        %1549 = vmatpush2.bf16.msra.mxu0 0
        %1550 = vmatprep.subr.bf16.mxu0 0
        %1551 = vmatpush2.bf16.msra.mxu0 0
        %1552 = vmatprep.subr.bf16.mxu0 0
        %1553 = vmatpush2.bf16.msra.mxu0 0
        %1554 = vmatprep.subr.bf16.mxu0 0
        %1555 = vmatpush2.bf16.msra.mxu0 0
        %1556 = vmatprep.mubr.bf16.mxu0 0
        %1557 = vmatmul.mubr.bf16.gmra.mxu0 %v1518
        %v1558 = vpop.f32.mrf.mxu0
        %v1559 = vadd.f32 %v692, %v1558
        %v1560 = vpop.f32.mrf.mxu0
        %v1561 = vpop.f32.mrf.mxu0
        %v1562 = vpop.f32.mrf.mxu0
        %1563 = vdwg.mxu0
        %v1565 = vsel %vm1516, %v1091, 0
        %v1568 = vsel %vm1520, %v1509, 0
        %1570 = vmatprep.subr.bf16.mxu0 0
        %1571 = vmatpush1.bf16.msra.mxu0 0
        %1572 = vmatprep.subr.bf16.mxu0 0
        %1573 = vmatpush1.bf16.msra.mxu0 0
        %1574 = vmatprep.subr.bf16.mxu0 0
        %1575 = vmatpush1.bf16.msra.mxu0 0
        %1576 = vmatprep.subr.bf16.mxu0 0
        %1577 = vmatpush1.bf16.msra.mxu0 0
        %1578 = vmatprep.subr.bf16.mxu0 0
        %1579 = vmatpush1.bf16.msra.mxu0 0
        %1580 = vmatprep.subr.bf16.mxu0 0
        %1581 = vmatpush1.bf16.msra.mxu0 0
        %1582 = vmatprep.subr.bf16.mxu0 0
        %1583 = vmatpush1.bf16.msra.mxu0 0
        %1584 = vmatprep.subr.bf16.mxu0 0
        %1585 = vmatpush1.bf16.msra.mxu0 %v1568
        %1586 = vmatprep.subr.bf16.mxu0 0
        %1587 = vmatpush2.bf16.msra.mxu0 0
        %1588 = vmatprep.subr.bf16.mxu0 0
        %1589 = vmatpush2.bf16.msra.mxu0 0
        %1590 = vmatprep.subr.bf16.mxu0 0
        %1591 = vmatpush2.bf16.msra.mxu0 0
        %1592 = vmatprep.subr.bf16.mxu0 0
        %1593 = vmatpush2.bf16.msra.mxu0 0
        %1594 = vmatprep.subr.bf16.mxu0 0
        %1595 = vmatpush2.bf16.msra.mxu0 0
        %1596 = vmatprep.subr.bf16.mxu0 0
        %1597 = vmatpush2.bf16.msra.mxu0 0
        %1598 = vmatprep.subr.bf16.mxu0 0
        %1599 = vmatpush2.bf16.msra.mxu0 0
        %1600 = vmatprep.subr.bf16.mxu0 0
        %1601 = vmatpush2.bf16.msra.mxu0 0
        %1602 = vmatprep.mubr.bf16.mxu0 0
        %1603 = vmatmul.mubr.bf16.gmra.mxu0 %v1565
        %v1604 = vpop.f32.mrf.mxu0
        %v1605 = vadd.f32 %v692, %v1604
        %v1606 = vpop.f32.mrf.mxu0
        %v1607 = vpop.f32.mrf.mxu0
        %v1608 = vpop.f32.mrf.mxu0
        %1609 = vdwg.mxu0
        %v1611 = vsel %vm1516, %v1094, 0
        %v1614 = vsel %vm1520, %v1512, 0
        %1616 = vmatprep.subr.bf16.mxu0 0
        %1617 = vmatpush1.bf16.msra.mxu0 0
        %1618 = vmatprep.subr.bf16.mxu0 0
        %1619 = vmatpush1.bf16.msra.mxu0 0
        %1620 = vmatprep.subr.bf16.mxu0 0
        %1621 = vmatpush1.bf16.msra.mxu0 0
        %1622 = vmatprep.subr.bf16.mxu0 0
        %1623 = vmatpush1.bf16.msra.mxu0 0
        %1624 = vmatprep.subr.bf16.mxu0 0
        %1625 = vmatpush1.bf16.msra.mxu0 0
        %1626 = vmatprep.subr.bf16.mxu0 0
        %1627 = vmatpush1.bf16.msra.mxu0 0
        %1628 = vmatprep.subr.bf16.mxu0 0
        %1629 = vmatpush1.bf16.msra.mxu0 0
        %1630 = vmatprep.subr.bf16.mxu0 0
        %1631 = vmatpush1.bf16.msra.mxu0 %v1614
        %1632 = vmatprep.subr.bf16.mxu0 0
        %1633 = vmatpush2.bf16.msra.mxu0 0
        %1634 = vmatprep.subr.bf16.mxu0 0
        %1635 = vmatpush2.bf16.msra.mxu0 0
        %1636 = vmatprep.subr.bf16.mxu0 0
        %1637 = vmatpush2.bf16.msra.mxu0 0
        %1638 = vmatprep.subr.bf16.mxu0 0
        %1639 = vmatpush2.bf16.msra.mxu0 0
        %1640 = vmatprep.subr.bf16.mxu0 0
        %1641 = vmatpush2.bf16.msra.mxu0 0
        %1642 = vmatprep.subr.bf16.mxu0 0
        %1643 = vmatpush2.bf16.msra.mxu0 0
        %1644 = vmatprep.subr.bf16.mxu0 0
        %1645 = vmatpush2.bf16.msra.mxu0 0
        %1646 = vmatprep.subr.bf16.mxu0 0
        %1647 = vmatpush2.bf16.msra.mxu0 0
        %1648 = vmatprep.mubr.bf16.mxu0 0
        %1649 = vmatmul.mubr.bf16.gmra.mxu0 %v1611
        %v1650 = vpop.f32.mrf.mxu0
        %v1651 = vadd.f32 %v692, %v1650
        %v1652 = vpop.f32.mrf.mxu0
        %v1653 = vpop.f32.mrf.mxu0
        %v1654 = vpop.f32.mrf.mxu0
        %1655 = vdwg.mxu0
        %v1657 = vsel %vm1516, %v1097, 0
        %v1660 = vsel %vm1520, %v1515, 0
        %1662 = vmatprep.subr.bf16.mxu0 0
        %1663 = vmatpush1.bf16.msra.mxu0 0
        %1664 = vmatprep.subr.bf16.mxu0 0
        %1665 = vmatpush1.bf16.msra.mxu0 0
        %1666 = vmatprep.subr.bf16.mxu0 0
        %1667 = vmatpush1.bf16.msra.mxu0 0
        %1668 = vmatprep.subr.bf16.mxu0 0
        %1669 = vmatpush1.bf16.msra.mxu0 0
        %1670 = vmatprep.subr.bf16.mxu0 0
        %1671 = vmatpush1.bf16.msra.mxu0 0
        %1672 = vmatprep.subr.bf16.mxu0 0
        %1673 = vmatpush1.bf16.msra.mxu0 0
        %1674 = vmatprep.subr.bf16.mxu0 0
        %1675 = vmatpush1.bf16.msra.mxu0 0
        %1676 = vmatprep.subr.bf16.mxu0 0
        %1677 = vmatpush1.bf16.msra.mxu0 %v1660
        %1678 = vmatprep.subr.bf16.mxu0 0
        %1679 = vmatpush2.bf16.msra.mxu0 0
        %1680 = vmatprep.subr.bf16.mxu0 0
        %1681 = vmatpush2.bf16.msra.mxu0 0
        %1682 = vmatprep.subr.bf16.mxu0 0
        %1683 = vmatpush2.bf16.msra.mxu0 0
        %1684 = vmatprep.subr.bf16.mxu0 0
        %1685 = vmatpush2.bf16.msra.mxu0 0
        %1686 = vmatprep.subr.bf16.mxu0 0
        %1687 = vmatpush2.bf16.msra.mxu0 0
        %1688 = vmatprep.subr.bf16.mxu0 0
        %1689 = vmatpush2.bf16.msra.mxu0 0
        %1690 = vmatprep.subr.bf16.mxu0 0
        %1691 = vmatpush2.bf16.msra.mxu0 0
        %1692 = vmatprep.subr.bf16.mxu0 0
        %1693 = vmatpush2.bf16.msra.mxu0 0
        %1694 = vmatprep.mubr.bf16.mxu0 0
        %1695 = vmatmul.mubr.bf16.gmra.mxu0 %v1657
        %v1696 = vpop.f32.mrf.mxu0
        %v1697 = vadd.f32 %v692, %v1696
        %v1698 = vpop.f32.mrf.mxu0
        %v1699 = vpop.f32.mrf.mxu0
        %v1700 = vpop.f32.mrf.mxu0
        %1701 = vdwg.mxu0
        %v1702 = vsel %vm1516, %v1559, -inf
        %1703 = vmax.xlane.f32.xlu0 %v1702
        %v1704 = vpop.xlane.xlu0 %1703
        %v1705 = vsel %vm1516, %v1605, -inf
        %1706 = vmax.xlane.f32.xlu0 %v1705
        %v1707 = vpop.xlane.xlu0 %1706
        %v1708 = vsel %vm1516, %v1651, -inf
        %1709 = vmax.xlane.f32.xlu0 %v1708
        %v1710 = vpop.xlane.xlu0 %1709
        %v1711 = vsel %vm1516, %v1697, -inf
        %1712 = vmax.xlane.f32.xlu0 %v1711
        %v1713 = vpop.xlane.xlu0 %1712
        %v1714 = vsub.f32 %v1559, %v1704
        %v1715 = vsub.f32 %v1605, %v1707
        %v1716 = vsub.f32 %v1651, %v1710
        %v1717 = vsub.f32 %v1697, %v1713
        %v1718 = vmul.f32 %v1714, 1.442695
        %v1719 = vpow.pop %v1718
        %v1720 = vmul.f32 %v1715, 1.442695
        %v1721 = vpow.pop %v1720
        %v1722 = vmul.f32 %v1716, 1.442695
        %v1723 = vpow.pop %v1722
        %v1724 = vmul.f32 %v1717, 1.442695
        %v1725 = vpow.pop %v1724
        %v1726 = vsel %vm1516, %v1719, 0.0
        %1727 = vadd.xlane.f32.xlu0 %v1726
        %v1728 = vpop.xlane.xlu0 %1727
        %v1729 = vsel %vm1516, %v1721, 0.0
        %1730 = vadd.xlane.f32.xlu0 %v1729
        %v1731 = vpop.xlane.xlu0 %1730
        %v1732 = vsel %vm1516, %v1723, 0.0
        %1733 = vadd.xlane.f32.xlu0 %v1732
        %v1734 = vpop.xlane.xlu0 %1733
        %v1735 = vsel %vm1516, %v1725, 0.0
        %1736 = vadd.xlane.f32.xlu0 %v1735
        %v1737 = vpop.xlane.xlu0 %1736
        %v1738 = vrcp.pop %v1728
        %v1739 = vrcp.pop %v1731
        %v1740 = vrcp.pop %v1734
        %v1741 = vrcp.pop %v1737
        %v1742 = vmul.f32 %v1719, %v1738
        %v1743 = vmul.f32 %v1721, %v1739
        %v1744 = vmul.f32 %v1723, %v1740
        %v1745 = vmul.f32 %v1725, %v1741
        %v1746 = vpack.c.bf16 %v1742, %v1742
        %v1747 = vpack.c.bf16 %v1743, %v1743
        %v1748 = vpack.c.bf16 %v1744, %v1744
        %v1749 = vpack.c.bf16 %v1745, %v1745
        %v1750 = vpack.c.bf16 %v992, %v992
        %v1751 = vpack.c.bf16 %v1016, %v1016
        %v1752 = vpack.c.bf16 %v999, %v999
        %v1753 = vpack.c.bf16 %v1017, %v1017
        %v1754 = vpack.c.bf16 %v1008, %v1008
        %v1755 = vpack.c.bf16 %v1018, %v1018
        %v1756 = vpack.c.bf16 %v1015, %v1015
        %v1757 = vpack.c.bf16 %v1019, %v1019
        %1758 = vxpose.xlu0.c.b16.start [1/8] %v1750, 128
        %1759 = vxpose.xlu0.c.b16.cont [2/8] 0, 128
        %1760 = vxpose.xlu0.c.b16.cont [3/8] 0, 128
        %1761 = vxpose.xlu0.c.b16.cont [4/8] 0, 128
        %1762 = vxpose.xlu0.c.b16.cont [5/8] 0, 128
        %1763 = vxpose.xlu0.c.b16.cont [6/8] 0, 128
        %1764 = vxpose.xlu0.c.b16.cont [7/8] 0, 128
        %1765 = vxpose.xlu0.c.b16.end [8/8] 0, 128
        %v1766 = vpop.trf.xlu0
        %v1767 = vpop.trf.xlu0
        %v1768 = vpop.trf.xlu0
        %v1769 = vpop.trf.xlu0
        %v1770 = vpop.trf.xlu0
        %v1771 = vpop.trf.xlu0
        %v1772 = vpop.trf.xlu0
        %v1773 = vpop.trf.xlu0
        %1774 = vxpose.xlu0.c.b16.start [1/8] %v1751, 128
        %1775 = vxpose.xlu0.c.b16.cont [2/8] 0, 128
        %1776 = vxpose.xlu0.c.b16.cont [3/8] 0, 128
        %1777 = vxpose.xlu0.c.b16.cont [4/8] 0, 128
        %1778 = vxpose.xlu0.c.b16.cont [5/8] 0, 128
        %1779 = vxpose.xlu0.c.b16.cont [6/8] 0, 128
        %1780 = vxpose.xlu0.c.b16.cont [7/8] 0, 128
        %1781 = vxpose.xlu0.c.b16.end [8/8] 0, 128
        %v1782 = vpop.trf.xlu0
        %v1783 = vpop.trf.xlu0
        %v1784 = vpop.trf.xlu0
        %v1785 = vpop.trf.xlu0
        %v1786 = vpop.trf.xlu0
        %v1787 = vpop.trf.xlu0
        %v1788 = vpop.trf.xlu0
        %v1789 = vpop.trf.xlu0
        %1790 = vxpose.xlu0.c.b16.start [1/8] %v1752, 128
        %1791 = vxpose.xlu0.c.b16.cont [2/8] 0, 128
        %1792 = vxpose.xlu0.c.b16.cont [3/8] 0, 128
        %1793 = vxpose.xlu0.c.b16.cont [4/8] 0, 128
        %1794 = vxpose.xlu0.c.b16.cont [5/8] 0, 128
        %1795 = vxpose.xlu0.c.b16.cont [6/8] 0, 128
        %1796 = vxpose.xlu0.c.b16.cont [7/8] 0, 128
        %1797 = vxpose.xlu0.c.b16.end [8/8] 0, 128
        %v1798 = vpop.trf.xlu0
        %v1799 = vpop.trf.xlu0
        %v1800 = vpop.trf.xlu0
        %v1801 = vpop.trf.xlu0
        %v1802 = vpop.trf.xlu0
        %v1803 = vpop.trf.xlu0
        %v1804 = vpop.trf.xlu0
        %v1805 = vpop.trf.xlu0
        %1806 = vxpose.xlu0.c.b16.start [1/8] %v1753, 128
        %1807 = vxpose.xlu0.c.b16.cont [2/8] 0, 128
        %1808 = vxpose.xlu0.c.b16.cont [3/8] 0, 128
        %1809 = vxpose.xlu0.c.b16.cont [4/8] 0, 128
        %1810 = vxpose.xlu0.c.b16.cont [5/8] 0, 128
        %1811 = vxpose.xlu0.c.b16.cont [6/8] 0, 128
        %1812 = vxpose.xlu0.c.b16.cont [7/8] 0, 128
        %1813 = vxpose.xlu0.c.b16.end [8/8] 0, 128
        %v1814 = vpop.trf.xlu0
        %v1815 = vpop.trf.xlu0
        %v1816 = vpop.trf.xlu0
        %v1817 = vpop.trf.xlu0
        %v1818 = vpop.trf.xlu0
        %v1819 = vpop.trf.xlu0
        %v1820 = vpop.trf.xlu0
        %v1821 = vpop.trf.xlu0
        %1822 = vxpose.xlu0.c.b16.start [1/8] %v1754, 128
        %1823 = vxpose.xlu0.c.b16.cont [2/8] 0, 128
        %1824 = vxpose.xlu0.c.b16.cont [3/8] 0, 128
        %1825 = vxpose.xlu0.c.b16.cont [4/8] 0, 128
        %1826 = vxpose.xlu0.c.b16.cont [5/8] 0, 128
        %1827 = vxpose.xlu0.c.b16.cont [6/8] 0, 128
        %1828 = vxpose.xlu0.c.b16.cont [7/8] 0, 128
        %1829 = vxpose.xlu0.c.b16.end [8/8] 0, 128
        %v1830 = vpop.trf.xlu0
        %v1831 = vpop.trf.xlu0
        %v1832 = vpop.trf.xlu0
        %v1833 = vpop.trf.xlu0
        %v1834 = vpop.trf.xlu0
        %v1835 = vpop.trf.xlu0
        %v1836 = vpop.trf.xlu0
        %v1837 = vpop.trf.xlu0
        %1838 = vxpose.xlu0.c.b16.start [1/8] %v1755, 128
        %1839 = vxpose.xlu0.c.b16.cont [2/8] 0, 128
        %1840 = vxpose.xlu0.c.b16.cont [3/8] 0, 128
        %1841 = vxpose.xlu0.c.b16.cont [4/8] 0, 128
        %1842 = vxpose.xlu0.c.b16.cont [5/8] 0, 128
        %1843 = vxpose.xlu0.c.b16.cont [6/8] 0, 128
        %1844 = vxpose.xlu0.c.b16.cont [7/8] 0, 128
        %1845 = vxpose.xlu0.c.b16.end [8/8] 0, 128
        %v1846 = vpop.trf.xlu0
        %v1847 = vpop.trf.xlu0
        %v1848 = vpop.trf.xlu0
        %v1849 = vpop.trf.xlu0
        %v1850 = vpop.trf.xlu0
        %v1851 = vpop.trf.xlu0
        %v1852 = vpop.trf.xlu0
        %v1853 = vpop.trf.xlu0
        %1854 = vxpose.xlu0.c.b16.start [1/8] %v1756, 128
        %1855 = vxpose.xlu0.c.b16.cont [2/8] 0, 128
        %1856 = vxpose.xlu0.c.b16.cont [3/8] 0, 128
        %1857 = vxpose.xlu0.c.b16.cont [4/8] 0, 128
        %1858 = vxpose.xlu0.c.b16.cont [5/8] 0, 128
        %1859 = vxpose.xlu0.c.b16.cont [6/8] 0, 128
        %1860 = vxpose.xlu0.c.b16.cont [7/8] 0, 128
        %1861 = vxpose.xlu0.c.b16.end [8/8] 0, 128
        %v1862 = vpop.trf.xlu0
        %v1863 = vpop.trf.xlu0
        %v1864 = vpop.trf.xlu0
        %v1865 = vpop.trf.xlu0
        %v1866 = vpop.trf.xlu0
        %v1867 = vpop.trf.xlu0
        %v1868 = vpop.trf.xlu0
        %v1869 = vpop.trf.xlu0
        %1870 = vxpose.xlu0.c.b16.start [1/8] %v1757, 128
        %1871 = vxpose.xlu0.c.b16.cont [2/8] 0, 128
        %1872 = vxpose.xlu0.c.b16.cont [3/8] 0, 128
        %1873 = vxpose.xlu0.c.b16.cont [4/8] 0, 128
        %1874 = vxpose.xlu0.c.b16.cont [5/8] 0, 128
        %1875 = vxpose.xlu0.c.b16.cont [6/8] 0, 128
        %1876 = vxpose.xlu0.c.b16.cont [7/8] 0, 128
        %1877 = vxpose.xlu0.c.b16.end [8/8] 0, 128
        %v1878 = vpop.trf.xlu0
        %v1879 = vpop.trf.xlu0
        %v1880 = vpop.trf.xlu0
        %v1881 = vpop.trf.xlu0
        %v1882 = vpop.trf.xlu0
        %v1883 = vpop.trf.xlu0
        %v1884 = vpop.trf.xlu0
        %v1885 = vpop.trf.xlu0
        %v1886 = vcombine.low %v1766, %v1830
        %v1888 = vunpack.c.l.s4 1983009808
        %v1889 = vunpack.c.0.s8 %v1888
        %v1890 = vlaneseq
        %v1891 = vshrl.u32 %v1890, 7
        %v1892 = vsub.s32 %v1889, %v1891
        %v1893 = vrot.slane %v1886, %v1892
        %v1894 = vcombine.low %v1798, %v1862
        %v1896 = vunpack.c.l.s4 1983009808
        %v1897 = vunpack.c.0.s8 %v1896
        %v1898 = vlaneseq
        %v1899 = vshrl.u32 %v1898, 7
        %v1900 = vsub.s32 %v1897, %v1899
        %v1901 = vrot.slane %v1894, %v1900
        %v1902 = vcombine.low %v1893, %v1901
        %v1903 = vcombine.high %v1893, %v1901
        %v1905 = vunpack.c.l.s4 1934713408
        %v1906 = vunpack.c.0.s8 %v1905
        %v1907 = vlaneseq
        %v1908 = vshrl.u32 %v1907, 7
        %v1909 = vsub.s32 %v1906, %v1908
        %v1910 = vrot.slane %v1902, %v1909
        %v1912 = vunpack.c.l.s4 1934713408
        %v1913 = vunpack.c.0.s8 %v1912
        %v1914 = vlaneseq
        %v1915 = vshrl.u32 %v1914, 7
        %v1916 = vsub.s32 %v1913, %v1915
        %v1917 = vrot.slane %v1903, %v1916
        %v1918 = vcombine.high %v1910, 0
        %v1919 = vcombine.high %v1917, 0
        %v1920 = vcombine.low %v1782, %v1846
        %v1922 = vunpack.c.l.s4 1983009808
        %v1923 = vunpack.c.0.s8 %v1922
        %v1924 = vlaneseq
        %v1925 = vshrl.u32 %v1924, 7
        %v1926 = vsub.s32 %v1923, %v1925
        %v1927 = vrot.slane %v1920, %v1926
        %v1928 = vcombine.low %v1814, %v1878
        %v1930 = vunpack.c.l.s4 1983009808
        %v1931 = vunpack.c.0.s8 %v1930
        %v1932 = vlaneseq
        %v1933 = vshrl.u32 %v1932, 7
        %v1934 = vsub.s32 %v1931, %v1933
        %v1935 = vrot.slane %v1928, %v1934
        %v1936 = vcombine.low %v1927, %v1935
        %v1937 = vcombine.high %v1927, %v1935
        %v1939 = vunpack.c.l.s4 1934713408
        %v1940 = vunpack.c.0.s8 %v1939
        %v1941 = vlaneseq
        %v1942 = vshrl.u32 %v1941, 7
        %v1943 = vsub.s32 %v1940, %v1942
        %v1944 = vrot.slane %v1936, %v1943
        %v1946 = vunpack.c.l.s4 1934713408
        %v1947 = vunpack.c.0.s8 %v1946
        %v1948 = vlaneseq
        %v1949 = vshrl.u32 %v1948, 7
        %v1950 = vsub.s32 %v1947, %v1949
        %v1951 = vrot.slane %v1937, %v1950
        %v1952 = vcombine.high %v1944, 0
        %v1953 = vcombine.high %v1951, 0
        %v1956 = vpack.i.b16 %v1944, %v1910
        %v1958 = vshrl.u32 %v1910, 16
        %v1959 = vshrl.u32 %v1944, 16
        %v1960 = vpack.i.b16 %v1959, %v1958
        %v1964 = vpack.i.b16 %v1952, %v1918
        %v1966 = vshrl.u32 %v1918, 16
        %v1967 = vshrl.u32 %v1952, 16
        %v1968 = vpack.i.b16 %v1967, %v1966
        %v1972 = vpack.i.b16 %v1951, %v1917
        %v1974 = vshrl.u32 %v1917, 16
        %v1975 = vshrl.u32 %v1951, 16
        %v1976 = vpack.i.b16 %v1975, %v1974
        %v1980 = vpack.i.b16 %v1953, %v1919
        %v1982 = vshrl.u32 %v1919, 16
        %v1983 = vshrl.u32 %v1953, 16
        %v1984 = vpack.i.b16 %v1983, %v1982
        %1986 = vxpose.xlu0.c.b16.start [1/8] %v1956, 128
        %1987 = vxpose.xlu0.c.b16.cont [2/8] 0, 128
        %1988 = vxpose.xlu0.c.b16.cont [3/8] 0, 128
        %1989 = vxpose.xlu0.c.b16.cont [4/8] 0, 128
        %1990 = vxpose.xlu0.c.b16.cont [5/8] 0, 128
        %1991 = vxpose.xlu0.c.b16.cont [6/8] 0, 128
        %1992 = vxpose.xlu0.c.b16.cont [7/8] 0, 128
        %1993 = vxpose.xlu0.c.b16.end [8/8] 0, 128
        %v1994 = vpop.trf.xlu0
        %v1995 = vpop.trf.xlu0
        %v1996 = vpop.trf.xlu0
        %v1997 = vpop.trf.xlu0
        %v1998 = vpop.trf.xlu0
        %v1999 = vpop.trf.xlu0
        %v2000 = vpop.trf.xlu0
        %v2001 = vpop.trf.xlu0
        %2002 = vxpose.xlu0.c.b16.start [1/8] %v1960, 128
        %2003 = vxpose.xlu0.c.b16.cont [2/8] 0, 128
        %2004 = vxpose.xlu0.c.b16.cont [3/8] 0, 128
        %2005 = vxpose.xlu0.c.b16.cont [4/8] 0, 128
        %2006 = vxpose.xlu0.c.b16.cont [5/8] 0, 128
        %2007 = vxpose.xlu0.c.b16.cont [6/8] 0, 128
        %2008 = vxpose.xlu0.c.b16.cont [7/8] 0, 128
        %2009 = vxpose.xlu0.c.b16.end [8/8] 0, 128
        %v2010 = vpop.trf.xlu0
        %v2011 = vpop.trf.xlu0
        %v2012 = vpop.trf.xlu0
        %v2013 = vpop.trf.xlu0
        %v2014 = vpop.trf.xlu0
        %v2015 = vpop.trf.xlu0
        %v2016 = vpop.trf.xlu0
        %v2017 = vpop.trf.xlu0
        %2018 = vxpose.xlu0.c.b16.start [1/8] %v1964, 128
        %2019 = vxpose.xlu0.c.b16.cont [2/8] 0, 128
        %2020 = vxpose.xlu0.c.b16.cont [3/8] 0, 128
        %2021 = vxpose.xlu0.c.b16.cont [4/8] 0, 128
        %2022 = vxpose.xlu0.c.b16.cont [5/8] 0, 128
        %2023 = vxpose.xlu0.c.b16.cont [6/8] 0, 128
        %2024 = vxpose.xlu0.c.b16.cont [7/8] 0, 128
        %2025 = vxpose.xlu0.c.b16.end [8/8] 0, 128
        %v2026 = vpop.trf.xlu0
        %v2027 = vpop.trf.xlu0
        %v2028 = vpop.trf.xlu0
        %v2029 = vpop.trf.xlu0
        %v2030 = vpop.trf.xlu0
        %v2031 = vpop.trf.xlu0
        %v2032 = vpop.trf.xlu0
        %v2033 = vpop.trf.xlu0
        %2034 = vxpose.xlu0.c.b16.start [1/8] %v1968, 128
        %2035 = vxpose.xlu0.c.b16.cont [2/8] 0, 128
        %2036 = vxpose.xlu0.c.b16.cont [3/8] 0, 128
        %2037 = vxpose.xlu0.c.b16.cont [4/8] 0, 128
        %2038 = vxpose.xlu0.c.b16.cont [5/8] 0, 128
        %2039 = vxpose.xlu0.c.b16.cont [6/8] 0, 128
        %2040 = vxpose.xlu0.c.b16.cont [7/8] 0, 128
        %2041 = vxpose.xlu0.c.b16.end [8/8] 0, 128
        %v2042 = vpop.trf.xlu0
        %v2043 = vpop.trf.xlu0
        %v2044 = vpop.trf.xlu0
        %v2045 = vpop.trf.xlu0
        %v2046 = vpop.trf.xlu0
        %v2047 = vpop.trf.xlu0
        %v2048 = vpop.trf.xlu0
        %v2049 = vpop.trf.xlu0
        %2050 = vxpose.xlu0.c.b16.start [1/8] %v1972, 128
        %2051 = vxpose.xlu0.c.b16.cont [2/8] 0, 128
        %2052 = vxpose.xlu0.c.b16.cont [3/8] 0, 128
        %2053 = vxpose.xlu0.c.b16.cont [4/8] 0, 128
        %2054 = vxpose.xlu0.c.b16.cont [5/8] 0, 128
        %2055 = vxpose.xlu0.c.b16.cont [6/8] 0, 128
        %2056 = vxpose.xlu0.c.b16.cont [7/8] 0, 128
        %2057 = vxpose.xlu0.c.b16.end [8/8] 0, 128
        %v2058 = vpop.trf.xlu0
        %v2059 = vpop.trf.xlu0
        %v2060 = vpop.trf.xlu0
        %v2061 = vpop.trf.xlu0
        %v2062 = vpop.trf.xlu0
        %v2063 = vpop.trf.xlu0
        %v2064 = vpop.trf.xlu0
        %v2065 = vpop.trf.xlu0
        %2066 = vxpose.xlu0.c.b16.start [1/8] %v1976, 128
        %2067 = vxpose.xlu0.c.b16.cont [2/8] 0, 128
        %2068 = vxpose.xlu0.c.b16.cont [3/8] 0, 128
        %2069 = vxpose.xlu0.c.b16.cont [4/8] 0, 128
        %2070 = vxpose.xlu0.c.b16.cont [5/8] 0, 128
        %2071 = vxpose.xlu0.c.b16.cont [6/8] 0, 128
        %2072 = vxpose.xlu0.c.b16.cont [7/8] 0, 128
        %2073 = vxpose.xlu0.c.b16.end [8/8] 0, 128
        %v2074 = vpop.trf.xlu0
        %v2075 = vpop.trf.xlu0
        %v2076 = vpop.trf.xlu0
        %v2077 = vpop.trf.xlu0
        %v2078 = vpop.trf.xlu0
        %v2079 = vpop.trf.xlu0
        %v2080 = vpop.trf.xlu0
        %v2081 = vpop.trf.xlu0
        %2082 = vxpose.xlu0.c.b16.start [1/8] %v1980, 128
        %2083 = vxpose.xlu0.c.b16.cont [2/8] 0, 128
        %2084 = vxpose.xlu0.c.b16.cont [3/8] 0, 128
        %2085 = vxpose.xlu0.c.b16.cont [4/8] 0, 128
        %2086 = vxpose.xlu0.c.b16.cont [5/8] 0, 128
        %2087 = vxpose.xlu0.c.b16.cont [6/8] 0, 128
        %2088 = vxpose.xlu0.c.b16.cont [7/8] 0, 128
        %2089 = vxpose.xlu0.c.b16.end [8/8] 0, 128
        %v2090 = vpop.trf.xlu0
        %v2091 = vpop.trf.xlu0
        %v2092 = vpop.trf.xlu0
        %v2093 = vpop.trf.xlu0
        %v2094 = vpop.trf.xlu0
        %v2095 = vpop.trf.xlu0
        %v2096 = vpop.trf.xlu0
        %v2097 = vpop.trf.xlu0
        %2098 = vxpose.xlu0.c.b16.start [1/8] %v1984, 128
        %2099 = vxpose.xlu0.c.b16.cont [2/8] 0, 128
        %2100 = vxpose.xlu0.c.b16.cont [3/8] 0, 128
        %2101 = vxpose.xlu0.c.b16.cont [4/8] 0, 128
        %2102 = vxpose.xlu0.c.b16.cont [5/8] 0, 128
        %2103 = vxpose.xlu0.c.b16.cont [6/8] 0, 128
        %2104 = vxpose.xlu0.c.b16.cont [7/8] 0, 128
        %2105 = vxpose.xlu0.c.b16.end [8/8] 0, 128
        %v2106 = vpop.trf.xlu0
        %v2107 = vpop.trf.xlu0
        %v2108 = vpop.trf.xlu0
        %v2109 = vpop.trf.xlu0
        %v2110 = vpop.trf.xlu0
        %v2111 = vpop.trf.xlu0
        %v2112 = vpop.trf.xlu0
        %v2113 = vpop.trf.xlu0
        %v2114 = vcombine.low %v1994, %v2058
        %v2116 = vunpack.c.l.s4 1983009808
        %v2117 = vunpack.c.0.s8 %v2116
        %v2118 = vlaneseq
        %v2119 = vshrl.u32 %v2118, 7
        %v2120 = vsub.s32 %v2117, %v2119
        %v2121 = vrot.slane %v2114, %v2120
        %v2122 = vcombine.low %v2026, %v2090
        %v2124 = vunpack.c.l.s4 1983009808
        %v2125 = vunpack.c.0.s8 %v2124
        %v2126 = vlaneseq
        %v2127 = vshrl.u32 %v2126, 7
        %v2128 = vsub.s32 %v2125, %v2127
        %v2129 = vrot.slane %v2122, %v2128
        %v2130 = vcombine.low %v2121, %v2129
        %v2132 = vunpack.c.l.s4 1934713408
        %v2133 = vunpack.c.0.s8 %v2132
        %v2134 = vlaneseq
        %v2135 = vshrl.u32 %v2134, 7
        %v2136 = vsub.s32 %v2133, %v2135
        %v2137 = vrot.slane %v2130, %v2136
        %v2138 = vcombine.high %v2137, 0
        %v2139 = vcombine.low %v2010, %v2074
        %v2141 = vunpack.c.l.s4 1983009808
        %v2142 = vunpack.c.0.s8 %v2141
        %v2143 = vlaneseq
        %v2144 = vshrl.u32 %v2143, 7
        %v2145 = vsub.s32 %v2142, %v2144
        %v2146 = vrot.slane %v2139, %v2145
        %v2147 = vcombine.low %v2042, %v2106
        %v2149 = vunpack.c.l.s4 1983009808
        %v2150 = vunpack.c.0.s8 %v2149
        %v2151 = vlaneseq
        %v2152 = vshrl.u32 %v2151, 7
        %v2153 = vsub.s32 %v2150, %v2152
        %v2154 = vrot.slane %v2147, %v2153
        %v2155 = vcombine.low %v2146, %v2154
        %v2157 = vunpack.c.l.s4 1934713408
        %v2158 = vunpack.c.0.s8 %v2157
        %v2159 = vlaneseq
        %v2160 = vshrl.u32 %v2159, 7
        %v2161 = vsub.s32 %v2158, %v2160
        %v2162 = vrot.slane %v2155, %v2161
        %v2163 = vcombine.high %v2162, 0
        %v2166 = vpack.i.b16 %v2162, %v2137
        %v2167 = vshrl.u32 %v2137, 16
        %v2168 = vshrl.u32 %v2162, 16
        %v2169 = vpack.i.b16 %v2168, %v2167
        %v2172 = vpack.i.b16 %v2163, %v2138
        %v2173 = vshrl.u32 %v2138, 16
        %v2174 = vshrl.u32 %v2163, 16
        %v2175 = vpack.i.b16 %v2174, %v2173
        %v2177 = vsel %vm1516, %v2166, 0
        %v2180 = vsel %vm1516, %v1746, 0
        %2182 = vmatprep.subr.bf16.mxu0 0
        %2183 = vmatpush1.bf16.xpose.msra.mxu0 0
        %2184 = vmatprep.subr.bf16.mxu0 0
        %2185 = vmatpush1.bf16.xpose.msra.mxu0 0
        %2186 = vmatprep.subr.bf16.mxu0 0
        %2187 = vmatpush1.bf16.xpose.msra.mxu0 0
        %2188 = vmatprep.subr.bf16.mxu0 0
        %2189 = vmatpush1.bf16.xpose.msra.mxu0 0
        %2190 = vmatprep.subr.bf16.mxu0 0
        %2191 = vmatpush1.bf16.xpose.msra.mxu0 0
        %2192 = vmatprep.subr.bf16.mxu0 0
        %2193 = vmatpush1.bf16.xpose.msra.mxu0 0
        %2194 = vmatprep.subr.bf16.mxu0 0
        %2195 = vmatpush1.bf16.xpose.msra.mxu0 0
        %2196 = vmatprep.subr.bf16.mxu0 0
        %2197 = vmatpush1.bf16.xpose.msra.mxu0 %v2180
        %2198 = vmatprep.subr.bf16.mxu0 0
        %2199 = vmatpush2.bf16.xpose.msra.mxu0 0
        %2200 = vmatprep.subr.bf16.mxu0 0
        %2201 = vmatpush2.bf16.xpose.msra.mxu0 0
        %2202 = vmatprep.subr.bf16.mxu0 0
        %2203 = vmatpush2.bf16.xpose.msra.mxu0 0
        %2204 = vmatprep.subr.bf16.mxu0 0
        %2205 = vmatpush2.bf16.xpose.msra.mxu0 0
        %2206 = vmatprep.subr.bf16.mxu0 0
        %2207 = vmatpush2.bf16.xpose.msra.mxu0 0
        %2208 = vmatprep.subr.bf16.mxu0 0
        %2209 = vmatpush2.bf16.xpose.msra.mxu0 0
        %2210 = vmatprep.subr.bf16.mxu0 0
        %2211 = vmatpush2.bf16.xpose.msra.mxu0 0
        %2212 = vmatprep.subr.bf16.mxu0 0
        %2213 = vmatpush2.bf16.xpose.msra.mxu0 0
        %2214 = vmatprep.mubr.bf16.mxu0 0
        %2215 = vmatmul.mubr.bf16.gmra.mxu0 %v2177
        %v2216 = vpop.f32.mrf.mxu0
        %v2217 = vadd.f32 0.0, %v2216
        %v2218 = vpop.f32.mrf.mxu0
        %v2219 = vpop.f32.mrf.mxu0
        %v2220 = vpop.f32.mrf.mxu0
        %2221 = vdwg.mxu0
        %v2223 = vsel %vm1516, %v2169, 0
        %v2226 = vsel %vm1516, %v1747, 0
        %2228 = vmatprep.subr.bf16.mxu0 0
        %2229 = vmatpush1.bf16.xpose.msra.mxu0 0
        %2230 = vmatprep.subr.bf16.mxu0 0
        %2231 = vmatpush1.bf16.xpose.msra.mxu0 0
        %2232 = vmatprep.subr.bf16.mxu0 0
        %2233 = vmatpush1.bf16.xpose.msra.mxu0 0
        %2234 = vmatprep.subr.bf16.mxu0 0
        %2235 = vmatpush1.bf16.xpose.msra.mxu0 0
        %2236 = vmatprep.subr.bf16.mxu0 0
        %2237 = vmatpush1.bf16.xpose.msra.mxu0 0
        %2238 = vmatprep.subr.bf16.mxu0 0
        %2239 = vmatpush1.bf16.xpose.msra.mxu0 0
        %2240 = vmatprep.subr.bf16.mxu0 0
        %2241 = vmatpush1.bf16.xpose.msra.mxu0 0
        %2242 = vmatprep.subr.bf16.mxu0 0
        %2243 = vmatpush1.bf16.xpose.msra.mxu0 %v2226
        %2244 = vmatprep.subr.bf16.mxu0 0
        %2245 = vmatpush2.bf16.xpose.msra.mxu0 0
        %2246 = vmatprep.subr.bf16.mxu0 0
        %2247 = vmatpush2.bf16.xpose.msra.mxu0 0
        %2248 = vmatprep.subr.bf16.mxu0 0
        %2249 = vmatpush2.bf16.xpose.msra.mxu0 0
        %2250 = vmatprep.subr.bf16.mxu0 0
        %2251 = vmatpush2.bf16.xpose.msra.mxu0 0
        %2252 = vmatprep.subr.bf16.mxu0 0
        %2253 = vmatpush2.bf16.xpose.msra.mxu0 0
        %2254 = vmatprep.subr.bf16.mxu0 0
        %2255 = vmatpush2.bf16.xpose.msra.mxu0 0
        %2256 = vmatprep.subr.bf16.mxu0 0
        %2257 = vmatpush2.bf16.xpose.msra.mxu0 0
        %2258 = vmatprep.subr.bf16.mxu0 0
        %2259 = vmatpush2.bf16.xpose.msra.mxu0 0
        %2260 = vmatprep.mubr.bf16.mxu0 0
        %2261 = vmatmul.mubr.bf16.gmra.mxu0 %v2223
        %v2262 = vpop.f32.mrf.mxu0
        %v2263 = vadd.f32 0.0, %v2262
        %v2264 = vpop.f32.mrf.mxu0
        %v2265 = vpop.f32.mrf.mxu0
        %v2266 = vpop.f32.mrf.mxu0
        %2267 = vdwg.mxu0
        %v2269 = vsel %vm1516, %v2172, 0
        %v2272 = vsel %vm1516, %v1748, 0
        %2274 = vmatprep.subr.bf16.mxu0 0
        %2275 = vmatpush1.bf16.xpose.msra.mxu0 0
        %2276 = vmatprep.subr.bf16.mxu0 0
        %2277 = vmatpush1.bf16.xpose.msra.mxu0 0
        %2278 = vmatprep.subr.bf16.mxu0 0
        %2279 = vmatpush1.bf16.xpose.msra.mxu0 0
        %2280 = vmatprep.subr.bf16.mxu0 0
        %2281 = vmatpush1.bf16.xpose.msra.mxu0 0
        %2282 = vmatprep.subr.bf16.mxu0 0
        %2283 = vmatpush1.bf16.xpose.msra.mxu0 0
        %2284 = vmatprep.subr.bf16.mxu0 0
        %2285 = vmatpush1.bf16.xpose.msra.mxu0 0
        %2286 = vmatprep.subr.bf16.mxu0 0
        %2287 = vmatpush1.bf16.xpose.msra.mxu0 0
        %2288 = vmatprep.subr.bf16.mxu0 0
        %2289 = vmatpush1.bf16.xpose.msra.mxu0 %v2272
        %2290 = vmatprep.subr.bf16.mxu0 0
        %2291 = vmatpush2.bf16.xpose.msra.mxu0 0
        %2292 = vmatprep.subr.bf16.mxu0 0
        %2293 = vmatpush2.bf16.xpose.msra.mxu0 0
        %2294 = vmatprep.subr.bf16.mxu0 0
        %2295 = vmatpush2.bf16.xpose.msra.mxu0 0
        %2296 = vmatprep.subr.bf16.mxu0 0
        %2297 = vmatpush2.bf16.xpose.msra.mxu0 0
        %2298 = vmatprep.subr.bf16.mxu0 0
        %2299 = vmatpush2.bf16.xpose.msra.mxu0 0
        %2300 = vmatprep.subr.bf16.mxu0 0
        %2301 = vmatpush2.bf16.xpose.msra.mxu0 0
        %2302 = vmatprep.subr.bf16.mxu0 0
        %2303 = vmatpush2.bf16.xpose.msra.mxu0 0
        %2304 = vmatprep.subr.bf16.mxu0 0
        %2305 = vmatpush2.bf16.xpose.msra.mxu0 0
        %2306 = vmatprep.mubr.bf16.mxu0 0
        %2307 = vmatmul.mubr.bf16.gmra.mxu0 %v2269
        %v2308 = vpop.f32.mrf.mxu0
        %v2309 = vadd.f32 0.0, %v2308
        %v2310 = vpop.f32.mrf.mxu0
        %v2311 = vpop.f32.mrf.mxu0
        %v2312 = vpop.f32.mrf.mxu0
        %2313 = vdwg.mxu0
        %v2315 = vsel %vm1516, %v2175, 0
        %v2318 = vsel %vm1516, %v1749, 0
        %2320 = vmatprep.subr.bf16.mxu0 0
        %2321 = vmatpush1.bf16.xpose.msra.mxu0 0
        %2322 = vmatprep.subr.bf16.mxu0 0
        %2323 = vmatpush1.bf16.xpose.msra.mxu0 0
        %2324 = vmatprep.subr.bf16.mxu0 0
        %2325 = vmatpush1.bf16.xpose.msra.mxu0 0
        %2326 = vmatprep.subr.bf16.mxu0 0
        %2327 = vmatpush1.bf16.xpose.msra.mxu0 0
        %2328 = vmatprep.subr.bf16.mxu0 0
        %2329 = vmatpush1.bf16.xpose.msra.mxu0 0
        %2330 = vmatprep.subr.bf16.mxu0 0
        %2331 = vmatpush1.bf16.xpose.msra.mxu0 0
        %2332 = vmatprep.subr.bf16.mxu0 0
        %2333 = vmatpush1.bf16.xpose.msra.mxu0 0
        %2334 = vmatprep.subr.bf16.mxu0 0
        %2335 = vmatpush1.bf16.xpose.msra.mxu0 %v2318
        %2336 = vmatprep.subr.bf16.mxu0 0
        %2337 = vmatpush2.bf16.xpose.msra.mxu0 0
        %2338 = vmatprep.subr.bf16.mxu0 0
        %2339 = vmatpush2.bf16.xpose.msra.mxu0 0
        %2340 = vmatprep.subr.bf16.mxu0 0
        %2341 = vmatpush2.bf16.xpose.msra.mxu0 0
        %2342 = vmatprep.subr.bf16.mxu0 0
        %2343 = vmatpush2.bf16.xpose.msra.mxu0 0
        %2344 = vmatprep.subr.bf16.mxu0 0
        %2345 = vmatpush2.bf16.xpose.msra.mxu0 0
        %2346 = vmatprep.subr.bf16.mxu0 0
        %2347 = vmatpush2.bf16.xpose.msra.mxu0 0
        %2348 = vmatprep.subr.bf16.mxu0 0
        %2349 = vmatpush2.bf16.xpose.msra.mxu0 0
        %2350 = vmatprep.subr.bf16.mxu0 0
        %2351 = vmatpush2.bf16.xpose.msra.mxu0 0
        %2352 = vmatprep.mubr.bf16.mxu0 0
        %2353 = vmatmul.mubr.bf16.gmra.mxu0 %v2315
        %v2354 = vpop.f32.mrf.mxu0
        %v2355 = vadd.f32 0.0, %v2354
        %v2356 = vpop.f32.mrf.mxu0
        %v2357 = vpop.f32.mrf.mxu0
        %v2358 = vpop.f32.mrf.mxu0
        %2359 = vdwg.mxu0
        %2360 = vxpose.xlu0.b32.start [1/16] %v2217, 128
        %2361 = vxpose.xlu0.b32.cont [2/16] 0.0, 128
        %2362 = vxpose.xlu0.b32.cont [3/16] 0.0, 128
        %2363 = vxpose.xlu0.b32.cont [4/16] 0.0, 128
        %2364 = vxpose.xlu0.b32.cont [5/16] 0.0, 128
        %2365 = vxpose.xlu0.b32.cont [6/16] 0.0, 128
        %2366 = vxpose.xlu0.b32.cont [7/16] 0.0, 128
        %2367 = vxpose.xlu0.b32.cont [8/16] 0.0, 128
        %2368 = vxpose.xlu0.b32.cont [9/16] 0.0, 128
        %2369 = vxpose.xlu0.b32.cont [10/16] 0.0, 128
        %2370 = vxpose.xlu0.b32.cont [11/16] 0.0, 128
        %2371 = vxpose.xlu0.b32.cont [12/16] 0.0, 128
        %2372 = vxpose.xlu0.b32.cont [13/16] 0.0, 128
        %2373 = vxpose.xlu0.b32.cont [14/16] 0.0, 128
        %2374 = vxpose.xlu0.b32.cont [15/16] 0.0, 128
        %2375 = vxpose.xlu0.b32.end [16/16] 0.0, 128
        %v2376 = vpop.trf.xlu0
        %v2377 = vpop.trf.xlu0
        %v2378 = vpop.trf.xlu0
        %v2379 = vpop.trf.xlu0
        %v2380 = vpop.trf.xlu0
        %v2381 = vpop.trf.xlu0
        %v2382 = vpop.trf.xlu0
        %v2383 = vpop.trf.xlu0
        %v2384 = vpop.trf.xlu0
        %v2385 = vpop.trf.xlu0
        %v2386 = vpop.trf.xlu0
        %v2387 = vpop.trf.xlu0
        %v2388 = vpop.trf.xlu0
        %v2389 = vpop.trf.xlu0
        %v2390 = vpop.trf.xlu0
        %v2391 = vpop.trf.xlu0
        %2392 = vxpose.xlu0.b32.start [1/16] %v2263, 128
        %2393 = vxpose.xlu0.b32.cont [2/16] 0.0, 128
        %2394 = vxpose.xlu0.b32.cont [3/16] 0.0, 128
        %2395 = vxpose.xlu0.b32.cont [4/16] 0.0, 128
        %2396 = vxpose.xlu0.b32.cont [5/16] 0.0, 128
        %2397 = vxpose.xlu0.b32.cont [6/16] 0.0, 128
        %2398 = vxpose.xlu0.b32.cont [7/16] 0.0, 128
        %2399 = vxpose.xlu0.b32.cont [8/16] 0.0, 128
        %2400 = vxpose.xlu0.b32.cont [9/16] 0.0, 128
        %2401 = vxpose.xlu0.b32.cont [10/16] 0.0, 128
        %2402 = vxpose.xlu0.b32.cont [11/16] 0.0, 128
        %2403 = vxpose.xlu0.b32.cont [12/16] 0.0, 128
        %2404 = vxpose.xlu0.b32.cont [13/16] 0.0, 128
        %2405 = vxpose.xlu0.b32.cont [14/16] 0.0, 128
        %2406 = vxpose.xlu0.b32.cont [15/16] 0.0, 128
        %2407 = vxpose.xlu0.b32.end [16/16] 0.0, 128
        %v2408 = vpop.trf.xlu0
        %v2409 = vpop.trf.xlu0
        %v2410 = vpop.trf.xlu0
        %v2411 = vpop.trf.xlu0
        %v2412 = vpop.trf.xlu0
        %v2413 = vpop.trf.xlu0
        %v2414 = vpop.trf.xlu0
        %v2415 = vpop.trf.xlu0
        %v2416 = vpop.trf.xlu0
        %v2417 = vpop.trf.xlu0
        %v2418 = vpop.trf.xlu0
        %v2419 = vpop.trf.xlu0
        %v2420 = vpop.trf.xlu0
        %v2421 = vpop.trf.xlu0
        %v2422 = vpop.trf.xlu0
        %v2423 = vpop.trf.xlu0
        %2424 = vxpose.xlu0.b32.start [1/16] %v2309, 128
        %2425 = vxpose.xlu0.b32.cont [2/16] 0.0, 128
        %2426 = vxpose.xlu0.b32.cont [3/16] 0.0, 128
        %2427 = vxpose.xlu0.b32.cont [4/16] 0.0, 128
        %2428 = vxpose.xlu0.b32.cont [5/16] 0.0, 128
        %2429 = vxpose.xlu0.b32.cont [6/16] 0.0, 128
        %2430 = vxpose.xlu0.b32.cont [7/16] 0.0, 128
        %2431 = vxpose.xlu0.b32.cont [8/16] 0.0, 128
        %2432 = vxpose.xlu0.b32.cont [9/16] 0.0, 128
        %2433 = vxpose.xlu0.b32.cont [10/16] 0.0, 128
        %2434 = vxpose.xlu0.b32.cont [11/16] 0.0, 128
        %2435 = vxpose.xlu0.b32.cont [12/16] 0.0, 128
        %2436 = vxpose.xlu0.b32.cont [13/16] 0.0, 128
        %2437 = vxpose.xlu0.b32.cont [14/16] 0.0, 128
        %2438 = vxpose.xlu0.b32.cont [15/16] 0.0, 128
        %2439 = vxpose.xlu0.b32.end [16/16] 0.0, 128
        %v2440 = vpop.trf.xlu0
        %v2441 = vpop.trf.xlu0
        %v2442 = vpop.trf.xlu0
        %v2443 = vpop.trf.xlu0
        %v2444 = vpop.trf.xlu0
        %v2445 = vpop.trf.xlu0
        %v2446 = vpop.trf.xlu0
        %v2447 = vpop.trf.xlu0
        %v2448 = vpop.trf.xlu0
        %v2449 = vpop.trf.xlu0
        %v2450 = vpop.trf.xlu0
        %v2451 = vpop.trf.xlu0
        %v2452 = vpop.trf.xlu0
        %v2453 = vpop.trf.xlu0
        %v2454 = vpop.trf.xlu0
        %v2455 = vpop.trf.xlu0
        %2456 = vxpose.xlu0.b32.start [1/16] %v2355, 128
        %2457 = vxpose.xlu0.b32.cont [2/16] 0.0, 128
        %2458 = vxpose.xlu0.b32.cont [3/16] 0.0, 128
        %2459 = vxpose.xlu0.b32.cont [4/16] 0.0, 128
        %2460 = vxpose.xlu0.b32.cont [5/16] 0.0, 128
        %2461 = vxpose.xlu0.b32.cont [6/16] 0.0, 128
        %2462 = vxpose.xlu0.b32.cont [7/16] 0.0, 128
        %2463 = vxpose.xlu0.b32.cont [8/16] 0.0, 128
        %2464 = vxpose.xlu0.b32.cont [9/16] 0.0, 128
        %2465 = vxpose.xlu0.b32.cont [10/16] 0.0, 128
        %2466 = vxpose.xlu0.b32.cont [11/16] 0.0, 128
        %2467 = vxpose.xlu0.b32.cont [12/16] 0.0, 128
        %2468 = vxpose.xlu0.b32.cont [13/16] 0.0, 128
        %2469 = vxpose.xlu0.b32.cont [14/16] 0.0, 128
        %2470 = vxpose.xlu0.b32.cont [15/16] 0.0, 128
        %2471 = vxpose.xlu0.b32.end [16/16] 0.0, 128
        %v2472 = vpop.trf.xlu0
        %v2473 = vpop.trf.xlu0
        %v2474 = vpop.trf.xlu0
        %v2475 = vpop.trf.xlu0
        %v2476 = vpop.trf.xlu0
        %v2477 = vpop.trf.xlu0
        %v2478 = vpop.trf.xlu0
        %v2479 = vpop.trf.xlu0
        %v2480 = vpop.trf.xlu0
        %v2481 = vpop.trf.xlu0
        %v2482 = vpop.trf.xlu0
        %v2483 = vpop.trf.xlu0
        %v2484 = vpop.trf.xlu0
        %v2485 = vpop.trf.xlu0
        %v2486 = vpop.trf.xlu0
        %v2487 = vpop.trf.xlu0
        %v2488 = vcombine.low %v2376, %v2440
        %v2489 = vcombine.high %v2376, %v2440
        %v2491 = vunpack.c.l.s4 1983009808
        %v2492 = vunpack.c.0.s8 %v2491
        %v2493 = vlaneseq
        %v2494 = vshrl.u32 %v2493, 7
        %v2495 = vsub.s32 %v2492, %v2494
        %v2496 = vrot.slane %v2488, %v2495
        %v2498 = vunpack.c.l.s4 1983009808
        %v2499 = vunpack.c.0.s8 %v2498
        %v2500 = vlaneseq
        %v2501 = vshrl.u32 %v2500, 7
        %v2502 = vsub.s32 %v2499, %v2501
        %v2503 = vrot.slane %v2489, %v2502
        %v2504 = vcombine.low %v2408, %v2472
        %v2505 = vcombine.high %v2408, %v2472
        %v2507 = vunpack.c.l.s4 1983009808
        %v2508 = vunpack.c.0.s8 %v2507
        %v2509 = vlaneseq
        %v2510 = vshrl.u32 %v2509, 7
        %v2511 = vsub.s32 %v2508, %v2510
        %v2512 = vrot.slane %v2504, %v2511
        %v2514 = vunpack.c.l.s4 1983009808
        %v2515 = vunpack.c.0.s8 %v2514
        %v2516 = vlaneseq
        %v2517 = vshrl.u32 %v2516, 7
        %v2518 = vsub.s32 %v2515, %v2517
        %v2519 = vrot.slane %v2505, %v2518
        %v2520 = vcombine.low %v2496, %v2512
        %v2521 = vcombine.high %v2496, %v2512
        %v2523 = vunpack.c.l.s4 1934713408
        %v2524 = vunpack.c.0.s8 %v2523
        %v2525 = vlaneseq
        %v2526 = vshrl.u32 %v2525, 7
        %v2527 = vsub.s32 %v2524, %v2526
        %v2528 = vrot.slane %v2520, %v2527
        %v2530 = vunpack.c.l.s4 1934713408
        %v2531 = vunpack.c.0.s8 %v2530
        %v2532 = vlaneseq
        %v2533 = vshrl.u32 %v2532, 7
        %v2534 = vsub.s32 %v2531, %v2533
        %v2535 = vrot.slane %v2521, %v2534
        %v2536 = vcombine.low %v2503, %v2519
        %v2537 = vcombine.high %v2503, %v2519
        %v2539 = vunpack.c.l.s4 1934713408
        %v2540 = vunpack.c.0.s8 %v2539
        %v2541 = vlaneseq
        %v2542 = vshrl.u32 %v2541, 7
        %v2543 = vsub.s32 %v2540, %v2542
        %v2544 = vrot.slane %v2536, %v2543
        %v2546 = vunpack.c.l.s4 1934713408
        %v2547 = vunpack.c.0.s8 %v2546
        %v2548 = vlaneseq
        %v2549 = vshrl.u32 %v2548, 7
        %v2550 = vsub.s32 %v2547, %v2549
        %v2551 = vrot.slane %v2537, %v2550
        %v2552 = vcombine.high %v2528, 0.0
        %v2553 = vcombine.high %v2535, 0.0
        %v2554 = vcombine.high %v2544, 0.0
        %v2555 = vcombine.high %v2551, 0.0
        %v2556 = vcombine.low %v2528, %v2535
        %v2558 = vunpack.c.l.s4 1983009808
        %v2559 = vunpack.c.0.s8 %v2558
        %v2560 = vlaneseq
        %v2561 = vshrl.u32 %v2560, 7
        %v2562 = vsub.s32 %v2559, %v2561
        %v2563 = vrot.slane %v2556, %v2562
        %v2564 = vcombine.low %v2552, %v2553
        %v2566 = vunpack.c.l.s4 1983009808
        %v2567 = vunpack.c.0.s8 %v2566
        %v2568 = vlaneseq
        %v2569 = vshrl.u32 %v2568, 7
        %v2570 = vsub.s32 %v2567, %v2569
        %v2571 = vrot.slane %v2564, %v2570
        %v2572 = vcombine.low %v2544, %v2551
        %v2574 = vunpack.c.l.s4 1983009808
        %v2575 = vunpack.c.0.s8 %v2574
        %v2576 = vlaneseq
        %v2577 = vshrl.u32 %v2576, 7
        %v2578 = vsub.s32 %v2575, %v2577
        %v2579 = vrot.slane %v2572, %v2578
        %v2580 = vcombine.low %v2554, %v2555
        %v2582 = vunpack.c.l.s4 1983009808
        %v2583 = vunpack.c.0.s8 %v2582
        %v2584 = vlaneseq
        %v2585 = vshrl.u32 %v2584, 7
        %v2586 = vsub.s32 %v2583, %v2585
        %v2587 = vrot.slane %v2580, %v2586
        %v2588 = vcombine.low %v2563, %v2571
        %v2589 = vcombine.high %v2563, %v2571
        %v2591 = vunpack.c.l.s4 1934713408
        %v2592 = vunpack.c.0.s8 %v2591
        %v2593 = vlaneseq
        %v2594 = vshrl.u32 %v2593, 7
        %v2595 = vsub.s32 %v2592, %v2594
        %v2596 = vrot.slane %v2588, %v2595
        %v2598 = vunpack.c.l.s4 1934713408
        %v2599 = vunpack.c.0.s8 %v2598
        %v2600 = vlaneseq
        %v2601 = vshrl.u32 %v2600, 7
        %v2602 = vsub.s32 %v2599, %v2601
        %v2603 = vrot.slane %v2589, %v2602
        %v2604 = vcombine.low %v2579, %v2587
        %v2605 = vcombine.high %v2579, %v2587
        %v2607 = vunpack.c.l.s4 1934713408
        %v2608 = vunpack.c.0.s8 %v2607
        %v2609 = vlaneseq
        %v2610 = vshrl.u32 %v2609, 7
        %v2611 = vsub.s32 %v2608, %v2610
        %v2612 = vrot.slane %v2604, %v2611
        %v2614 = vunpack.c.l.s4 1934713408
        %v2615 = vunpack.c.0.s8 %v2614
        %v2616 = vlaneseq
        %v2617 = vshrl.u32 %v2616, 7
        %v2618 = vsub.s32 %v2615, %v2617
        %v2619 = vrot.slane %v2605, %v2618
        %v2620 = vcombine.low %v2596, %v2612
        %v2621 = vcombine.high %v2596, %v2612
        %v2622 = vcombine.low %v2603, %v2619
        %v2623 = vcombine.high %v2603, %v2619
        %2625 = vrot.lane.b32.xlu0 %v2621, 8
        %v2626 = vpop.permute.xlu0 %2625
        %2629 = vrot.lane.b32.xlu0 %v2622, 16
        %v2630 = vpop.permute.xlu0 %2629
        %2633 = vrot.lane.b32.xlu0 %v2623, 24
        %v2634 = vpop.permute.xlu0 %2633
        %v2636 = vsel %vm1516, %v2620, %v2626
        %vm2637 = vcmask 130048
        %v2638 = vsel %vm2637, %v2636, %v2630
        %vm2639 = vcmask 195584
        %v2640 = vsel %vm2639, %v2638, %v2634
        %v2641 = vpack.c.bf16 %v2640, %v2640
        %v2642 = vld [vmem:[%s616] sm:$0xf]
        %v2643 = vld [vmem:[%s616 + $0x4] sm:$0xf]
        %v2644 = vld [vmem:[%s616 + $0x8] sm:$0xf]
        %v2645 = vld [vmem:[%s616 + $0xc] sm:$0xf]
        %v2646 = vlaneseq
        %v2647 = vshrl.u32 %v2646, 7
        %v2648 = vsub.s32 7, %v2647
        %v2649 = vrot.slane %v644, %v2648
        %v2654 = vunpack.c.l.b16 %v2642
        %v2655 = vunpack.c.l.b16 %v2643
        %v2656 = vunpack.c.l.b16 %v2644
        %v2657 = vunpack.c.l.b16 %v2645
        %v2658 = vpack.c.b16 %v2655, %v2654
        %v2659 = vpack.c.b16 %v2657, %v2656
        %v2663 = vsel %vm693, %v2641, 0
        %2665 = vmatprep.subr.bf16.mxu0 0
        %2666 = vmatpush1.bf16.msra.mxu0 0
        %2667 = vmatprep.subr.bf16.mxu0 0
        %2668 = vmatpush1.bf16.msra.mxu0 0
        %2669 = vmatprep.subr.bf16.mxu0 0
        %2670 = vmatpush1.bf16.msra.mxu0 0
        %2671 = vmatprep.subr.bf16.mxu0 0
        %2672 = vmatpush1.bf16.msra.mxu0 0
        %2673 = vmatprep.subr.bf16.mxu0 0
        %2674 = vmatpush1.bf16.msra.mxu0 0
        %2675 = vmatprep.subr.bf16.mxu0 0
        %2676 = vmatpush1.bf16.msra.mxu0 0
        %2677 = vmatprep.subr.bf16.mxu0 0
        %2678 = vmatpush1.bf16.msra.mxu0 %v2659
        %2679 = vmatprep.subr.bf16.mxu0 0
        %2680 = vmatpush1.bf16.msra.mxu0 %v2658
        %2681 = vmatprep.subr.bf16.mxu0 0
        %2682 = vmatpush2.bf16.msra.mxu0 0
        %2683 = vmatprep.subr.bf16.mxu0 0
        %2684 = vmatpush2.bf16.msra.mxu0 0
        %2685 = vmatprep.subr.bf16.mxu0 0
        %2686 = vmatpush2.bf16.msra.mxu0 0
        %2687 = vmatprep.subr.bf16.mxu0 0
        %2688 = vmatpush2.bf16.msra.mxu0 0
        %2689 = vmatprep.subr.bf16.mxu0 0
        %2690 = vmatpush2.bf16.msra.mxu0 0
        %2691 = vmatprep.subr.bf16.mxu0 0
        %2692 = vmatpush2.bf16.msra.mxu0 0
        %2693 = vmatprep.subr.bf16.mxu0 0
        %2694 = vmatpush2.bf16.msra.mxu0 0
        %2695 = vmatprep.subr.bf16.mxu0 0
        %2696 = vmatpush2.bf16.msra.mxu0 0
        %2697 = vmatprep.mubr.bf16.mxu0 0
        %2698 = vmatmul.mubr.bf16.gmra.mxu0 %v2663
        %v2699 = vpop.f32.mrf.mxu0
        %v2700 = vadd.f32 %v2649, %v2699
        %v2701 = vpop.f32.mrf.mxu0
        %v2702 = vpop.f32.mrf.mxu0
        %v2703 = vpop.f32.mrf.mxu0
        %2704 = vdwg.mxu0
        %v2705 = vadd.f32 %v677, %v2700
        %v2706 = vsel %vm693, %v2705, 0.0
        %2707 = vadd.xlane.f32.xlu0 %v2706
        %v2708 = vpop.xlane.xlu0 %2707
        %v2709 = vmul.f32 %v2708, %v697
        %v2710 = vsub.f32 %v2705, %v2709
        %v2711 = vmul.f32 %v2710, %v2710
        %v2712 = vsel %vm693, %v2711, 0.0
        %2713 = vadd.xlane.f32.xlu0 %v2712
        %v2714 = vpop.xlane.xlu0 %2713
        %v2715 = vmul.f32 %v2714, %v697
        %v2716 = vadd.f32 %v2715, 1e-05
        %v2717 = vrsqrt.pop %v2716
        %v2718 = vmul.f32 %v2710, %v2717
        %v2719 = vlaneseq
        %v2720 = vshrl.u32 %v2719, 7
        %v2721 = vsub.s32 2, %v2720
        %v2722 = vrot.slane %v644, %v2721
        %v2723 = vmul.f32 %v2718, %v2722
        %v2724 = vlaneseq
        %v2725 = vshrl.u32 %v2724, 7
        %v2726 = vsub.s32 3, %v2725
        %v2727 = vrot.slane %v644, %v2726
        %v2728 = vadd.f32 %v2723, %v2727
        %v2729 = vpack.c.bf16 %v2728, %v2728
        %v2730 = vld [vmem:[%s621] sm:$0xf]
        %v2731 = vld [vmem:[%s621 + $0x4] sm:$0xf]
        %v2732 = vld [vmem:[%s621 + $0x8] sm:$0xf]
        %v2733 = vld [vmem:[%s621 + $0xc] sm:$0xf]
        %v2734 = vlaneseq
        %v2735 = vshrl.u32 %v2734, 7
        %v2736 = vsub.s32 0, %v2735
        %v2737 = vrot.slane %v645, %v2736
        %v2742 = vunpack.c.l.b16 %v2730
        %v2743 = vunpack.c.l.b16 %v2731
        %v2744 = vunpack.c.l.b16 %v2732
        %v2745 = vunpack.c.l.b16 %v2733
        %v2746 = vpack.c.b16 %v2743, %v2742
        %v2747 = vpack.c.b16 %v2745, %v2744
        %v2751 = vsel %vm693, %v2729, 0
        %2753 = vmatprep.subr.bf16.mxu0 0
        %2754 = vmatpush1.bf16.msra.mxu0 0
        %2755 = vmatprep.subr.bf16.mxu0 0
        %2756 = vmatpush1.bf16.msra.mxu0 0
        %2757 = vmatprep.subr.bf16.mxu0 0
        %2758 = vmatpush1.bf16.msra.mxu0 0
        %2759 = vmatprep.subr.bf16.mxu0 0
        %2760 = vmatpush1.bf16.msra.mxu0 0
        %2761 = vmatprep.subr.bf16.mxu0 0
        %2762 = vmatpush1.bf16.msra.mxu0 0
        %2763 = vmatprep.subr.bf16.mxu0 0
        %2764 = vmatpush1.bf16.msra.mxu0 0
        %2765 = vmatprep.subr.bf16.mxu0 0
        %2766 = vmatpush1.bf16.msra.mxu0 %v2747
        %2767 = vmatprep.subr.bf16.mxu0 0
        %2768 = vmatpush1.bf16.msra.mxu0 %v2746
        %2769 = vmatprep.subr.bf16.mxu0 0
        %2770 = vmatpush2.bf16.msra.mxu0 0
        %2771 = vmatprep.subr.bf16.mxu0 0
        %2772 = vmatpush2.bf16.msra.mxu0 0
        %2773 = vmatprep.subr.bf16.mxu0 0
        %2774 = vmatpush2.bf16.msra.mxu0 0
        %2775 = vmatprep.subr.bf16.mxu0 0
        %2776 = vmatpush2.bf16.msra.mxu0 0
        %2777 = vmatprep.subr.bf16.mxu0 0
        %2778 = vmatpush2.bf16.msra.mxu0 0
        %2779 = vmatprep.subr.bf16.mxu0 0
        %2780 = vmatpush2.bf16.msra.mxu0 0
        %2781 = vmatprep.subr.bf16.mxu0 0
        %2782 = vmatpush2.bf16.msra.mxu0 0
        %2783 = vmatprep.subr.bf16.mxu0 0
        %2784 = vmatpush2.bf16.msra.mxu0 0
        %2785 = vmatprep.mubr.bf16.mxu0 0
        %2786 = vmatmul.mubr.bf16.gmra.mxu0 %v2751
        %v2787 = vpop.f32.mrf.mxu0
        %v2788 = vadd.f32 %v2737, %v2787
        %v2789 = vpop.f32.mrf.mxu0
        %v2790 = vpop.f32.mrf.mxu0
        %v2791 = vpop.f32.mrf.mxu0
        %2792 = vdwg.mxu0
        %2794 = vrot.lane.b32.xlu0 %v2788, 120
        %v2795 = vpop.permute.xlu0 %2794
        %2797 = vrot.lane.b32.xlu0 %v2788, 112
        %v2798 = vpop.permute.xlu0 %2797
        %2800 = vrot.lane.b32.xlu0 %v2788, 104
        %v2801 = vpop.permute.xlu0 %2800
        %v2803 = vcombine.low %v2788, %v2798
        %v2804 = vcombine.high %v2788, %v2798
        %v2806 = vunpack.c.l.s4 1983009808
        %v2807 = vunpack.c.0.s8 %v2806
        %v2808 = vlaneseq
        %v2809 = vshrl.u32 %v2808, 7
        %v2810 = vsub.s32 %v2807, %v2809
        %v2811 = vrot.slane %v2803, %v2810
        %v2813 = vunpack.c.l.s4 1983009808
        %v2814 = vunpack.c.0.s8 %v2813
        %v2815 = vlaneseq
        %v2816 = vshrl.u32 %v2815, 7
        %v2817 = vsub.s32 %v2814, %v2816
        %v2818 = vrot.slane %v2804, %v2817
        %v2819 = vcombine.low %v2795, %v2801
        %v2820 = vcombine.high %v2795, %v2801
        %v2822 = vunpack.c.l.s4 1983009808
        %v2823 = vunpack.c.0.s8 %v2822
        %v2824 = vlaneseq
        %v2825 = vshrl.u32 %v2824, 7
        %v2826 = vsub.s32 %v2823, %v2825
        %v2827 = vrot.slane %v2819, %v2826
        %v2829 = vunpack.c.l.s4 1983009808
        %v2830 = vunpack.c.0.s8 %v2829
        %v2831 = vlaneseq
        %v2832 = vshrl.u32 %v2831, 7
        %v2833 = vsub.s32 %v2830, %v2832
        %v2834 = vrot.slane %v2820, %v2833
        %v2835 = vcombine.low %v2811, %v2827
        %v2836 = vcombine.high %v2811, %v2827
        %v2838 = vunpack.c.l.s4 1934713408
        %v2839 = vunpack.c.0.s8 %v2838
        %v2840 = vlaneseq
        %v2841 = vshrl.u32 %v2840, 7
        %v2842 = vsub.s32 %v2839, %v2841
        %v2843 = vrot.slane %v2835, %v2842
        %v2845 = vunpack.c.l.s4 1934713408
        %v2846 = vunpack.c.0.s8 %v2845
        %v2847 = vlaneseq
        %v2848 = vshrl.u32 %v2847, 7
        %v2849 = vsub.s32 %v2846, %v2848
        %v2850 = vrot.slane %v2836, %v2849
        %v2851 = vcombine.low %v2818, %v2834
        %v2852 = vcombine.high %v2818, %v2834
        %v2854 = vunpack.c.l.s4 1934713408
        %v2855 = vunpack.c.0.s8 %v2854
        %v2856 = vlaneseq
        %v2857 = vshrl.u32 %v2856, 7
        %v2858 = vsub.s32 %v2855, %v2857
        %v2859 = vrot.slane %v2851, %v2858
        %v2861 = vunpack.c.l.s4 1934713408
        %v2862 = vunpack.c.0.s8 %v2861
        %v2863 = vlaneseq
        %v2864 = vshrl.u32 %v2863, 7
        %v2865 = vsub.s32 %v2862, %v2864
        %v2866 = vrot.slane %v2852, %v2865
        %v2867 = vcombine.high %v2843, 0.0
        %v2868 = vcombine.high %v2850, 0.0
        %v2869 = vcombine.high %v2859, 0.0
        %v2870 = vcombine.high %v2866, 0.0
        %v2871 = vld [vmem:[%s598] sm:$0xf]
        %v2872 = vld [vmem:[%s598 + $0x4] sm:$0xf]
        %v2873 = vld [vmem:[%s626] sm:$0xf]
        %v2874 = vld [vmem:[%s626 + $0x4] sm:$0xf]
        %v2875 = vld [vmem:[%s626 + $0x8] sm:$0xf]
        %v2876 = vld [vmem:[%s626 + $0xc] sm:$0xf]
        %v2877 = vlaneseq
        %v2878 = vshrl.u32 %v2877, 7
        %v2879 = vsub.s32 1, %v2878
        %v2880 = vrot.slane %v645, %v2879
        %v2883 = vunpack.c.l.b16 %v2871
        %v2884 = vunpack.c.l.b16 %v2872
        %v2885 = vpack.c.b16 %v2884, %v2883
        %v2890 = vunpack.c.l.b16 %v2873
        %v2891 = vunpack.c.l.b16 %v2874
        %v2892 = vunpack.c.l.b16 %v2875
        %v2893 = vunpack.c.l.b16 %v2876
        %v2894 = vpack.c.b16 %v2891, %v2890
        %v2895 = vpack.c.b16 %v2893, %v2892
        %v2899 = vsel %vm693, %v2885, 0
        %2901 = vmatprep.subr.bf16.mxu0 0
        %2902 = vmatpush1.bf16.msra.mxu0 0
        %2903 = vmatprep.subr.bf16.mxu0 0
        %2904 = vmatpush1.bf16.msra.mxu0 0
        %2905 = vmatprep.subr.bf16.mxu0 0
        %2906 = vmatpush1.bf16.msra.mxu0 0
        %2907 = vmatprep.subr.bf16.mxu0 0
        %2908 = vmatpush1.bf16.msra.mxu0 0
        %2909 = vmatprep.subr.bf16.mxu0 0
        %2910 = vmatpush1.bf16.msra.mxu0 0
        %2911 = vmatprep.subr.bf16.mxu0 0
        %2912 = vmatpush1.bf16.msra.mxu0 0
        %2913 = vmatprep.subr.bf16.mxu0 0
        %2914 = vmatpush1.bf16.msra.mxu0 %v2895
        %2915 = vmatprep.subr.bf16.mxu0 0
        %2916 = vmatpush1.bf16.msra.mxu0 %v2894
        %2917 = vmatprep.subr.bf16.mxu0 0
        %2918 = vmatpush2.bf16.msra.mxu0 0
        %2919 = vmatprep.subr.bf16.mxu0 0
        %2920 = vmatpush2.bf16.msra.mxu0 0
        %2921 = vmatprep.subr.bf16.mxu0 0
        %2922 = vmatpush2.bf16.msra.mxu0 0
        %2923 = vmatprep.subr.bf16.mxu0 0
        %2924 = vmatpush2.bf16.msra.mxu0 0
        %2925 = vmatprep.subr.bf16.mxu0 0
        %2926 = vmatpush2.bf16.msra.mxu0 0
        %2927 = vmatprep.subr.bf16.mxu0 0
        %2928 = vmatpush2.bf16.msra.mxu0 0
        %2929 = vmatprep.subr.bf16.mxu0 0
        %2930 = vmatpush2.bf16.msra.mxu0 0
        %2931 = vmatprep.subr.bf16.mxu0 0
        %2932 = vmatpush2.bf16.msra.mxu0 0
        %2933 = vmatprep.mubr.bf16.mxu0 0
        %2934 = vmatmul.mubr.bf16.gmra.mxu0 %v2899
        %v2935 = vpop.f32.mrf.mxu0
        %v2936 = vadd.f32 %v2880, %v2935
        %v2937 = vpop.f32.mrf.mxu0
        %v2938 = vpop.f32.mrf.mxu0
        %v2939 = vadd.f32 %v2880, %v2938
        %v2940 = vpop.f32.mrf.mxu0
        %2941 = vdwg.mxu0
        %2944 = vrot.lane.b32.xlu0 %v2936, 120
        %v2945 = vpop.permute.xlu0 %2944
        %2946 = vrot.lane.b32.xlu0 %v2939, 120
        %v2947 = vpop.permute.xlu0 %2946
        %2950 = vrot.lane.b32.xlu0 %v2936, 112
        %v2951 = vpop.permute.xlu0 %2950
        %2952 = vrot.lane.b32.xlu0 %v2939, 112
        %v2953 = vpop.permute.xlu0 %2952
        %2956 = vrot.lane.b32.xlu0 %v2936, 104
        %v2957 = vpop.permute.xlu0 %2956
        %2958 = vrot.lane.b32.xlu0 %v2939, 104
        %v2959 = vpop.permute.xlu0 %2958
        %v2962 = vcombine.low %v2936, %v2951
        %v2963 = vcombine.high %v2936, %v2951
        %v2965 = vunpack.c.l.s4 1983009808
        %v2966 = vunpack.c.0.s8 %v2965
        %v2967 = vlaneseq
        %v2968 = vshrl.u32 %v2967, 7
        %v2969 = vsub.s32 %v2966, %v2968
        %v2970 = vrot.slane %v2962, %v2969
        %v2972 = vunpack.c.l.s4 1983009808
        %v2973 = vunpack.c.0.s8 %v2972
        %v2974 = vlaneseq
        %v2975 = vshrl.u32 %v2974, 7
        %v2976 = vsub.s32 %v2973, %v2975
        %v2977 = vrot.slane %v2963, %v2976
        %v2978 = vcombine.low %v2945, %v2957
        %v2979 = vcombine.high %v2945, %v2957
        %v2981 = vunpack.c.l.s4 1983009808
        %v2982 = vunpack.c.0.s8 %v2981
        %v2983 = vlaneseq
        %v2984 = vshrl.u32 %v2983, 7
        %v2985 = vsub.s32 %v2982, %v2984
        %v2986 = vrot.slane %v2978, %v2985
        %v2988 = vunpack.c.l.s4 1983009808
        %v2989 = vunpack.c.0.s8 %v2988
        %v2990 = vlaneseq
        %v2991 = vshrl.u32 %v2990, 7
        %v2992 = vsub.s32 %v2989, %v2991
        %v2993 = vrot.slane %v2979, %v2992
        %v2994 = vcombine.low %v2970, %v2986
        %v2995 = vcombine.high %v2970, %v2986
        %v2997 = vunpack.c.l.s4 1934713408
        %v2998 = vunpack.c.0.s8 %v2997
        %v2999 = vlaneseq
        %v3000 = vshrl.u32 %v2999, 7
        %v3001 = vsub.s32 %v2998, %v3000
        %v3002 = vrot.slane %v2994, %v3001
        %v3004 = vunpack.c.l.s4 1934713408
        %v3005 = vunpack.c.0.s8 %v3004
        %v3006 = vlaneseq
        %v3007 = vshrl.u32 %v3006, 7
        %v3008 = vsub.s32 %v3005, %v3007
        %v3009 = vrot.slane %v2995, %v3008
        %v3010 = vcombine.low %v2977, %v2993
        %v3011 = vcombine.high %v2977, %v2993
        %v3013 = vunpack.c.l.s4 1934713408
        %v3014 = vunpack.c.0.s8 %v3013
        %v3015 = vlaneseq
        %v3016 = vshrl.u32 %v3015, 7
        %v3017 = vsub.s32 %v3014, %v3016
        %v3018 = vrot.slane %v3010, %v3017
        %v3020 = vunpack.c.l.s4 1934713408
        %v3021 = vunpack.c.0.s8 %v3020
        %v3022 = vlaneseq
        %v3023 = vshrl.u32 %v3022, 7
        %v3024 = vsub.s32 %v3021, %v3023
        %v3025 = vrot.slane %v3011, %v3024
        %v3026 = vcombine.high %v3002, 0.0
        %v3027 = vcombine.high %v3009, 0.0
        %v3028 = vcombine.high %v3018, 0.0
        %v3029 = vcombine.high %v3025, 0.0
        %v3030 = vcombine.low %v2939, %v2953
        %v3031 = vcombine.high %v2939, %v2953
        %v3033 = vunpack.c.l.s4 1983009808
        %v3034 = vunpack.c.0.s8 %v3033
        %v3035 = vlaneseq
        %v3036 = vshrl.u32 %v3035, 7
        %v3037 = vsub.s32 %v3034, %v3036
        %v3038 = vrot.slane %v3030, %v3037
        %v3040 = vunpack.c.l.s4 1983009808
        %v3041 = vunpack.c.0.s8 %v3040
        %v3042 = vlaneseq
        %v3043 = vshrl.u32 %v3042, 7
        %v3044 = vsub.s32 %v3041, %v3043
        %v3045 = vrot.slane %v3031, %v3044
        %v3046 = vcombine.low %v2947, %v2959
        %v3047 = vcombine.high %v2947, %v2959
        %v3049 = vunpack.c.l.s4 1983009808
        %v3050 = vunpack.c.0.s8 %v3049
        %v3051 = vlaneseq
        %v3052 = vshrl.u32 %v3051, 7
        %v3053 = vsub.s32 %v3050, %v3052
        %v3054 = vrot.slane %v3046, %v3053
        %v3056 = vunpack.c.l.s4 1983009808
        %v3057 = vunpack.c.0.s8 %v3056
        %v3058 = vlaneseq
        %v3059 = vshrl.u32 %v3058, 7
        %v3060 = vsub.s32 %v3057, %v3059
        %v3061 = vrot.slane %v3047, %v3060
        %v3062 = vcombine.low %v3038, %v3054
        %v3063 = vcombine.high %v3038, %v3054
        %v3065 = vunpack.c.l.s4 1934713408
        %v3066 = vunpack.c.0.s8 %v3065
        %v3067 = vlaneseq
        %v3068 = vshrl.u32 %v3067, 7
        %v3069 = vsub.s32 %v3066, %v3068
        %v3070 = vrot.slane %v3062, %v3069
        %v3072 = vunpack.c.l.s4 1934713408
        %v3073 = vunpack.c.0.s8 %v3072
        %v3074 = vlaneseq
        %v3075 = vshrl.u32 %v3074, 7
        %v3076 = vsub.s32 %v3073, %v3075
        %v3077 = vrot.slane %v3063, %v3076
        %v3078 = vcombine.low %v3045, %v3061
        %v3079 = vcombine.high %v3045, %v3061
        %v3081 = vunpack.c.l.s4 1934713408
        %v3082 = vunpack.c.0.s8 %v3081
        %v3083 = vlaneseq
        %v3084 = vshrl.u32 %v3083, 7
        %v3085 = vsub.s32 %v3082, %v3084
        %v3086 = vrot.slane %v3078, %v3085
        %v3088 = vunpack.c.l.s4 1934713408
        %v3089 = vunpack.c.0.s8 %v3088
        %v3090 = vlaneseq
        %v3091 = vshrl.u32 %v3090, 7
        %v3092 = vsub.s32 %v3089, %v3091
        %v3093 = vrot.slane %v3079, %v3092
        %v3094 = vcombine.high %v3070, 0.0
        %v3095 = vcombine.high %v3077, 0.0
        %v3096 = vcombine.high %v3086, 0.0
        %v3097 = vcombine.high %v3093, 0.0
        %3098 = vrot.lane.b32.xlu0 %v2936, 96
        %v3099 = vpop.permute.xlu0 %3098
        %3100 = vrot.lane.b32.xlu0 %v2939, 96
        %v3101 = vpop.permute.xlu0 %3100
        %3102 = vrot.lane.b32.xlu0 %v2945, 96
        %v3103 = vpop.permute.xlu0 %3102
        %3104 = vrot.lane.b32.xlu0 %v2947, 96
        %v3105 = vpop.permute.xlu0 %3104
        %3106 = vrot.lane.b32.xlu0 %v2951, 96
        %v3107 = vpop.permute.xlu0 %3106
        %3108 = vrot.lane.b32.xlu0 %v2953, 96
        %v3109 = vpop.permute.xlu0 %3108
        %3110 = vrot.lane.b32.xlu0 %v2957, 96
        %v3111 = vpop.permute.xlu0 %3110
        %3112 = vrot.lane.b32.xlu0 %v2959, 96
        %v3113 = vpop.permute.xlu0 %3112
        %v3122 = vcombine.low %v3099, %v3107
        %v3123 = vcombine.high %v3099, %v3107
        %v3125 = vunpack.c.l.s4 1983009808
        %v3126 = vunpack.c.0.s8 %v3125
        %v3127 = vlaneseq
        %v3128 = vshrl.u32 %v3127, 7
        %v3129 = vsub.s32 %v3126, %v3128
        %v3130 = vrot.slane %v3122, %v3129
        %v3132 = vunpack.c.l.s4 1983009808
        %v3133 = vunpack.c.0.s8 %v3132
        %v3134 = vlaneseq
        %v3135 = vshrl.u32 %v3134, 7
        %v3136 = vsub.s32 %v3133, %v3135
        %v3137 = vrot.slane %v3123, %v3136
        %v3138 = vcombine.low %v3103, %v3111
        %v3139 = vcombine.high %v3103, %v3111
        %v3141 = vunpack.c.l.s4 1983009808
        %v3142 = vunpack.c.0.s8 %v3141
        %v3143 = vlaneseq
        %v3144 = vshrl.u32 %v3143, 7
        %v3145 = vsub.s32 %v3142, %v3144
        %v3146 = vrot.slane %v3138, %v3145
        %v3148 = vunpack.c.l.s4 1983009808
        %v3149 = vunpack.c.0.s8 %v3148
        %v3150 = vlaneseq
        %v3151 = vshrl.u32 %v3150, 7
        %v3152 = vsub.s32 %v3149, %v3151
        %v3153 = vrot.slane %v3139, %v3152
        %v3154 = vcombine.low %v3130, %v3146
        %v3155 = vcombine.high %v3130, %v3146
        %v3157 = vunpack.c.l.s4 1934713408
        %v3158 = vunpack.c.0.s8 %v3157
        %v3159 = vlaneseq
        %v3160 = vshrl.u32 %v3159, 7
        %v3161 = vsub.s32 %v3158, %v3160
        %v3162 = vrot.slane %v3154, %v3161
        %v3164 = vunpack.c.l.s4 1934713408
        %v3165 = vunpack.c.0.s8 %v3164
        %v3166 = vlaneseq
        %v3167 = vshrl.u32 %v3166, 7
        %v3168 = vsub.s32 %v3165, %v3167
        %v3169 = vrot.slane %v3155, %v3168
        %v3170 = vcombine.low %v3137, %v3153
        %v3171 = vcombine.high %v3137, %v3153
        %v3173 = vunpack.c.l.s4 1934713408
        %v3174 = vunpack.c.0.s8 %v3173
        %v3175 = vlaneseq
        %v3176 = vshrl.u32 %v3175, 7
        %v3177 = vsub.s32 %v3174, %v3176
        %v3178 = vrot.slane %v3170, %v3177
        %v3180 = vunpack.c.l.s4 1934713408
        %v3181 = vunpack.c.0.s8 %v3180
        %v3182 = vlaneseq
        %v3183 = vshrl.u32 %v3182, 7
        %v3184 = vsub.s32 %v3181, %v3183
        %v3185 = vrot.slane %v3171, %v3184
        %v3186 = vcombine.high %v3162, 0.0
        %v3187 = vcombine.high %v3169, 0.0
        %v3188 = vcombine.high %v3178, 0.0
        %v3189 = vcombine.high %v3185, 0.0
        %v3190 = vcombine.low %v3101, %v3109
        %v3191 = vcombine.high %v3101, %v3109
        %v3193 = vunpack.c.l.s4 1983009808
        %v3194 = vunpack.c.0.s8 %v3193
        %v3195 = vlaneseq
        %v3196 = vshrl.u32 %v3195, 7
        %v3197 = vsub.s32 %v3194, %v3196
        %v3198 = vrot.slane %v3190, %v3197
        %v3200 = vunpack.c.l.s4 1983009808
        %v3201 = vunpack.c.0.s8 %v3200
        %v3202 = vlaneseq
        %v3203 = vshrl.u32 %v3202, 7
        %v3204 = vsub.s32 %v3201, %v3203
        %v3205 = vrot.slane %v3191, %v3204
        %v3206 = vcombine.low %v3105, %v3113
        %v3207 = vcombine.high %v3105, %v3113
        %v3209 = vunpack.c.l.s4 1983009808
        %v3210 = vunpack.c.0.s8 %v3209
        %v3211 = vlaneseq
        %v3212 = vshrl.u32 %v3211, 7
        %v3213 = vsub.s32 %v3210, %v3212
        %v3214 = vrot.slane %v3206, %v3213
        %v3216 = vunpack.c.l.s4 1983009808
        %v3217 = vunpack.c.0.s8 %v3216
        %v3218 = vlaneseq
        %v3219 = vshrl.u32 %v3218, 7
        %v3220 = vsub.s32 %v3217, %v3219
        %v3221 = vrot.slane %v3207, %v3220
        %v3222 = vcombine.low %v3198, %v3214
        %v3223 = vcombine.high %v3198, %v3214
        %v3225 = vunpack.c.l.s4 1934713408
        %v3226 = vunpack.c.0.s8 %v3225
        %v3227 = vlaneseq
        %v3228 = vshrl.u32 %v3227, 7
        %v3229 = vsub.s32 %v3226, %v3228
        %v3230 = vrot.slane %v3222, %v3229
        %v3232 = vunpack.c.l.s4 1934713408
        %v3233 = vunpack.c.0.s8 %v3232
        %v3234 = vlaneseq
        %v3235 = vshrl.u32 %v3234, 7
        %v3236 = vsub.s32 %v3233, %v3235
        %v3237 = vrot.slane %v3223, %v3236
        %v3238 = vcombine.low %v3205, %v3221
        %v3239 = vcombine.high %v3205, %v3221
        %v3241 = vunpack.c.l.s4 1934713408
        %v3242 = vunpack.c.0.s8 %v3241
        %v3243 = vlaneseq
        %v3244 = vshrl.u32 %v3243, 7
        %v3245 = vsub.s32 %v3242, %v3244
        %v3246 = vrot.slane %v3238, %v3245
        %v3248 = vunpack.c.l.s4 1934713408
        %v3249 = vunpack.c.0.s8 %v3248
        %v3250 = vlaneseq
        %v3251 = vshrl.u32 %v3250, 7
        %v3252 = vsub.s32 %v3249, %v3251
        %v3253 = vrot.slane %v3239, %v3252
        %v3254 = vcombine.high %v3230, 0.0
        %v3255 = vcombine.high %v3237, 0.0
        %v3256 = vcombine.high %v3246, 0.0
        %v3257 = vcombine.high %v3253, 0.0
        %v3258 = vpack.c.bf16 %v2843, %v2843
        %v3259 = vpack.c.bf16 %v2867, %v2867
        %v3260 = vpack.c.bf16 %v2850, %v2850
        %v3261 = vpack.c.bf16 %v2868, %v2868
        %v3262 = vpack.c.bf16 %v2859, %v2859
        %v3263 = vpack.c.bf16 %v2869, %v2869
        %v3264 = vpack.c.bf16 %v2866, %v2866
        %v3265 = vpack.c.bf16 %v2870, %v2870
        %v3266 = vpack.c.bf16 %v3002, %v3002
        %v3267 = vpack.c.bf16 %v3026, %v3026
        %v3268 = vpack.c.bf16 %v3009, %v3009
        %v3269 = vpack.c.bf16 %v3027, %v3027
        %v3270 = vpack.c.bf16 %v3018, %v3018
        %v3271 = vpack.c.bf16 %v3028, %v3028
        %v3272 = vpack.c.bf16 %v3025, %v3025
        %v3273 = vpack.c.bf16 %v3029, %v3029
        %v3274 = vpack.c.bf16 %v3070, %v3070
        %v3275 = vpack.c.bf16 %v3094, %v3094
        %v3276 = vpack.c.bf16 %v3077, %v3077
        %v3277 = vpack.c.bf16 %v3095, %v3095
        %v3278 = vpack.c.bf16 %v3086, %v3086
        %v3279 = vpack.c.bf16 %v3096, %v3096
        %v3280 = vpack.c.bf16 %v3093, %v3093
        %v3281 = vpack.c.bf16 %v3097, %v3097
        %v3282 = vcombine.low %v3258, %v3262
        %v3284 = vunpack.c.l.s4 1983009808
        %v3285 = vunpack.c.0.s8 %v3284
        %v3286 = vlaneseq
        %v3287 = vshrl.u32 %v3286, 7
        %v3288 = vsub.s32 %v3285, %v3287
        %v3289 = vrot.slane %v3282, %v3288
        %v3290 = vcombine.low %v3260, %v3264
        %v3292 = vunpack.c.l.s4 1983009808
        %v3293 = vunpack.c.0.s8 %v3292
        %v3294 = vlaneseq
        %v3295 = vshrl.u32 %v3294, 7
        %v3296 = vsub.s32 %v3293, %v3295
        %v3297 = vrot.slane %v3290, %v3296
        %v3298 = vcombine.low %v3289, %v3297
        %v3300 = vunpack.c.l.s4 1934713408
        %v3301 = vunpack.c.0.s8 %v3300
        %v3302 = vlaneseq
        %v3303 = vshrl.u32 %v3302, 7
        %v3304 = vsub.s32 %v3301, %v3303
        %v3305 = vrot.slane %v3298, %v3304
        %v3306 = vcombine.high %v3305, 0
        %v3307 = vcombine.low %v3259, %v3263
        %v3309 = vunpack.c.l.s4 1983009808
        %v3310 = vunpack.c.0.s8 %v3309
        %v3311 = vlaneseq
        %v3312 = vshrl.u32 %v3311, 7
        %v3313 = vsub.s32 %v3310, %v3312
        %v3314 = vrot.slane %v3307, %v3313
        %v3315 = vcombine.low %v3261, %v3265
        %v3317 = vunpack.c.l.s4 1983009808
        %v3318 = vunpack.c.0.s8 %v3317
        %v3319 = vlaneseq
        %v3320 = vshrl.u32 %v3319, 7
        %v3321 = vsub.s32 %v3318, %v3320
        %v3322 = vrot.slane %v3315, %v3321
        %v3323 = vcombine.low %v3314, %v3322
        %v3325 = vunpack.c.l.s4 1934713408
        %v3326 = vunpack.c.0.s8 %v3325
        %v3327 = vlaneseq
        %v3328 = vshrl.u32 %v3327, 7
        %v3329 = vsub.s32 %v3326, %v3328
        %v3330 = vrot.slane %v3323, %v3329
        %v3331 = vcombine.high %v3330, 0
        %v3334 = vpack.i.b16 %v3330, %v3305
        %v3335 = vshrl.u32 %v3305, 16
        %v3336 = vshrl.u32 %v3330, 16
        %v3337 = vpack.i.b16 %v3336, %v3335
        %v3340 = vpack.i.b16 %v3331, %v3306
        %v3341 = vshrl.u32 %v3306, 16
        %v3342 = vshrl.u32 %v3331, 16
        %v3343 = vpack.i.b16 %v3342, %v3341
        %3344 = vxpose.xlu0.c.b16.start [1/8] %v3266, 128
        %3345 = vxpose.xlu0.c.b16.cont [2/8] 0, 128
        %3346 = vxpose.xlu0.c.b16.cont [3/8] 0, 128
        %3347 = vxpose.xlu0.c.b16.cont [4/8] 0, 128
        %3348 = vxpose.xlu0.c.b16.cont [5/8] 0, 128
        %3349 = vxpose.xlu0.c.b16.cont [6/8] 0, 128
        %3350 = vxpose.xlu0.c.b16.cont [7/8] 0, 128
        %3351 = vxpose.xlu0.c.b16.end [8/8] 0, 128
        %v3352 = vpop.trf.xlu0
        %v3353 = vpop.trf.xlu0
        %v3354 = vpop.trf.xlu0
        %v3355 = vpop.trf.xlu0
        %v3356 = vpop.trf.xlu0
        %v3357 = vpop.trf.xlu0
        %v3358 = vpop.trf.xlu0
        %v3359 = vpop.trf.xlu0
        %3360 = vxpose.xlu0.c.b16.start [1/8] %v3267, 128
        %3361 = vxpose.xlu0.c.b16.cont [2/8] 0, 128
        %3362 = vxpose.xlu0.c.b16.cont [3/8] 0, 128
        %3363 = vxpose.xlu0.c.b16.cont [4/8] 0, 128
        %3364 = vxpose.xlu0.c.b16.cont [5/8] 0, 128
        %3365 = vxpose.xlu0.c.b16.cont [6/8] 0, 128
        %3366 = vxpose.xlu0.c.b16.cont [7/8] 0, 128
        %3367 = vxpose.xlu0.c.b16.end [8/8] 0, 128
        %v3368 = vpop.trf.xlu0
        %v3369 = vpop.trf.xlu0
        %v3370 = vpop.trf.xlu0
        %v3371 = vpop.trf.xlu0
        %v3372 = vpop.trf.xlu0
        %v3373 = vpop.trf.xlu0
        %v3374 = vpop.trf.xlu0
        %v3375 = vpop.trf.xlu0
        %3376 = vxpose.xlu0.c.b16.start [1/8] %v3268, 128
        %3377 = vxpose.xlu0.c.b16.cont [2/8] 0, 128
        %3378 = vxpose.xlu0.c.b16.cont [3/8] 0, 128
        %3379 = vxpose.xlu0.c.b16.cont [4/8] 0, 128
        %3380 = vxpose.xlu0.c.b16.cont [5/8] 0, 128
        %3381 = vxpose.xlu0.c.b16.cont [6/8] 0, 128
        %3382 = vxpose.xlu0.c.b16.cont [7/8] 0, 128
        %3383 = vxpose.xlu0.c.b16.end [8/8] 0, 128
        %v3384 = vpop.trf.xlu0
        %v3385 = vpop.trf.xlu0
        %v3386 = vpop.trf.xlu0
        %v3387 = vpop.trf.xlu0
        %v3388 = vpop.trf.xlu0
        %v3389 = vpop.trf.xlu0
        %v3390 = vpop.trf.xlu0
        %v3391 = vpop.trf.xlu0
        %3392 = vxpose.xlu0.c.b16.start [1/8] %v3269, 128
        %3393 = vxpose.xlu0.c.b16.cont [2/8] 0, 128
        %3394 = vxpose.xlu0.c.b16.cont [3/8] 0, 128
        %3395 = vxpose.xlu0.c.b16.cont [4/8] 0, 128
        %3396 = vxpose.xlu0.c.b16.cont [5/8] 0, 128
        %3397 = vxpose.xlu0.c.b16.cont [6/8] 0, 128
        %3398 = vxpose.xlu0.c.b16.cont [7/8] 0, 128
        %3399 = vxpose.xlu0.c.b16.end [8/8] 0, 128
        %v3400 = vpop.trf.xlu0
        %v3401 = vpop.trf.xlu0
        %v3402 = vpop.trf.xlu0
        %v3403 = vpop.trf.xlu0
        %v3404 = vpop.trf.xlu0
        %v3405 = vpop.trf.xlu0
        %v3406 = vpop.trf.xlu0
        %v3407 = vpop.trf.xlu0
        %3408 = vxpose.xlu0.c.b16.start [1/8] %v3270, 128
        %3409 = vxpose.xlu0.c.b16.cont [2/8] 0, 128
        %3410 = vxpose.xlu0.c.b16.cont [3/8] 0, 128
        %3411 = vxpose.xlu0.c.b16.cont [4/8] 0, 128
        %3412 = vxpose.xlu0.c.b16.cont [5/8] 0, 128
        %3413 = vxpose.xlu0.c.b16.cont [6/8] 0, 128
        %3414 = vxpose.xlu0.c.b16.cont [7/8] 0, 128
        %3415 = vxpose.xlu0.c.b16.end [8/8] 0, 128
        %v3416 = vpop.trf.xlu0
        %v3417 = vpop.trf.xlu0
        %v3418 = vpop.trf.xlu0
        %v3419 = vpop.trf.xlu0
        %v3420 = vpop.trf.xlu0
        %v3421 = vpop.trf.xlu0
        %v3422 = vpop.trf.xlu0
        %v3423 = vpop.trf.xlu0
        %3424 = vxpose.xlu0.c.b16.start [1/8] %v3271, 128
        %3425 = vxpose.xlu0.c.b16.cont [2/8] 0, 128
        %3426 = vxpose.xlu0.c.b16.cont [3/8] 0, 128
        %3427 = vxpose.xlu0.c.b16.cont [4/8] 0, 128
        %3428 = vxpose.xlu0.c.b16.cont [5/8] 0, 128
        %3429 = vxpose.xlu0.c.b16.cont [6/8] 0, 128
        %3430 = vxpose.xlu0.c.b16.cont [7/8] 0, 128
        %3431 = vxpose.xlu0.c.b16.end [8/8] 0, 128
        %v3432 = vpop.trf.xlu0
        %v3433 = vpop.trf.xlu0
        %v3434 = vpop.trf.xlu0
        %v3435 = vpop.trf.xlu0
        %v3436 = vpop.trf.xlu0
        %v3437 = vpop.trf.xlu0
        %v3438 = vpop.trf.xlu0
        %v3439 = vpop.trf.xlu0
        %3440 = vxpose.xlu0.c.b16.start [1/8] %v3272, 128
        %3441 = vxpose.xlu0.c.b16.cont [2/8] 0, 128
        %3442 = vxpose.xlu0.c.b16.cont [3/8] 0, 128
        %3443 = vxpose.xlu0.c.b16.cont [4/8] 0, 128
        %3444 = vxpose.xlu0.c.b16.cont [5/8] 0, 128
        %3445 = vxpose.xlu0.c.b16.cont [6/8] 0, 128
        %3446 = vxpose.xlu0.c.b16.cont [7/8] 0, 128
        %3447 = vxpose.xlu0.c.b16.end [8/8] 0, 128
        %v3448 = vpop.trf.xlu0
        %v3449 = vpop.trf.xlu0
        %v3450 = vpop.trf.xlu0
        %v3451 = vpop.trf.xlu0
        %v3452 = vpop.trf.xlu0
        %v3453 = vpop.trf.xlu0
        %v3454 = vpop.trf.xlu0
        %v3455 = vpop.trf.xlu0
        %3456 = vxpose.xlu0.c.b16.start [1/8] %v3273, 128
        %3457 = vxpose.xlu0.c.b16.cont [2/8] 0, 128
        %3458 = vxpose.xlu0.c.b16.cont [3/8] 0, 128
        %3459 = vxpose.xlu0.c.b16.cont [4/8] 0, 128
        %3460 = vxpose.xlu0.c.b16.cont [5/8] 0, 128
        %3461 = vxpose.xlu0.c.b16.cont [6/8] 0, 128
        %3462 = vxpose.xlu0.c.b16.cont [7/8] 0, 128
        %3463 = vxpose.xlu0.c.b16.end [8/8] 0, 128
        %v3464 = vpop.trf.xlu0
        %v3465 = vpop.trf.xlu0
        %v3466 = vpop.trf.xlu0
        %v3467 = vpop.trf.xlu0
        %v3468 = vpop.trf.xlu0
        %v3469 = vpop.trf.xlu0
        %v3470 = vpop.trf.xlu0
        %v3471 = vpop.trf.xlu0
        %3472 = vxpose.xlu0.c.b16.start [1/8] %v3274, 128
        %3473 = vxpose.xlu0.c.b16.cont [2/8] 0, 128
        %3474 = vxpose.xlu0.c.b16.cont [3/8] 0, 128
        %3475 = vxpose.xlu0.c.b16.cont [4/8] 0, 128
        %3476 = vxpose.xlu0.c.b16.cont [5/8] 0, 128
        %3477 = vxpose.xlu0.c.b16.cont [6/8] 0, 128
        %3478 = vxpose.xlu0.c.b16.cont [7/8] 0, 128
        %3479 = vxpose.xlu0.c.b16.end [8/8] 0, 128
        %v3480 = vpop.trf.xlu0
        %v3481 = vpop.trf.xlu0
        %v3482 = vpop.trf.xlu0
        %v3483 = vpop.trf.xlu0
        %v3484 = vpop.trf.xlu0
        %v3485 = vpop.trf.xlu0
        %v3486 = vpop.trf.xlu0
        %v3487 = vpop.trf.xlu0
        %3488 = vxpose.xlu0.c.b16.start [1/8] %v3275, 128
        %3489 = vxpose.xlu0.c.b16.cont [2/8] 0, 128
        %3490 = vxpose.xlu0.c.b16.cont [3/8] 0, 128
        %3491 = vxpose.xlu0.c.b16.cont [4/8] 0, 128
        %3492 = vxpose.xlu0.c.b16.cont [5/8] 0, 128
        %3493 = vxpose.xlu0.c.b16.cont [6/8] 0, 128
        %3494 = vxpose.xlu0.c.b16.cont [7/8] 0, 128
        %3495 = vxpose.xlu0.c.b16.end [8/8] 0, 128
        %v3496 = vpop.trf.xlu0
        %v3497 = vpop.trf.xlu0
        %v3498 = vpop.trf.xlu0
        %v3499 = vpop.trf.xlu0
        %v3500 = vpop.trf.xlu0
        %v3501 = vpop.trf.xlu0
        %v3502 = vpop.trf.xlu0
        %v3503 = vpop.trf.xlu0
        %3504 = vxpose.xlu0.c.b16.start [1/8] %v3276, 128
        %3505 = vxpose.xlu0.c.b16.cont [2/8] 0, 128
        %3506 = vxpose.xlu0.c.b16.cont [3/8] 0, 128
        %3507 = vxpose.xlu0.c.b16.cont [4/8] 0, 128
        %3508 = vxpose.xlu0.c.b16.cont [5/8] 0, 128
        %3509 = vxpose.xlu0.c.b16.cont [6/8] 0, 128
        %3510 = vxpose.xlu0.c.b16.cont [7/8] 0, 128
        %3511 = vxpose.xlu0.c.b16.end [8/8] 0, 128
        %v3512 = vpop.trf.xlu0
        %v3513 = vpop.trf.xlu0
        %v3514 = vpop.trf.xlu0
        %v3515 = vpop.trf.xlu0
        %v3516 = vpop.trf.xlu0
        %v3517 = vpop.trf.xlu0
        %v3518 = vpop.trf.xlu0
        %v3519 = vpop.trf.xlu0
        %3520 = vxpose.xlu0.c.b16.start [1/8] %v3277, 128
        %3521 = vxpose.xlu0.c.b16.cont [2/8] 0, 128
        %3522 = vxpose.xlu0.c.b16.cont [3/8] 0, 128
        %3523 = vxpose.xlu0.c.b16.cont [4/8] 0, 128
        %3524 = vxpose.xlu0.c.b16.cont [5/8] 0, 128
        %3525 = vxpose.xlu0.c.b16.cont [6/8] 0, 128
        %3526 = vxpose.xlu0.c.b16.cont [7/8] 0, 128
        %3527 = vxpose.xlu0.c.b16.end [8/8] 0, 128
        %v3528 = vpop.trf.xlu0
        %v3529 = vpop.trf.xlu0
        %v3530 = vpop.trf.xlu0
        %v3531 = vpop.trf.xlu0
        %v3532 = vpop.trf.xlu0
        %v3533 = vpop.trf.xlu0
        %v3534 = vpop.trf.xlu0
        %v3535 = vpop.trf.xlu0
        %3536 = vxpose.xlu0.c.b16.start [1/8] %v3278, 128
        %3537 = vxpose.xlu0.c.b16.cont [2/8] 0, 128
        %3538 = vxpose.xlu0.c.b16.cont [3/8] 0, 128
        %3539 = vxpose.xlu0.c.b16.cont [4/8] 0, 128
        %3540 = vxpose.xlu0.c.b16.cont [5/8] 0, 128
        %3541 = vxpose.xlu0.c.b16.cont [6/8] 0, 128
        %3542 = vxpose.xlu0.c.b16.cont [7/8] 0, 128
        %3543 = vxpose.xlu0.c.b16.end [8/8] 0, 128
        %v3544 = vpop.trf.xlu0
        %v3545 = vpop.trf.xlu0
        %v3546 = vpop.trf.xlu0
        %v3547 = vpop.trf.xlu0
        %v3548 = vpop.trf.xlu0
        %v3549 = vpop.trf.xlu0
        %v3550 = vpop.trf.xlu0
        %v3551 = vpop.trf.xlu0
        %3552 = vxpose.xlu0.c.b16.start [1/8] %v3279, 128
        %3553 = vxpose.xlu0.c.b16.cont [2/8] 0, 128
        %3554 = vxpose.xlu0.c.b16.cont [3/8] 0, 128
        %3555 = vxpose.xlu0.c.b16.cont [4/8] 0, 128
        %3556 = vxpose.xlu0.c.b16.cont [5/8] 0, 128
        %3557 = vxpose.xlu0.c.b16.cont [6/8] 0, 128
        %3558 = vxpose.xlu0.c.b16.cont [7/8] 0, 128
        %3559 = vxpose.xlu0.c.b16.end [8/8] 0, 128
        %v3560 = vpop.trf.xlu0
        %v3561 = vpop.trf.xlu0
        %v3562 = vpop.trf.xlu0
        %v3563 = vpop.trf.xlu0
        %v3564 = vpop.trf.xlu0
        %v3565 = vpop.trf.xlu0
        %v3566 = vpop.trf.xlu0
        %v3567 = vpop.trf.xlu0
        %3568 = vxpose.xlu0.c.b16.start [1/8] %v3280, 128
        %3569 = vxpose.xlu0.c.b16.cont [2/8] 0, 128
        %3570 = vxpose.xlu0.c.b16.cont [3/8] 0, 128
        %3571 = vxpose.xlu0.c.b16.cont [4/8] 0, 128
        %3572 = vxpose.xlu0.c.b16.cont [5/8] 0, 128
        %3573 = vxpose.xlu0.c.b16.cont [6/8] 0, 128
        %3574 = vxpose.xlu0.c.b16.cont [7/8] 0, 128
        %3575 = vxpose.xlu0.c.b16.end [8/8] 0, 128
        %v3576 = vpop.trf.xlu0
        %v3577 = vpop.trf.xlu0
        %v3578 = vpop.trf.xlu0
        %v3579 = vpop.trf.xlu0
        %v3580 = vpop.trf.xlu0
        %v3581 = vpop.trf.xlu0
        %v3582 = vpop.trf.xlu0
        %v3583 = vpop.trf.xlu0
        %3584 = vxpose.xlu0.c.b16.start [1/8] %v3281, 128
        %3585 = vxpose.xlu0.c.b16.cont [2/8] 0, 128
        %3586 = vxpose.xlu0.c.b16.cont [3/8] 0, 128
        %3587 = vxpose.xlu0.c.b16.cont [4/8] 0, 128
        %3588 = vxpose.xlu0.c.b16.cont [5/8] 0, 128
        %3589 = vxpose.xlu0.c.b16.cont [6/8] 0, 128
        %3590 = vxpose.xlu0.c.b16.cont [7/8] 0, 128
        %3591 = vxpose.xlu0.c.b16.end [8/8] 0, 128
        %v3592 = vpop.trf.xlu0
        %v3593 = vpop.trf.xlu0
        %v3594 = vpop.trf.xlu0
        %v3595 = vpop.trf.xlu0
        %v3596 = vpop.trf.xlu0
        %v3597 = vpop.trf.xlu0
        %v3598 = vpop.trf.xlu0
        %v3599 = vpop.trf.xlu0
        %v3600 = vcombine.low %v3352, %v3416
        %v3602 = vunpack.c.l.s4 1983009808
        %v3603 = vunpack.c.0.s8 %v3602
        %v3604 = vlaneseq
        %v3605 = vshrl.u32 %v3604, 7
        %v3606 = vsub.s32 %v3603, %v3605
        %v3607 = vrot.slane %v3600, %v3606
        %v3608 = vcombine.low %v3384, %v3448
        %v3610 = vunpack.c.l.s4 1983009808
        %v3611 = vunpack.c.0.s8 %v3610
        %v3612 = vlaneseq
        %v3613 = vshrl.u32 %v3612, 7
        %v3614 = vsub.s32 %v3611, %v3613
        %v3615 = vrot.slane %v3608, %v3614
        %v3616 = vcombine.low %v3480, %v3544
        %v3618 = vunpack.c.l.s4 1983009808
        %v3619 = vunpack.c.0.s8 %v3618
        %v3620 = vlaneseq
        %v3621 = vshrl.u32 %v3620, 7
        %v3622 = vsub.s32 %v3619, %v3621
        %v3623 = vrot.slane %v3616, %v3622
        %v3624 = vcombine.low %v3512, %v3576
        %v3626 = vunpack.c.l.s4 1983009808
        %v3627 = vunpack.c.0.s8 %v3626
        %v3628 = vlaneseq
        %v3629 = vshrl.u32 %v3628, 7
        %v3630 = vsub.s32 %v3627, %v3629
        %v3631 = vrot.slane %v3624, %v3630
        %v3632 = vcombine.low %v3607, %v3615
        %v3633 = vcombine.high %v3607, %v3615
        %v3635 = vunpack.c.l.s4 1934713408
        %v3636 = vunpack.c.0.s8 %v3635
        %v3637 = vlaneseq
        %v3638 = vshrl.u32 %v3637, 7
        %v3639 = vsub.s32 %v3636, %v3638
        %v3640 = vrot.slane %v3632, %v3639
        %v3642 = vunpack.c.l.s4 1934713408
        %v3643 = vunpack.c.0.s8 %v3642
        %v3644 = vlaneseq
        %v3645 = vshrl.u32 %v3644, 7
        %v3646 = vsub.s32 %v3643, %v3645
        %v3647 = vrot.slane %v3633, %v3646
        %v3648 = vcombine.low %v3623, %v3631
        %v3649 = vcombine.high %v3623, %v3631
        %v3651 = vunpack.c.l.s4 1934713408
        %v3652 = vunpack.c.0.s8 %v3651
        %v3653 = vlaneseq
        %v3654 = vshrl.u32 %v3653, 7
        %v3655 = vsub.s32 %v3652, %v3654
        %v3656 = vrot.slane %v3648, %v3655
        %v3658 = vunpack.c.l.s4 1934713408
        %v3659 = vunpack.c.0.s8 %v3658
        %v3660 = vlaneseq
        %v3661 = vshrl.u32 %v3660, 7
        %v3662 = vsub.s32 %v3659, %v3661
        %v3663 = vrot.slane %v3649, %v3662
        %v3664 = vcombine.low %v3640, %v3656
        %v3665 = vcombine.high %v3640, %v3656
        %v3666 = vcombine.low %v3647, %v3663
        %v3667 = vcombine.high %v3647, %v3663
        %v3668 = vcombine.low %v3368, %v3432
        %v3670 = vunpack.c.l.s4 1983009808
        %v3671 = vunpack.c.0.s8 %v3670
        %v3672 = vlaneseq
        %v3673 = vshrl.u32 %v3672, 7
        %v3674 = vsub.s32 %v3671, %v3673
        %v3675 = vrot.slane %v3668, %v3674
        %v3676 = vcombine.low %v3400, %v3464
        %v3678 = vunpack.c.l.s4 1983009808
        %v3679 = vunpack.c.0.s8 %v3678
        %v3680 = vlaneseq
        %v3681 = vshrl.u32 %v3680, 7
        %v3682 = vsub.s32 %v3679, %v3681
        %v3683 = vrot.slane %v3676, %v3682
        %v3684 = vcombine.low %v3496, %v3560
        %v3686 = vunpack.c.l.s4 1983009808
        %v3687 = vunpack.c.0.s8 %v3686
        %v3688 = vlaneseq
        %v3689 = vshrl.u32 %v3688, 7
        %v3690 = vsub.s32 %v3687, %v3689
        %v3691 = vrot.slane %v3684, %v3690
        %v3692 = vcombine.low %v3528, %v3592
        %v3694 = vunpack.c.l.s4 1983009808
        %v3695 = vunpack.c.0.s8 %v3694
        %v3696 = vlaneseq
        %v3697 = vshrl.u32 %v3696, 7
        %v3698 = vsub.s32 %v3695, %v3697
        %v3699 = vrot.slane %v3692, %v3698
        %v3700 = vcombine.low %v3675, %v3683
        %v3701 = vcombine.high %v3675, %v3683
        %v3703 = vunpack.c.l.s4 1934713408
        %v3704 = vunpack.c.0.s8 %v3703
        %v3705 = vlaneseq
        %v3706 = vshrl.u32 %v3705, 7
        %v3707 = vsub.s32 %v3704, %v3706
        %v3708 = vrot.slane %v3700, %v3707
        %v3710 = vunpack.c.l.s4 1934713408
        %v3711 = vunpack.c.0.s8 %v3710
        %v3712 = vlaneseq
        %v3713 = vshrl.u32 %v3712, 7
        %v3714 = vsub.s32 %v3711, %v3713
        %v3715 = vrot.slane %v3701, %v3714
        %v3716 = vcombine.low %v3691, %v3699
        %v3717 = vcombine.high %v3691, %v3699
        %v3719 = vunpack.c.l.s4 1934713408
        %v3720 = vunpack.c.0.s8 %v3719
        %v3721 = vlaneseq
        %v3722 = vshrl.u32 %v3721, 7
        %v3723 = vsub.s32 %v3720, %v3722
        %v3724 = vrot.slane %v3716, %v3723
        %v3726 = vunpack.c.l.s4 1934713408
        %v3727 = vunpack.c.0.s8 %v3726
        %v3728 = vlaneseq
        %v3729 = vshrl.u32 %v3728, 7
        %v3730 = vsub.s32 %v3727, %v3729
        %v3731 = vrot.slane %v3717, %v3730
        %v3732 = vcombine.low %v3708, %v3724
        %v3733 = vcombine.high %v3708, %v3724
        %v3734 = vcombine.low %v3715, %v3731
        %v3735 = vcombine.high %v3715, %v3731
        %v3738 = vpack.i.b16 %v3732, %v3664
        %v3740 = vshrl.u32 %v3664, 16
        %v3741 = vshrl.u32 %v3732, 16
        %v3742 = vpack.i.b16 %v3741, %v3740
        %v3746 = vpack.i.b16 %v3733, %v3665
        %v3748 = vshrl.u32 %v3665, 16
        %v3749 = vshrl.u32 %v3733, 16
        %v3750 = vpack.i.b16 %v3749, %v3748
        %v3754 = vpack.i.b16 %v3734, %v3666
        %v3756 = vshrl.u32 %v3666, 16
        %v3757 = vshrl.u32 %v3734, 16
        %v3758 = vpack.i.b16 %v3757, %v3756
        %v3762 = vpack.i.b16 %v3735, %v3667
        %v3764 = vshrl.u32 %v3667, 16
        %v3765 = vshrl.u32 %v3735, 16
        %v3766 = vpack.i.b16 %v3765, %v3764
        %3768 = vxpose.xlu0.c.b16.start [1/8] %v3738, 128
        %3769 = vxpose.xlu0.c.b16.cont [2/8] 0, 128
        %3770 = vxpose.xlu0.c.b16.cont [3/8] 0, 128
        %3771 = vxpose.xlu0.c.b16.cont [4/8] 0, 128
        %3772 = vxpose.xlu0.c.b16.cont [5/8] 0, 128
        %3773 = vxpose.xlu0.c.b16.cont [6/8] 0, 128
        %3774 = vxpose.xlu0.c.b16.cont [7/8] 0, 128
        %3775 = vxpose.xlu0.c.b16.end [8/8] 0, 128
        %v3776 = vpop.trf.xlu0
        %v3777 = vpop.trf.xlu0
        %v3778 = vpop.trf.xlu0
        %v3779 = vpop.trf.xlu0
        %v3780 = vpop.trf.xlu0
        %v3781 = vpop.trf.xlu0
        %v3782 = vpop.trf.xlu0
        %v3783 = vpop.trf.xlu0
        %3784 = vxpose.xlu0.c.b16.start [1/8] %v3742, 128
        %3785 = vxpose.xlu0.c.b16.cont [2/8] 0, 128
        %3786 = vxpose.xlu0.c.b16.cont [3/8] 0, 128
        %3787 = vxpose.xlu0.c.b16.cont [4/8] 0, 128
        %3788 = vxpose.xlu0.c.b16.cont [5/8] 0, 128
        %3789 = vxpose.xlu0.c.b16.cont [6/8] 0, 128
        %3790 = vxpose.xlu0.c.b16.cont [7/8] 0, 128
        %3791 = vxpose.xlu0.c.b16.end [8/8] 0, 128
        %v3792 = vpop.trf.xlu0
        %v3793 = vpop.trf.xlu0
        %v3794 = vpop.trf.xlu0
        %v3795 = vpop.trf.xlu0
        %v3796 = vpop.trf.xlu0
        %v3797 = vpop.trf.xlu0
        %v3798 = vpop.trf.xlu0
        %v3799 = vpop.trf.xlu0
        %3800 = vxpose.xlu0.c.b16.start [1/8] %v3746, 128
        %3801 = vxpose.xlu0.c.b16.cont [2/8] 0, 128
        %3802 = vxpose.xlu0.c.b16.cont [3/8] 0, 128
        %3803 = vxpose.xlu0.c.b16.cont [4/8] 0, 128
        %3804 = vxpose.xlu0.c.b16.cont [5/8] 0, 128
        %3805 = vxpose.xlu0.c.b16.cont [6/8] 0, 128
        %3806 = vxpose.xlu0.c.b16.cont [7/8] 0, 128
        %3807 = vxpose.xlu0.c.b16.end [8/8] 0, 128
        %v3808 = vpop.trf.xlu0
        %v3809 = vpop.trf.xlu0
        %v3810 = vpop.trf.xlu0
        %v3811 = vpop.trf.xlu0
        %v3812 = vpop.trf.xlu0
        %v3813 = vpop.trf.xlu0
        %v3814 = vpop.trf.xlu0
        %v3815 = vpop.trf.xlu0
        %3816 = vxpose.xlu0.c.b16.start [1/8] %v3750, 128
        %3817 = vxpose.xlu0.c.b16.cont [2/8] 0, 128
        %3818 = vxpose.xlu0.c.b16.cont [3/8] 0, 128
        %3819 = vxpose.xlu0.c.b16.cont [4/8] 0, 128
        %3820 = vxpose.xlu0.c.b16.cont [5/8] 0, 128
        %3821 = vxpose.xlu0.c.b16.cont [6/8] 0, 128
        %3822 = vxpose.xlu0.c.b16.cont [7/8] 0, 128
        %3823 = vxpose.xlu0.c.b16.end [8/8] 0, 128
        %v3824 = vpop.trf.xlu0
        %v3825 = vpop.trf.xlu0
        %v3826 = vpop.trf.xlu0
        %v3827 = vpop.trf.xlu0
        %v3828 = vpop.trf.xlu0
        %v3829 = vpop.trf.xlu0
        %v3830 = vpop.trf.xlu0
        %v3831 = vpop.trf.xlu0
        %3832 = vxpose.xlu0.c.b16.start [1/8] %v3754, 128
        %3833 = vxpose.xlu0.c.b16.cont [2/8] 0, 128
        %3834 = vxpose.xlu0.c.b16.cont [3/8] 0, 128
        %3835 = vxpose.xlu0.c.b16.cont [4/8] 0, 128
        %3836 = vxpose.xlu0.c.b16.cont [5/8] 0, 128
        %3837 = vxpose.xlu0.c.b16.cont [6/8] 0, 128
        %3838 = vxpose.xlu0.c.b16.cont [7/8] 0, 128
        %3839 = vxpose.xlu0.c.b16.end [8/8] 0, 128
        %v3840 = vpop.trf.xlu0
        %v3841 = vpop.trf.xlu0
        %v3842 = vpop.trf.xlu0
        %v3843 = vpop.trf.xlu0
        %v3844 = vpop.trf.xlu0
        %v3845 = vpop.trf.xlu0
        %v3846 = vpop.trf.xlu0
        %v3847 = vpop.trf.xlu0
        %3848 = vxpose.xlu0.c.b16.start [1/8] %v3758, 128
        %3849 = vxpose.xlu0.c.b16.cont [2/8] 0, 128
        %3850 = vxpose.xlu0.c.b16.cont [3/8] 0, 128
        %3851 = vxpose.xlu0.c.b16.cont [4/8] 0, 128
        %3852 = vxpose.xlu0.c.b16.cont [5/8] 0, 128
        %3853 = vxpose.xlu0.c.b16.cont [6/8] 0, 128
        %3854 = vxpose.xlu0.c.b16.cont [7/8] 0, 128
        %3855 = vxpose.xlu0.c.b16.end [8/8] 0, 128
        %v3856 = vpop.trf.xlu0
        %v3857 = vpop.trf.xlu0
        %v3858 = vpop.trf.xlu0
        %v3859 = vpop.trf.xlu0
        %v3860 = vpop.trf.xlu0
        %v3861 = vpop.trf.xlu0
        %v3862 = vpop.trf.xlu0
        %v3863 = vpop.trf.xlu0
        %3864 = vxpose.xlu0.c.b16.start [1/8] %v3762, 128
        %3865 = vxpose.xlu0.c.b16.cont [2/8] 0, 128
        %3866 = vxpose.xlu0.c.b16.cont [3/8] 0, 128
        %3867 = vxpose.xlu0.c.b16.cont [4/8] 0, 128
        %3868 = vxpose.xlu0.c.b16.cont [5/8] 0, 128
        %3869 = vxpose.xlu0.c.b16.cont [6/8] 0, 128
        %3870 = vxpose.xlu0.c.b16.cont [7/8] 0, 128
        %3871 = vxpose.xlu0.c.b16.end [8/8] 0, 128
        %v3872 = vpop.trf.xlu0
        %v3873 = vpop.trf.xlu0
        %v3874 = vpop.trf.xlu0
        %v3875 = vpop.trf.xlu0
        %v3876 = vpop.trf.xlu0
        %v3877 = vpop.trf.xlu0
        %v3878 = vpop.trf.xlu0
        %v3879 = vpop.trf.xlu0
        %3880 = vxpose.xlu0.c.b16.start [1/8] %v3766, 128
        %3881 = vxpose.xlu0.c.b16.cont [2/8] 0, 128
        %3882 = vxpose.xlu0.c.b16.cont [3/8] 0, 128
        %3883 = vxpose.xlu0.c.b16.cont [4/8] 0, 128
        %3884 = vxpose.xlu0.c.b16.cont [5/8] 0, 128
        %3885 = vxpose.xlu0.c.b16.cont [6/8] 0, 128
        %3886 = vxpose.xlu0.c.b16.cont [7/8] 0, 128
        %3887 = vxpose.xlu0.c.b16.end [8/8] 0, 128
        %v3888 = vpop.trf.xlu0
        %v3889 = vpop.trf.xlu0
        %v3890 = vpop.trf.xlu0
        %v3891 = vpop.trf.xlu0
        %v3892 = vpop.trf.xlu0
        %v3893 = vpop.trf.xlu0
        %v3894 = vpop.trf.xlu0
        %v3895 = vpop.trf.xlu0
        %v3896 = vcombine.low %v3776, %v3840
        %v3898 = vunpack.c.l.s4 1983009808
        %v3899 = vunpack.c.0.s8 %v3898
        %v3900 = vlaneseq
        %v3901 = vshrl.u32 %v3900, 7
        %v3902 = vsub.s32 %v3899, %v3901
        %v3903 = vrot.slane %v3896, %v3902
        %v3904 = vcombine.low %v3808, %v3872
        %v3906 = vunpack.c.l.s4 1983009808
        %v3907 = vunpack.c.0.s8 %v3906
        %v3908 = vlaneseq
        %v3909 = vshrl.u32 %v3908, 7
        %v3910 = vsub.s32 %v3907, %v3909
        %v3911 = vrot.slane %v3904, %v3910
        %v3912 = vcombine.low %v3903, %v3911
        %v3914 = vunpack.c.l.s4 1934713408
        %v3915 = vunpack.c.0.s8 %v3914
        %v3916 = vlaneseq
        %v3917 = vshrl.u32 %v3916, 7
        %v3918 = vsub.s32 %v3915, %v3917
        %v3919 = vrot.slane %v3912, %v3918
        %v3920 = vcombine.high %v3919, 0
        %v3921 = vcombine.low %v3792, %v3856
        %v3923 = vunpack.c.l.s4 1983009808
        %v3924 = vunpack.c.0.s8 %v3923
        %v3925 = vlaneseq
        %v3926 = vshrl.u32 %v3925, 7
        %v3927 = vsub.s32 %v3924, %v3926
        %v3928 = vrot.slane %v3921, %v3927
        %v3929 = vcombine.low %v3824, %v3888
        %v3931 = vunpack.c.l.s4 1983009808
        %v3932 = vunpack.c.0.s8 %v3931
        %v3933 = vlaneseq
        %v3934 = vshrl.u32 %v3933, 7
        %v3935 = vsub.s32 %v3932, %v3934
        %v3936 = vrot.slane %v3929, %v3935
        %v3937 = vcombine.low %v3928, %v3936
        %v3939 = vunpack.c.l.s4 1934713408
        %v3940 = vunpack.c.0.s8 %v3939
        %v3941 = vlaneseq
        %v3942 = vshrl.u32 %v3941, 7
        %v3943 = vsub.s32 %v3940, %v3942
        %v3944 = vrot.slane %v3937, %v3943
        %v3945 = vcombine.high %v3944, 0
        %v3948 = vpack.i.b16 %v3944, %v3919
        %v3949 = vshrl.u32 %v3919, 16
        %v3950 = vshrl.u32 %v3944, 16
        %v3951 = vpack.i.b16 %v3950, %v3949
        %v3954 = vpack.i.b16 %v3945, %v3920
        %v3955 = vshrl.u32 %v3920, 16
        %v3956 = vshrl.u32 %v3945, 16
        %v3957 = vpack.i.b16 %v3956, %v3955
        %v3959 = vsel %vm1516, %v3334, 0
        %v3962 = vsel %vm1520, %v3948, 0
        %3964 = vmatprep.subr.bf16.mxu0 0
        %3965 = vmatpush1.bf16.msra.mxu0 0
        %3966 = vmatprep.subr.bf16.mxu0 0
        %3967 = vmatpush1.bf16.msra.mxu0 0
        %3968 = vmatprep.subr.bf16.mxu0 0
        %3969 = vmatpush1.bf16.msra.mxu0 0
        %3970 = vmatprep.subr.bf16.mxu0 0
        %3971 = vmatpush1.bf16.msra.mxu0 0
        %3972 = vmatprep.subr.bf16.mxu0 0
        %3973 = vmatpush1.bf16.msra.mxu0 0
        %3974 = vmatprep.subr.bf16.mxu0 0
        %3975 = vmatpush1.bf16.msra.mxu0 0
        %3976 = vmatprep.subr.bf16.mxu0 0
        %3977 = vmatpush1.bf16.msra.mxu0 0
        %3978 = vmatprep.subr.bf16.mxu0 0
        %3979 = vmatpush1.bf16.msra.mxu0 %v3962
        %3980 = vmatprep.subr.bf16.mxu0 0
        %3981 = vmatpush2.bf16.msra.mxu0 0
        %3982 = vmatprep.subr.bf16.mxu0 0
        %3983 = vmatpush2.bf16.msra.mxu0 0
        %3984 = vmatprep.subr.bf16.mxu0 0
        %3985 = vmatpush2.bf16.msra.mxu0 0
        %3986 = vmatprep.subr.bf16.mxu0 0
        %3987 = vmatpush2.bf16.msra.mxu0 0
        %3988 = vmatprep.subr.bf16.mxu0 0
        %3989 = vmatpush2.bf16.msra.mxu0 0
        %3990 = vmatprep.subr.bf16.mxu0 0
        %3991 = vmatpush2.bf16.msra.mxu0 0
        %3992 = vmatprep.subr.bf16.mxu0 0
        %3993 = vmatpush2.bf16.msra.mxu0 0
        %3994 = vmatprep.subr.bf16.mxu0 0
        %3995 = vmatpush2.bf16.msra.mxu0 0
        %3996 = vmatprep.mubr.bf16.mxu0 0
        %3997 = vmatmul.mubr.bf16.gmra.mxu0 %v3959
        %v3998 = vpop.f32.mrf.mxu0
        %v3999 = vadd.f32 0.0, %v3998
        %v4000 = vpop.f32.mrf.mxu0
        %v4001 = vpop.f32.mrf.mxu0
        %v4002 = vpop.f32.mrf.mxu0
        %4003 = vdwg.mxu0
        %v4005 = vsel %vm1516, %v3337, 0
        %v4008 = vsel %vm1520, %v3951, 0
        %4010 = vmatprep.subr.bf16.mxu0 0
        %4011 = vmatpush1.bf16.msra.mxu0 0
        %4012 = vmatprep.subr.bf16.mxu0 0
        %4013 = vmatpush1.bf16.msra.mxu0 0
        %4014 = vmatprep.subr.bf16.mxu0 0
        %4015 = vmatpush1.bf16.msra.mxu0 0
        %4016 = vmatprep.subr.bf16.mxu0 0
        %4017 = vmatpush1.bf16.msra.mxu0 0
        %4018 = vmatprep.subr.bf16.mxu0 0
        %4019 = vmatpush1.bf16.msra.mxu0 0
        %4020 = vmatprep.subr.bf16.mxu0 0
        %4021 = vmatpush1.bf16.msra.mxu0 0
        %4022 = vmatprep.subr.bf16.mxu0 0
        %4023 = vmatpush1.bf16.msra.mxu0 0
        %4024 = vmatprep.subr.bf16.mxu0 0
        %4025 = vmatpush1.bf16.msra.mxu0 %v4008
        %4026 = vmatprep.subr.bf16.mxu0 0
        %4027 = vmatpush2.bf16.msra.mxu0 0
        %4028 = vmatprep.subr.bf16.mxu0 0
        %4029 = vmatpush2.bf16.msra.mxu0 0
        %4030 = vmatprep.subr.bf16.mxu0 0
        %4031 = vmatpush2.bf16.msra.mxu0 0
        %4032 = vmatprep.subr.bf16.mxu0 0
        %4033 = vmatpush2.bf16.msra.mxu0 0
        %4034 = vmatprep.subr.bf16.mxu0 0
        %4035 = vmatpush2.bf16.msra.mxu0 0
        %4036 = vmatprep.subr.bf16.mxu0 0
        %4037 = vmatpush2.bf16.msra.mxu0 0
        %4038 = vmatprep.subr.bf16.mxu0 0
        %4039 = vmatpush2.bf16.msra.mxu0 0
        %4040 = vmatprep.subr.bf16.mxu0 0
        %4041 = vmatpush2.bf16.msra.mxu0 0
        %4042 = vmatprep.mubr.bf16.mxu0 0
        %4043 = vmatmul.mubr.bf16.gmra.mxu0 %v4005
        %v4044 = vpop.f32.mrf.mxu0
        %v4045 = vadd.f32 0.0, %v4044
        %v4046 = vpop.f32.mrf.mxu0
        %v4047 = vpop.f32.mrf.mxu0
        %v4048 = vpop.f32.mrf.mxu0
        %4049 = vdwg.mxu0
        %v4051 = vsel %vm1516, %v3340, 0
        %v4054 = vsel %vm1520, %v3954, 0
        %4056 = vmatprep.subr.bf16.mxu0 0
        %4057 = vmatpush1.bf16.msra.mxu0 0
        %4058 = vmatprep.subr.bf16.mxu0 0
        %4059 = vmatpush1.bf16.msra.mxu0 0
        %4060 = vmatprep.subr.bf16.mxu0 0
        %4061 = vmatpush1.bf16.msra.mxu0 0
        %4062 = vmatprep.subr.bf16.mxu0 0
        %4063 = vmatpush1.bf16.msra.mxu0 0
        %4064 = vmatprep.subr.bf16.mxu0 0
        %4065 = vmatpush1.bf16.msra.mxu0 0
        %4066 = vmatprep.subr.bf16.mxu0 0
        %4067 = vmatpush1.bf16.msra.mxu0 0
        %4068 = vmatprep.subr.bf16.mxu0 0
        %4069 = vmatpush1.bf16.msra.mxu0 0
        %4070 = vmatprep.subr.bf16.mxu0 0
        %4071 = vmatpush1.bf16.msra.mxu0 %v4054
        %4072 = vmatprep.subr.bf16.mxu0 0
        %4073 = vmatpush2.bf16.msra.mxu0 0
        %4074 = vmatprep.subr.bf16.mxu0 0
        %4075 = vmatpush2.bf16.msra.mxu0 0
        %4076 = vmatprep.subr.bf16.mxu0 0
        %4077 = vmatpush2.bf16.msra.mxu0 0
        %4078 = vmatprep.subr.bf16.mxu0 0
        %4079 = vmatpush2.bf16.msra.mxu0 0
        %4080 = vmatprep.subr.bf16.mxu0 0
        %4081 = vmatpush2.bf16.msra.mxu0 0
        %4082 = vmatprep.subr.bf16.mxu0 0
        %4083 = vmatpush2.bf16.msra.mxu0 0
        %4084 = vmatprep.subr.bf16.mxu0 0
        %4085 = vmatpush2.bf16.msra.mxu0 0
        %4086 = vmatprep.subr.bf16.mxu0 0
        %4087 = vmatpush2.bf16.msra.mxu0 0
        %4088 = vmatprep.mubr.bf16.mxu0 0
        %4089 = vmatmul.mubr.bf16.gmra.mxu0 %v4051
        %v4090 = vpop.f32.mrf.mxu0
        %v4091 = vadd.f32 0.0, %v4090
        %v4092 = vpop.f32.mrf.mxu0
        %v4093 = vpop.f32.mrf.mxu0
        %v4094 = vpop.f32.mrf.mxu0
        %4095 = vdwg.mxu0
        %v4097 = vsel %vm1516, %v3343, 0
        %v4100 = vsel %vm1520, %v3957, 0
        %4102 = vmatprep.subr.bf16.mxu0 0
        %4103 = vmatpush1.bf16.msra.mxu0 0
        %4104 = vmatprep.subr.bf16.mxu0 0
        %4105 = vmatpush1.bf16.msra.mxu0 0
        %4106 = vmatprep.subr.bf16.mxu0 0
        %4107 = vmatpush1.bf16.msra.mxu0 0
        %4108 = vmatprep.subr.bf16.mxu0 0
        %4109 = vmatpush1.bf16.msra.mxu0 0
        %4110 = vmatprep.subr.bf16.mxu0 0
        %4111 = vmatpush1.bf16.msra.mxu0 0
        %4112 = vmatprep.subr.bf16.mxu0 0
        %4113 = vmatpush1.bf16.msra.mxu0 0
        %4114 = vmatprep.subr.bf16.mxu0 0
        %4115 = vmatpush1.bf16.msra.mxu0 0
        %4116 = vmatprep.subr.bf16.mxu0 0
        %4117 = vmatpush1.bf16.msra.mxu0 %v4100
        %4118 = vmatprep.subr.bf16.mxu0 0
        %4119 = vmatpush2.bf16.msra.mxu0 0
        %4120 = vmatprep.subr.bf16.mxu0 0
        %4121 = vmatpush2.bf16.msra.mxu0 0
        %4122 = vmatprep.subr.bf16.mxu0 0
        %4123 = vmatpush2.bf16.msra.mxu0 0
        %4124 = vmatprep.subr.bf16.mxu0 0
        %4125 = vmatpush2.bf16.msra.mxu0 0
        %4126 = vmatprep.subr.bf16.mxu0 0
        %4127 = vmatpush2.bf16.msra.mxu0 0
        %4128 = vmatprep.subr.bf16.mxu0 0
        %4129 = vmatpush2.bf16.msra.mxu0 0
        %4130 = vmatprep.subr.bf16.mxu0 0
        %4131 = vmatpush2.bf16.msra.mxu0 0
        %4132 = vmatprep.subr.bf16.mxu0 0
        %4133 = vmatpush2.bf16.msra.mxu0 0
        %4134 = vmatprep.mubr.bf16.mxu0 0
        %4135 = vmatmul.mubr.bf16.gmra.mxu0 %v4097
        %v4136 = vpop.f32.mrf.mxu0
        %v4137 = vadd.f32 0.0, %v4136
        %v4138 = vpop.f32.mrf.mxu0
        %v4139 = vpop.f32.mrf.mxu0
        %v4140 = vpop.f32.mrf.mxu0
        %4141 = vdwg.mxu0
        %v4142 = vsel %vm2637, %v3999, -inf
        %4143 = vmax.xlane.f32.xlu0 %v4142
        %v4144 = vpop.xlane.xlu0 %4143
        %v4145 = vsel %vm2637, %v4045, -inf
        %4146 = vmax.xlane.f32.xlu0 %v4145
        %v4147 = vpop.xlane.xlu0 %4146
        %v4148 = vsel %vm2637, %v4091, -inf
        %4149 = vmax.xlane.f32.xlu0 %v4148
        %v4150 = vpop.xlane.xlu0 %4149
        %v4151 = vsel %vm2637, %v4137, -inf
        %4152 = vmax.xlane.f32.xlu0 %v4151
        %v4153 = vpop.xlane.xlu0 %4152
        %v4154 = vsub.f32 %v3999, %v4144
        %v4155 = vsub.f32 %v4045, %v4147
        %v4156 = vsub.f32 %v4091, %v4150
        %v4157 = vsub.f32 %v4137, %v4153
        %v4158 = vmul.f32 %v4154, 1.442695
        %v4159 = vpow.pop %v4158
        %v4160 = vmul.f32 %v4155, 1.442695
        %v4161 = vpow.pop %v4160
        %v4162 = vmul.f32 %v4156, 1.442695
        %v4163 = vpow.pop %v4162
        %v4164 = vmul.f32 %v4157, 1.442695
        %v4165 = vpow.pop %v4164
        %v4166 = vsel %vm2637, %v4159, 0.0
        %4167 = vadd.xlane.f32.xlu0 %v4166
        %v4168 = vpop.xlane.xlu0 %4167
        %v4169 = vsel %vm2637, %v4161, 0.0
        %4170 = vadd.xlane.f32.xlu0 %v4169
        %v4171 = vpop.xlane.xlu0 %4170
        %v4172 = vsel %vm2637, %v4163, 0.0
        %4173 = vadd.xlane.f32.xlu0 %v4172
        %v4174 = vpop.xlane.xlu0 %4173
        %v4175 = vsel %vm2637, %v4165, 0.0
        %4176 = vadd.xlane.f32.xlu0 %v4175
        %v4177 = vpop.xlane.xlu0 %4176
        %v4178 = vrcp.pop %v4168
        %v4179 = vrcp.pop %v4171
        %v4180 = vrcp.pop %v4174
        %v4181 = vrcp.pop %v4177
        %v4182 = vmul.f32 %v4159, %v4178
        %v4183 = vmul.f32 %v4161, %v4179
        %v4184 = vmul.f32 %v4163, %v4180
        %v4185 = vmul.f32 %v4165, %v4181
        %v4186 = vpack.c.bf16 %v4182, %v4182
        %v4187 = vpack.c.bf16 %v4183, %v4183
        %v4188 = vpack.c.bf16 %v4184, %v4184
        %v4189 = vpack.c.bf16 %v4185, %v4185
        %v4190 = vpack.c.bf16 %v3162, %v3162
        %v4191 = vpack.c.bf16 %v3186, %v3186
        %v4192 = vpack.c.bf16 %v3169, %v3169
        %v4193 = vpack.c.bf16 %v3187, %v3187
        %v4194 = vpack.c.bf16 %v3178, %v3178
        %v4195 = vpack.c.bf16 %v3188, %v3188
        %v4196 = vpack.c.bf16 %v3185, %v3185
        %v4197 = vpack.c.bf16 %v3189, %v3189
        %v4198 = vpack.c.bf16 %v3230, %v3230
        %v4199 = vpack.c.bf16 %v3254, %v3254
        %v4200 = vpack.c.bf16 %v3237, %v3237
        %v4201 = vpack.c.bf16 %v3255, %v3255
        %v4202 = vpack.c.bf16 %v3246, %v3246
        %v4203 = vpack.c.bf16 %v3256, %v3256
        %v4204 = vpack.c.bf16 %v3253, %v3253
        %v4205 = vpack.c.bf16 %v3257, %v3257
        %4206 = vxpose.xlu0.c.b16.start [1/8] %v4190, 128
        %4207 = vxpose.xlu0.c.b16.cont [2/8] 0, 128
        %4208 = vxpose.xlu0.c.b16.cont [3/8] 0, 128
        %4209 = vxpose.xlu0.c.b16.cont [4/8] 0, 128
        %4210 = vxpose.xlu0.c.b16.cont [5/8] 0, 128
        %4211 = vxpose.xlu0.c.b16.cont [6/8] 0, 128
        %4212 = vxpose.xlu0.c.b16.cont [7/8] 0, 128
        %4213 = vxpose.xlu0.c.b16.end [8/8] 0, 128
        %v4214 = vpop.trf.xlu0
        %v4215 = vpop.trf.xlu0
        %v4216 = vpop.trf.xlu0
        %v4217 = vpop.trf.xlu0
        %v4218 = vpop.trf.xlu0
        %v4219 = vpop.trf.xlu0
        %v4220 = vpop.trf.xlu0
        %v4221 = vpop.trf.xlu0
        %4222 = vxpose.xlu0.c.b16.start [1/8] %v4191, 128
        %4223 = vxpose.xlu0.c.b16.cont [2/8] 0, 128
        %4224 = vxpose.xlu0.c.b16.cont [3/8] 0, 128
        %4225 = vxpose.xlu0.c.b16.cont [4/8] 0, 128
        %4226 = vxpose.xlu0.c.b16.cont [5/8] 0, 128
        %4227 = vxpose.xlu0.c.b16.cont [6/8] 0, 128
        %4228 = vxpose.xlu0.c.b16.cont [7/8] 0, 128
        %4229 = vxpose.xlu0.c.b16.end [8/8] 0, 128
        %v4230 = vpop.trf.xlu0
        %v4231 = vpop.trf.xlu0
        %v4232 = vpop.trf.xlu0
        %v4233 = vpop.trf.xlu0
        %v4234 = vpop.trf.xlu0
        %v4235 = vpop.trf.xlu0
        %v4236 = vpop.trf.xlu0
        %v4237 = vpop.trf.xlu0
        %4238 = vxpose.xlu0.c.b16.start [1/8] %v4192, 128
        %4239 = vxpose.xlu0.c.b16.cont [2/8] 0, 128
        %4240 = vxpose.xlu0.c.b16.cont [3/8] 0, 128
        %4241 = vxpose.xlu0.c.b16.cont [4/8] 0, 128
        %4242 = vxpose.xlu0.c.b16.cont [5/8] 0, 128
        %4243 = vxpose.xlu0.c.b16.cont [6/8] 0, 128
        %4244 = vxpose.xlu0.c.b16.cont [7/8] 0, 128
        %4245 = vxpose.xlu0.c.b16.end [8/8] 0, 128
        %v4246 = vpop.trf.xlu0
        %v4247 = vpop.trf.xlu0
        %v4248 = vpop.trf.xlu0
        %v4249 = vpop.trf.xlu0
        %v4250 = vpop.trf.xlu0
        %v4251 = vpop.trf.xlu0
        %v4252 = vpop.trf.xlu0
        %v4253 = vpop.trf.xlu0
        %4254 = vxpose.xlu0.c.b16.start [1/8] %v4193, 128
        %4255 = vxpose.xlu0.c.b16.cont [2/8] 0, 128
        %4256 = vxpose.xlu0.c.b16.cont [3/8] 0, 128
        %4257 = vxpose.xlu0.c.b16.cont [4/8] 0, 128
        %4258 = vxpose.xlu0.c.b16.cont [5/8] 0, 128
        %4259 = vxpose.xlu0.c.b16.cont [6/8] 0, 128
        %4260 = vxpose.xlu0.c.b16.cont [7/8] 0, 128
        %4261 = vxpose.xlu0.c.b16.end [8/8] 0, 128
        %v4262 = vpop.trf.xlu0
        %v4263 = vpop.trf.xlu0
        %v4264 = vpop.trf.xlu0
        %v4265 = vpop.trf.xlu0
        %v4266 = vpop.trf.xlu0
        %v4267 = vpop.trf.xlu0
        %v4268 = vpop.trf.xlu0
        %v4269 = vpop.trf.xlu0
        %4270 = vxpose.xlu0.c.b16.start [1/8] %v4194, 128
        %4271 = vxpose.xlu0.c.b16.cont [2/8] 0, 128
        %4272 = vxpose.xlu0.c.b16.cont [3/8] 0, 128
        %4273 = vxpose.xlu0.c.b16.cont [4/8] 0, 128
        %4274 = vxpose.xlu0.c.b16.cont [5/8] 0, 128
        %4275 = vxpose.xlu0.c.b16.cont [6/8] 0, 128
        %4276 = vxpose.xlu0.c.b16.cont [7/8] 0, 128
        %4277 = vxpose.xlu0.c.b16.end [8/8] 0, 128
        %v4278 = vpop.trf.xlu0
        %v4279 = vpop.trf.xlu0
        %v4280 = vpop.trf.xlu0
        %v4281 = vpop.trf.xlu0
        %v4282 = vpop.trf.xlu0
        %v4283 = vpop.trf.xlu0
        %v4284 = vpop.trf.xlu0
        %v4285 = vpop.trf.xlu0
        %4286 = vxpose.xlu0.c.b16.start [1/8] %v4195, 128
        %4287 = vxpose.xlu0.c.b16.cont [2/8] 0, 128
        %4288 = vxpose.xlu0.c.b16.cont [3/8] 0, 128
        %4289 = vxpose.xlu0.c.b16.cont [4/8] 0, 128
        %4290 = vxpose.xlu0.c.b16.cont [5/8] 0, 128
        %4291 = vxpose.xlu0.c.b16.cont [6/8] 0, 128
        %4292 = vxpose.xlu0.c.b16.cont [7/8] 0, 128
        %4293 = vxpose.xlu0.c.b16.end [8/8] 0, 128
        %v4294 = vpop.trf.xlu0
        %v4295 = vpop.trf.xlu0
        %v4296 = vpop.trf.xlu0
        %v4297 = vpop.trf.xlu0
        %v4298 = vpop.trf.xlu0
        %v4299 = vpop.trf.xlu0
        %v4300 = vpop.trf.xlu0
        %v4301 = vpop.trf.xlu0
        %4302 = vxpose.xlu0.c.b16.start [1/8] %v4196, 128
        %4303 = vxpose.xlu0.c.b16.cont [2/8] 0, 128
        %4304 = vxpose.xlu0.c.b16.cont [3/8] 0, 128
        %4305 = vxpose.xlu0.c.b16.cont [4/8] 0, 128
        %4306 = vxpose.xlu0.c.b16.cont [5/8] 0, 128
        %4307 = vxpose.xlu0.c.b16.cont [6/8] 0, 128
        %4308 = vxpose.xlu0.c.b16.cont [7/8] 0, 128
        %4309 = vxpose.xlu0.c.b16.end [8/8] 0, 128
        %v4310 = vpop.trf.xlu0
        %v4311 = vpop.trf.xlu0
        %v4312 = vpop.trf.xlu0
        %v4313 = vpop.trf.xlu0
        %v4314 = vpop.trf.xlu0
        %v4315 = vpop.trf.xlu0
        %v4316 = vpop.trf.xlu0
        %v4317 = vpop.trf.xlu0
        %4318 = vxpose.xlu0.c.b16.start [1/8] %v4197, 128
        %4319 = vxpose.xlu0.c.b16.cont [2/8] 0, 128
        %4320 = vxpose.xlu0.c.b16.cont [3/8] 0, 128
        %4321 = vxpose.xlu0.c.b16.cont [4/8] 0, 128
        %4322 = vxpose.xlu0.c.b16.cont [5/8] 0, 128
        %4323 = vxpose.xlu0.c.b16.cont [6/8] 0, 128
        %4324 = vxpose.xlu0.c.b16.cont [7/8] 0, 128
        %4325 = vxpose.xlu0.c.b16.end [8/8] 0, 128
        %v4326 = vpop.trf.xlu0
        %v4327 = vpop.trf.xlu0
        %v4328 = vpop.trf.xlu0
        %v4329 = vpop.trf.xlu0
        %v4330 = vpop.trf.xlu0
        %v4331 = vpop.trf.xlu0
        %v4332 = vpop.trf.xlu0
        %v4333 = vpop.trf.xlu0
        %4334 = vxpose.xlu0.c.b16.start [1/8] %v4198, 128
        %4335 = vxpose.xlu0.c.b16.cont [2/8] 0, 128
        %4336 = vxpose.xlu0.c.b16.cont [3/8] 0, 128
        %4337 = vxpose.xlu0.c.b16.cont [4/8] 0, 128
        %4338 = vxpose.xlu0.c.b16.cont [5/8] 0, 128
        %4339 = vxpose.xlu0.c.b16.cont [6/8] 0, 128
        %4340 = vxpose.xlu0.c.b16.cont [7/8] 0, 128
        %4341 = vxpose.xlu0.c.b16.end [8/8] 0, 128
        %v4342 = vpop.trf.xlu0
        %v4343 = vpop.trf.xlu0
        %v4344 = vpop.trf.xlu0
        %v4345 = vpop.trf.xlu0
        %v4346 = vpop.trf.xlu0
        %v4347 = vpop.trf.xlu0
        %v4348 = vpop.trf.xlu0
        %v4349 = vpop.trf.xlu0
        %4350 = vxpose.xlu0.c.b16.start [1/8] %v4199, 128
        %4351 = vxpose.xlu0.c.b16.cont [2/8] 0, 128
        %4352 = vxpose.xlu0.c.b16.cont [3/8] 0, 128
        %4353 = vxpose.xlu0.c.b16.cont [4/8] 0, 128
        %4354 = vxpose.xlu0.c.b16.cont [5/8] 0, 128
        %4355 = vxpose.xlu0.c.b16.cont [6/8] 0, 128
        %4356 = vxpose.xlu0.c.b16.cont [7/8] 0, 128
        %4357 = vxpose.xlu0.c.b16.end [8/8] 0, 128
        %v4358 = vpop.trf.xlu0
        %v4359 = vpop.trf.xlu0
        %v4360 = vpop.trf.xlu0
        %v4361 = vpop.trf.xlu0
        %v4362 = vpop.trf.xlu0
        %v4363 = vpop.trf.xlu0
        %v4364 = vpop.trf.xlu0
        %v4365 = vpop.trf.xlu0
        %4366 = vxpose.xlu0.c.b16.start [1/8] %v4200, 128
        %4367 = vxpose.xlu0.c.b16.cont [2/8] 0, 128
        %4368 = vxpose.xlu0.c.b16.cont [3/8] 0, 128
        %4369 = vxpose.xlu0.c.b16.cont [4/8] 0, 128
        %4370 = vxpose.xlu0.c.b16.cont [5/8] 0, 128
        %4371 = vxpose.xlu0.c.b16.cont [6/8] 0, 128
        %4372 = vxpose.xlu0.c.b16.cont [7/8] 0, 128
        %4373 = vxpose.xlu0.c.b16.end [8/8] 0, 128
        %v4374 = vpop.trf.xlu0
        %v4375 = vpop.trf.xlu0
        %v4376 = vpop.trf.xlu0
        %v4377 = vpop.trf.xlu0
        %v4378 = vpop.trf.xlu0
        %v4379 = vpop.trf.xlu0
        %v4380 = vpop.trf.xlu0
        %v4381 = vpop.trf.xlu0
        %4382 = vxpose.xlu0.c.b16.start [1/8] %v4201, 128
        %4383 = vxpose.xlu0.c.b16.cont [2/8] 0, 128
        %4384 = vxpose.xlu0.c.b16.cont [3/8] 0, 128
        %4385 = vxpose.xlu0.c.b16.cont [4/8] 0, 128
        %4386 = vxpose.xlu0.c.b16.cont [5/8] 0, 128
        %4387 = vxpose.xlu0.c.b16.cont [6/8] 0, 128
        %4388 = vxpose.xlu0.c.b16.cont [7/8] 0, 128
        %4389 = vxpose.xlu0.c.b16.end [8/8] 0, 128
        %v4390 = vpop.trf.xlu0
        %v4391 = vpop.trf.xlu0
        %v4392 = vpop.trf.xlu0
        %v4393 = vpop.trf.xlu0
        %v4394 = vpop.trf.xlu0
        %v4395 = vpop.trf.xlu0
        %v4396 = vpop.trf.xlu0
        %v4397 = vpop.trf.xlu0
        %4398 = vxpose.xlu0.c.b16.start [1/8] %v4202, 128
        %4399 = vxpose.xlu0.c.b16.cont [2/8] 0, 128
        %4400 = vxpose.xlu0.c.b16.cont [3/8] 0, 128
        %4401 = vxpose.xlu0.c.b16.cont [4/8] 0, 128
        %4402 = vxpose.xlu0.c.b16.cont [5/8] 0, 128
        %4403 = vxpose.xlu0.c.b16.cont [6/8] 0, 128
        %4404 = vxpose.xlu0.c.b16.cont [7/8] 0, 128
        %4405 = vxpose.xlu0.c.b16.end [8/8] 0, 128
        %v4406 = vpop.trf.xlu0
        %v4407 = vpop.trf.xlu0
        %v4408 = vpop.trf.xlu0
        %v4409 = vpop.trf.xlu0
        %v4410 = vpop.trf.xlu0
        %v4411 = vpop.trf.xlu0
        %v4412 = vpop.trf.xlu0
        %v4413 = vpop.trf.xlu0
        %4414 = vxpose.xlu0.c.b16.start [1/8] %v4203, 128
        %4415 = vxpose.xlu0.c.b16.cont [2/8] 0, 128
        %4416 = vxpose.xlu0.c.b16.cont [3/8] 0, 128
        %4417 = vxpose.xlu0.c.b16.cont [4/8] 0, 128
        %4418 = vxpose.xlu0.c.b16.cont [5/8] 0, 128
        %4419 = vxpose.xlu0.c.b16.cont [6/8] 0, 128
        %4420 = vxpose.xlu0.c.b16.cont [7/8] 0, 128
        %4421 = vxpose.xlu0.c.b16.end [8/8] 0, 128
        %v4422 = vpop.trf.xlu0
        %v4423 = vpop.trf.xlu0
        %v4424 = vpop.trf.xlu0
        %v4425 = vpop.trf.xlu0
        %v4426 = vpop.trf.xlu0
        %v4427 = vpop.trf.xlu0
        %v4428 = vpop.trf.xlu0
        %v4429 = vpop.trf.xlu0
        %4430 = vxpose.xlu0.c.b16.start [1/8] %v4204, 128
        %4431 = vxpose.xlu0.c.b16.cont [2/8] 0, 128
        %4432 = vxpose.xlu0.c.b16.cont [3/8] 0, 128
        %4433 = vxpose.xlu0.c.b16.cont [4/8] 0, 128
        %4434 = vxpose.xlu0.c.b16.cont [5/8] 0, 128
        %4435 = vxpose.xlu0.c.b16.cont [6/8] 0, 128
        %4436 = vxpose.xlu0.c.b16.cont [7/8] 0, 128
        %4437 = vxpose.xlu0.c.b16.end [8/8] 0, 128
        %v4438 = vpop.trf.xlu0
        %v4439 = vpop.trf.xlu0
        %v4440 = vpop.trf.xlu0
        %v4441 = vpop.trf.xlu0
        %v4442 = vpop.trf.xlu0
        %v4443 = vpop.trf.xlu0
        %v4444 = vpop.trf.xlu0
        %v4445 = vpop.trf.xlu0
        %4446 = vxpose.xlu0.c.b16.start [1/8] %v4205, 128
        %4447 = vxpose.xlu0.c.b16.cont [2/8] 0, 128
        %4448 = vxpose.xlu0.c.b16.cont [3/8] 0, 128
        %4449 = vxpose.xlu0.c.b16.cont [4/8] 0, 128
        %4450 = vxpose.xlu0.c.b16.cont [5/8] 0, 128
        %4451 = vxpose.xlu0.c.b16.cont [6/8] 0, 128
        %4452 = vxpose.xlu0.c.b16.cont [7/8] 0, 128
        %4453 = vxpose.xlu0.c.b16.end [8/8] 0, 128
        %v4454 = vpop.trf.xlu0
        %v4455 = vpop.trf.xlu0
        %v4456 = vpop.trf.xlu0
        %v4457 = vpop.trf.xlu0
        %v4458 = vpop.trf.xlu0
        %v4459 = vpop.trf.xlu0
        %v4460 = vpop.trf.xlu0
        %v4461 = vpop.trf.xlu0
        %v4462 = vcombine.low %v4214, %v4278
        %v4464 = vunpack.c.l.s4 1983009808
        %v4465 = vunpack.c.0.s8 %v4464
        %v4466 = vlaneseq
        %v4467 = vshrl.u32 %v4466, 7
        %v4468 = vsub.s32 %v4465, %v4467
        %v4469 = vrot.slane %v4462, %v4468
        %v4470 = vcombine.low %v4246, %v4310
        %v4472 = vunpack.c.l.s4 1983009808
        %v4473 = vunpack.c.0.s8 %v4472
        %v4474 = vlaneseq
        %v4475 = vshrl.u32 %v4474, 7
        %v4476 = vsub.s32 %v4473, %v4475
        %v4477 = vrot.slane %v4470, %v4476
        %v4478 = vcombine.low %v4342, %v4406
        %v4480 = vunpack.c.l.s4 1983009808
        %v4481 = vunpack.c.0.s8 %v4480
        %v4482 = vlaneseq
        %v4483 = vshrl.u32 %v4482, 7
        %v4484 = vsub.s32 %v4481, %v4483
        %v4485 = vrot.slane %v4478, %v4484
        %v4486 = vcombine.low %v4374, %v4438
        %v4488 = vunpack.c.l.s4 1983009808
        %v4489 = vunpack.c.0.s8 %v4488
        %v4490 = vlaneseq
        %v4491 = vshrl.u32 %v4490, 7
        %v4492 = vsub.s32 %v4489, %v4491
        %v4493 = vrot.slane %v4486, %v4492
        %v4494 = vcombine.low %v4469, %v4477
        %v4495 = vcombine.high %v4469, %v4477
        %v4497 = vunpack.c.l.s4 1934713408
        %v4498 = vunpack.c.0.s8 %v4497
        %v4499 = vlaneseq
        %v4500 = vshrl.u32 %v4499, 7
        %v4501 = vsub.s32 %v4498, %v4500
        %v4502 = vrot.slane %v4494, %v4501
        %v4504 = vunpack.c.l.s4 1934713408
        %v4505 = vunpack.c.0.s8 %v4504
        %v4506 = vlaneseq
        %v4507 = vshrl.u32 %v4506, 7
        %v4508 = vsub.s32 %v4505, %v4507
        %v4509 = vrot.slane %v4495, %v4508
        %v4510 = vcombine.low %v4485, %v4493
        %v4511 = vcombine.high %v4485, %v4493
        %v4513 = vunpack.c.l.s4 1934713408
        %v4514 = vunpack.c.0.s8 %v4513
        %v4515 = vlaneseq
        %v4516 = vshrl.u32 %v4515, 7
        %v4517 = vsub.s32 %v4514, %v4516
        %v4518 = vrot.slane %v4510, %v4517
        %v4520 = vunpack.c.l.s4 1934713408
        %v4521 = vunpack.c.0.s8 %v4520
        %v4522 = vlaneseq
        %v4523 = vshrl.u32 %v4522, 7
        %v4524 = vsub.s32 %v4521, %v4523
        %v4525 = vrot.slane %v4511, %v4524
        %v4526 = vcombine.low %v4502, %v4518
        %v4527 = vcombine.high %v4502, %v4518
        %v4528 = vcombine.low %v4509, %v4525
        %v4529 = vcombine.high %v4509, %v4525
        %v4530 = vcombine.low %v4230, %v4294
        %v4532 = vunpack.c.l.s4 1983009808
        %v4533 = vunpack.c.0.s8 %v4532
        %v4534 = vlaneseq
        %v4535 = vshrl.u32 %v4534, 7
        %v4536 = vsub.s32 %v4533, %v4535
        %v4537 = vrot.slane %v4530, %v4536
        %v4538 = vcombine.low %v4262, %v4326
        %v4540 = vunpack.c.l.s4 1983009808
        %v4541 = vunpack.c.0.s8 %v4540
        %v4542 = vlaneseq
        %v4543 = vshrl.u32 %v4542, 7
        %v4544 = vsub.s32 %v4541, %v4543
        %v4545 = vrot.slane %v4538, %v4544
        %v4546 = vcombine.low %v4358, %v4422
        %v4548 = vunpack.c.l.s4 1983009808
        %v4549 = vunpack.c.0.s8 %v4548
        %v4550 = vlaneseq
        %v4551 = vshrl.u32 %v4550, 7
        %v4552 = vsub.s32 %v4549, %v4551
        %v4553 = vrot.slane %v4546, %v4552
        %v4554 = vcombine.low %v4390, %v4454
        %v4556 = vunpack.c.l.s4 1983009808
        %v4557 = vunpack.c.0.s8 %v4556
        %v4558 = vlaneseq
        %v4559 = vshrl.u32 %v4558, 7
        %v4560 = vsub.s32 %v4557, %v4559
        %v4561 = vrot.slane %v4554, %v4560
        %v4562 = vcombine.low %v4537, %v4545
        %v4563 = vcombine.high %v4537, %v4545
        %v4565 = vunpack.c.l.s4 1934713408
        %v4566 = vunpack.c.0.s8 %v4565
        %v4567 = vlaneseq
        %v4568 = vshrl.u32 %v4567, 7
        %v4569 = vsub.s32 %v4566, %v4568
        %v4570 = vrot.slane %v4562, %v4569
        %v4572 = vunpack.c.l.s4 1934713408
        %v4573 = vunpack.c.0.s8 %v4572
        %v4574 = vlaneseq
        %v4575 = vshrl.u32 %v4574, 7
        %v4576 = vsub.s32 %v4573, %v4575
        %v4577 = vrot.slane %v4563, %v4576
        %v4578 = vcombine.low %v4553, %v4561
        %v4579 = vcombine.high %v4553, %v4561
        %v4581 = vunpack.c.l.s4 1934713408
        %v4582 = vunpack.c.0.s8 %v4581
        %v4583 = vlaneseq
        %v4584 = vshrl.u32 %v4583, 7
        %v4585 = vsub.s32 %v4582, %v4584
        %v4586 = vrot.slane %v4578, %v4585
        %v4588 = vunpack.c.l.s4 1934713408
        %v4589 = vunpack.c.0.s8 %v4588
        %v4590 = vlaneseq
        %v4591 = vshrl.u32 %v4590, 7
        %v4592 = vsub.s32 %v4589, %v4591
        %v4593 = vrot.slane %v4579, %v4592
        %v4594 = vcombine.low %v4570, %v4586
        %v4595 = vcombine.high %v4570, %v4586
        %v4596 = vcombine.low %v4577, %v4593
        %v4597 = vcombine.high %v4577, %v4593
        %v4600 = vpack.i.b16 %v4594, %v4526
        %v4602 = vshrl.u32 %v4526, 16
        %v4603 = vshrl.u32 %v4594, 16
        %v4604 = vpack.i.b16 %v4603, %v4602
        %v4608 = vpack.i.b16 %v4595, %v4527
        %v4610 = vshrl.u32 %v4527, 16
        %v4611 = vshrl.u32 %v4595, 16
        %v4612 = vpack.i.b16 %v4611, %v4610
        %v4616 = vpack.i.b16 %v4596, %v4528
        %v4618 = vshrl.u32 %v4528, 16
        %v4619 = vshrl.u32 %v4596, 16
        %v4620 = vpack.i.b16 %v4619, %v4618
        %v4624 = vpack.i.b16 %v4597, %v4529
        %v4626 = vshrl.u32 %v4529, 16
        %v4627 = vshrl.u32 %v4597, 16
        %v4628 = vpack.i.b16 %v4627, %v4626
        %4630 = vxpose.xlu0.c.b16.start [1/8] %v4600, 128
        %4631 = vxpose.xlu0.c.b16.cont [2/8] 0, 128
        %4632 = vxpose.xlu0.c.b16.cont [3/8] 0, 128
        %4633 = vxpose.xlu0.c.b16.cont [4/8] 0, 128
        %4634 = vxpose.xlu0.c.b16.cont [5/8] 0, 128
        %4635 = vxpose.xlu0.c.b16.cont [6/8] 0, 128
        %4636 = vxpose.xlu0.c.b16.cont [7/8] 0, 128
        %4637 = vxpose.xlu0.c.b16.end [8/8] 0, 128
        %v4638 = vpop.trf.xlu0
        %v4639 = vpop.trf.xlu0
        %v4640 = vpop.trf.xlu0
        %v4641 = vpop.trf.xlu0
        %v4642 = vpop.trf.xlu0
        %v4643 = vpop.trf.xlu0
        %v4644 = vpop.trf.xlu0
        %v4645 = vpop.trf.xlu0
        %4646 = vxpose.xlu0.c.b16.start [1/8] %v4604, 128
        %4647 = vxpose.xlu0.c.b16.cont [2/8] 0, 128
        %4648 = vxpose.xlu0.c.b16.cont [3/8] 0, 128
        %4649 = vxpose.xlu0.c.b16.cont [4/8] 0, 128
        %4650 = vxpose.xlu0.c.b16.cont [5/8] 0, 128
        %4651 = vxpose.xlu0.c.b16.cont [6/8] 0, 128
        %4652 = vxpose.xlu0.c.b16.cont [7/8] 0, 128
        %4653 = vxpose.xlu0.c.b16.end [8/8] 0, 128
        %v4654 = vpop.trf.xlu0
        %v4655 = vpop.trf.xlu0
        %v4656 = vpop.trf.xlu0
        %v4657 = vpop.trf.xlu0
        %v4658 = vpop.trf.xlu0
        %v4659 = vpop.trf.xlu0
        %v4660 = vpop.trf.xlu0
        %v4661 = vpop.trf.xlu0
        %4662 = vxpose.xlu0.c.b16.start [1/8] %v4608, 128
        %4663 = vxpose.xlu0.c.b16.cont [2/8] 0, 128
        %4664 = vxpose.xlu0.c.b16.cont [3/8] 0, 128
        %4665 = vxpose.xlu0.c.b16.cont [4/8] 0, 128
        %4666 = vxpose.xlu0.c.b16.cont [5/8] 0, 128
        %4667 = vxpose.xlu0.c.b16.cont [6/8] 0, 128
        %4668 = vxpose.xlu0.c.b16.cont [7/8] 0, 128
        %4669 = vxpose.xlu0.c.b16.end [8/8] 0, 128
        %v4670 = vpop.trf.xlu0
        %v4671 = vpop.trf.xlu0
        %v4672 = vpop.trf.xlu0
        %v4673 = vpop.trf.xlu0
        %v4674 = vpop.trf.xlu0
        %v4675 = vpop.trf.xlu0
        %v4676 = vpop.trf.xlu0
        %v4677 = vpop.trf.xlu0
        %4678 = vxpose.xlu0.c.b16.start [1/8] %v4612, 128
        %4679 = vxpose.xlu0.c.b16.cont [2/8] 0, 128
        %4680 = vxpose.xlu0.c.b16.cont [3/8] 0, 128
        %4681 = vxpose.xlu0.c.b16.cont [4/8] 0, 128
        %4682 = vxpose.xlu0.c.b16.cont [5/8] 0, 128
        %4683 = vxpose.xlu0.c.b16.cont [6/8] 0, 128
        %4684 = vxpose.xlu0.c.b16.cont [7/8] 0, 128
        %4685 = vxpose.xlu0.c.b16.end [8/8] 0, 128
        %v4686 = vpop.trf.xlu0
        %v4687 = vpop.trf.xlu0
        %v4688 = vpop.trf.xlu0
        %v4689 = vpop.trf.xlu0
        %v4690 = vpop.trf.xlu0
        %v4691 = vpop.trf.xlu0
        %v4692 = vpop.trf.xlu0
        %v4693 = vpop.trf.xlu0
        %4694 = vxpose.xlu0.c.b16.start [1/8] %v4616, 128
        %4695 = vxpose.xlu0.c.b16.cont [2/8] 0, 128
        %4696 = vxpose.xlu0.c.b16.cont [3/8] 0, 128
        %4697 = vxpose.xlu0.c.b16.cont [4/8] 0, 128
        %4698 = vxpose.xlu0.c.b16.cont [5/8] 0, 128
        %4699 = vxpose.xlu0.c.b16.cont [6/8] 0, 128
        %4700 = vxpose.xlu0.c.b16.cont [7/8] 0, 128
        %4701 = vxpose.xlu0.c.b16.end [8/8] 0, 128
        %v4702 = vpop.trf.xlu0
        %v4703 = vpop.trf.xlu0
        %v4704 = vpop.trf.xlu0
        %v4705 = vpop.trf.xlu0
        %v4706 = vpop.trf.xlu0
        %v4707 = vpop.trf.xlu0
        %v4708 = vpop.trf.xlu0
        %v4709 = vpop.trf.xlu0
        %4710 = vxpose.xlu0.c.b16.start [1/8] %v4620, 128
        %4711 = vxpose.xlu0.c.b16.cont [2/8] 0, 128
        %4712 = vxpose.xlu0.c.b16.cont [3/8] 0, 128
        %4713 = vxpose.xlu0.c.b16.cont [4/8] 0, 128
        %4714 = vxpose.xlu0.c.b16.cont [5/8] 0, 128
        %4715 = vxpose.xlu0.c.b16.cont [6/8] 0, 128
        %4716 = vxpose.xlu0.c.b16.cont [7/8] 0, 128
        %4717 = vxpose.xlu0.c.b16.end [8/8] 0, 128
        %v4718 = vpop.trf.xlu0
        %v4719 = vpop.trf.xlu0
        %v4720 = vpop.trf.xlu0
        %v4721 = vpop.trf.xlu0
        %v4722 = vpop.trf.xlu0
        %v4723 = vpop.trf.xlu0
        %v4724 = vpop.trf.xlu0
        %v4725 = vpop.trf.xlu0
        %4726 = vxpose.xlu0.c.b16.start [1/8] %v4624, 128
        %4727 = vxpose.xlu0.c.b16.cont [2/8] 0, 128
        %4728 = vxpose.xlu0.c.b16.cont [3/8] 0, 128
        %4729 = vxpose.xlu0.c.b16.cont [4/8] 0, 128
        %4730 = vxpose.xlu0.c.b16.cont [5/8] 0, 128
        %4731 = vxpose.xlu0.c.b16.cont [6/8] 0, 128
        %4732 = vxpose.xlu0.c.b16.cont [7/8] 0, 128
        %4733 = vxpose.xlu0.c.b16.end [8/8] 0, 128
        %v4734 = vpop.trf.xlu0
        %v4735 = vpop.trf.xlu0
        %v4736 = vpop.trf.xlu0
        %v4737 = vpop.trf.xlu0
        %v4738 = vpop.trf.xlu0
        %v4739 = vpop.trf.xlu0
        %v4740 = vpop.trf.xlu0
        %v4741 = vpop.trf.xlu0
        %4742 = vxpose.xlu0.c.b16.start [1/8] %v4628, 128
        %4743 = vxpose.xlu0.c.b16.cont [2/8] 0, 128
        %4744 = vxpose.xlu0.c.b16.cont [3/8] 0, 128
        %4745 = vxpose.xlu0.c.b16.cont [4/8] 0, 128
        %4746 = vxpose.xlu0.c.b16.cont [5/8] 0, 128
        %4747 = vxpose.xlu0.c.b16.cont [6/8] 0, 128
        %4748 = vxpose.xlu0.c.b16.cont [7/8] 0, 128
        %4749 = vxpose.xlu0.c.b16.end [8/8] 0, 128
        %v4750 = vpop.trf.xlu0
        %v4751 = vpop.trf.xlu0
        %v4752 = vpop.trf.xlu0
        %v4753 = vpop.trf.xlu0
        %v4754 = vpop.trf.xlu0
        %v4755 = vpop.trf.xlu0
        %v4756 = vpop.trf.xlu0
        %v4757 = vpop.trf.xlu0
        %v4758 = vcombine.low %v4638, %v4702
        %v4760 = vunpack.c.l.s4 1983009808
        %v4761 = vunpack.c.0.s8 %v4760
        %v4762 = vlaneseq
        %v4763 = vshrl.u32 %v4762, 7
        %v4764 = vsub.s32 %v4761, %v4763
        %v4765 = vrot.slane %v4758, %v4764
        %v4766 = vcombine.low %v4670, %v4734
        %v4768 = vunpack.c.l.s4 1983009808
        %v4769 = vunpack.c.0.s8 %v4768
        %v4770 = vlaneseq
        %v4771 = vshrl.u32 %v4770, 7
        %v4772 = vsub.s32 %v4769, %v4771
        %v4773 = vrot.slane %v4766, %v4772
        %v4774 = vcombine.low %v4765, %v4773
        %v4776 = vunpack.c.l.s4 1934713408
        %v4777 = vunpack.c.0.s8 %v4776
        %v4778 = vlaneseq
        %v4779 = vshrl.u32 %v4778, 7
        %v4780 = vsub.s32 %v4777, %v4779
        %v4781 = vrot.slane %v4774, %v4780
        %v4782 = vcombine.high %v4781, 0
        %v4783 = vcombine.low %v4654, %v4718
        %v4785 = vunpack.c.l.s4 1983009808
        %v4786 = vunpack.c.0.s8 %v4785
        %v4787 = vlaneseq
        %v4788 = vshrl.u32 %v4787, 7
        %v4789 = vsub.s32 %v4786, %v4788
        %v4790 = vrot.slane %v4783, %v4789
        %v4791 = vcombine.low %v4686, %v4750
        %v4793 = vunpack.c.l.s4 1983009808
        %v4794 = vunpack.c.0.s8 %v4793
        %v4795 = vlaneseq
        %v4796 = vshrl.u32 %v4795, 7
        %v4797 = vsub.s32 %v4794, %v4796
        %v4798 = vrot.slane %v4791, %v4797
        %v4799 = vcombine.low %v4790, %v4798
        %v4801 = vunpack.c.l.s4 1934713408
        %v4802 = vunpack.c.0.s8 %v4801
        %v4803 = vlaneseq
        %v4804 = vshrl.u32 %v4803, 7
        %v4805 = vsub.s32 %v4802, %v4804
        %v4806 = vrot.slane %v4799, %v4805
        %v4807 = vcombine.high %v4806, 0
        %v4810 = vpack.i.b16 %v4806, %v4781
        %v4811 = vshrl.u32 %v4781, 16
        %v4812 = vshrl.u32 %v4806, 16
        %v4813 = vpack.i.b16 %v4812, %v4811
        %v4816 = vpack.i.b16 %v4807, %v4782
        %v4817 = vshrl.u32 %v4782, 16
        %v4818 = vshrl.u32 %v4807, 16
        %v4819 = vpack.i.b16 %v4818, %v4817
        %v4821 = vsel %vm2637, %v4810, 0
        %v4824 = vsel %vm2637, %v4186, 0
        %4826 = vmatprep.subr.bf16.mxu0 0
        %4827 = vmatpush1.bf16.xpose.msra.mxu0 0
        %4828 = vmatprep.subr.bf16.mxu0 0
        %4829 = vmatpush1.bf16.xpose.msra.mxu0 0
        %4830 = vmatprep.subr.bf16.mxu0 0
        %4831 = vmatpush1.bf16.xpose.msra.mxu0 0
        %4832 = vmatprep.subr.bf16.mxu0 0
        %4833 = vmatpush1.bf16.xpose.msra.mxu0 0
        %4834 = vmatprep.subr.bf16.mxu0 0
        %4835 = vmatpush1.bf16.xpose.msra.mxu0 0
        %4836 = vmatprep.subr.bf16.mxu0 0
        %4837 = vmatpush1.bf16.xpose.msra.mxu0 0
        %4838 = vmatprep.subr.bf16.mxu0 0
        %4839 = vmatpush1.bf16.xpose.msra.mxu0 0
        %4840 = vmatprep.subr.bf16.mxu0 0
        %4841 = vmatpush1.bf16.xpose.msra.mxu0 %v4824
        %4842 = vmatprep.subr.bf16.mxu0 0
        %4843 = vmatpush2.bf16.xpose.msra.mxu0 0
        %4844 = vmatprep.subr.bf16.mxu0 0
        %4845 = vmatpush2.bf16.xpose.msra.mxu0 0
        %4846 = vmatprep.subr.bf16.mxu0 0
        %4847 = vmatpush2.bf16.xpose.msra.mxu0 0
        %4848 = vmatprep.subr.bf16.mxu0 0
        %4849 = vmatpush2.bf16.xpose.msra.mxu0 0
        %4850 = vmatprep.subr.bf16.mxu0 0
        %4851 = vmatpush2.bf16.xpose.msra.mxu0 0
        %4852 = vmatprep.subr.bf16.mxu0 0
        %4853 = vmatpush2.bf16.xpose.msra.mxu0 0
        %4854 = vmatprep.subr.bf16.mxu0 0
        %4855 = vmatpush2.bf16.xpose.msra.mxu0 0
        %4856 = vmatprep.subr.bf16.mxu0 0
        %4857 = vmatpush2.bf16.xpose.msra.mxu0 0
        %4858 = vmatprep.mubr.bf16.mxu0 0
        %4859 = vmatmul.mubr.bf16.gmra.mxu0 %v4821
        %v4860 = vpop.f32.mrf.mxu0
        %v4861 = vadd.f32 0.0, %v4860
        %v4862 = vpop.f32.mrf.mxu0
        %v4863 = vpop.f32.mrf.mxu0
        %v4864 = vpop.f32.mrf.mxu0
        %4865 = vdwg.mxu0
        %v4867 = vsel %vm2637, %v4813, 0
        %v4870 = vsel %vm2637, %v4187, 0
        %4872 = vmatprep.subr.bf16.mxu0 0
        %4873 = vmatpush1.bf16.xpose.msra.mxu0 0
        %4874 = vmatprep.subr.bf16.mxu0 0
        %4875 = vmatpush1.bf16.xpose.msra.mxu0 0
        %4876 = vmatprep.subr.bf16.mxu0 0
        %4877 = vmatpush1.bf16.xpose.msra.mxu0 0
        %4878 = vmatprep.subr.bf16.mxu0 0
        %4879 = vmatpush1.bf16.xpose.msra.mxu0 0
        %4880 = vmatprep.subr.bf16.mxu0 0
        %4881 = vmatpush1.bf16.xpose.msra.mxu0 0
        %4882 = vmatprep.subr.bf16.mxu0 0
        %4883 = vmatpush1.bf16.xpose.msra.mxu0 0
        %4884 = vmatprep.subr.bf16.mxu0 0
        %4885 = vmatpush1.bf16.xpose.msra.mxu0 0
        %4886 = vmatprep.subr.bf16.mxu0 0
        %4887 = vmatpush1.bf16.xpose.msra.mxu0 %v4870
        %4888 = vmatprep.subr.bf16.mxu0 0
        %4889 = vmatpush2.bf16.xpose.msra.mxu0 0
        %4890 = vmatprep.subr.bf16.mxu0 0
        %4891 = vmatpush2.bf16.xpose.msra.mxu0 0
        %4892 = vmatprep.subr.bf16.mxu0 0
        %4893 = vmatpush2.bf16.xpose.msra.mxu0 0
        %4894 = vmatprep.subr.bf16.mxu0 0
        %4895 = vmatpush2.bf16.xpose.msra.mxu0 0
        %4896 = vmatprep.subr.bf16.mxu0 0
        %4897 = vmatpush2.bf16.xpose.msra.mxu0 0
        %4898 = vmatprep.subr.bf16.mxu0 0
        %4899 = vmatpush2.bf16.xpose.msra.mxu0 0
        %4900 = vmatprep.subr.bf16.mxu0 0
        %4901 = vmatpush2.bf16.xpose.msra.mxu0 0
        %4902 = vmatprep.subr.bf16.mxu0 0
        %4903 = vmatpush2.bf16.xpose.msra.mxu0 0
        %4904 = vmatprep.mubr.bf16.mxu0 0
        %4905 = vmatmul.mubr.bf16.gmra.mxu0 %v4867
        %v4906 = vpop.f32.mrf.mxu0
        %v4907 = vadd.f32 0.0, %v4906
        %v4908 = vpop.f32.mrf.mxu0
        %v4909 = vpop.f32.mrf.mxu0
        %v4910 = vpop.f32.mrf.mxu0
        %4911 = vdwg.mxu0
        %v4913 = vsel %vm2637, %v4816, 0
        %v4916 = vsel %vm2637, %v4188, 0
        %4918 = vmatprep.subr.bf16.mxu0 0
        %4919 = vmatpush1.bf16.xpose.msra.mxu0 0
        %4920 = vmatprep.subr.bf16.mxu0 0
        %4921 = vmatpush1.bf16.xpose.msra.mxu0 0
        %4922 = vmatprep.subr.bf16.mxu0 0
        %4923 = vmatpush1.bf16.xpose.msra.mxu0 0
        %4924 = vmatprep.subr.bf16.mxu0 0
        %4925 = vmatpush1.bf16.xpose.msra.mxu0 0
        %4926 = vmatprep.subr.bf16.mxu0 0
        %4927 = vmatpush1.bf16.xpose.msra.mxu0 0
        %4928 = vmatprep.subr.bf16.mxu0 0
        %4929 = vmatpush1.bf16.xpose.msra.mxu0 0
        %4930 = vmatprep.subr.bf16.mxu0 0
        %4931 = vmatpush1.bf16.xpose.msra.mxu0 0
        %4932 = vmatprep.subr.bf16.mxu0 0
        %4933 = vmatpush1.bf16.xpose.msra.mxu0 %v4916
        %4934 = vmatprep.subr.bf16.mxu0 0
        %4935 = vmatpush2.bf16.xpose.msra.mxu0 0
        %4936 = vmatprep.subr.bf16.mxu0 0
        %4937 = vmatpush2.bf16.xpose.msra.mxu0 0
        %4938 = vmatprep.subr.bf16.mxu0 0
        %4939 = vmatpush2.bf16.xpose.msra.mxu0 0
        %4940 = vmatprep.subr.bf16.mxu0 0
        %4941 = vmatpush2.bf16.xpose.msra.mxu0 0
        %4942 = vmatprep.subr.bf16.mxu0 0
        %4943 = vmatpush2.bf16.xpose.msra.mxu0 0
        %4944 = vmatprep.subr.bf16.mxu0 0
        %4945 = vmatpush2.bf16.xpose.msra.mxu0 0
        %4946 = vmatprep.subr.bf16.mxu0 0
        %4947 = vmatpush2.bf16.xpose.msra.mxu0 0
        %4948 = vmatprep.subr.bf16.mxu0 0
        %4949 = vmatpush2.bf16.xpose.msra.mxu0 0
        %4950 = vmatprep.mubr.bf16.mxu0 0
        %4951 = vmatmul.mubr.bf16.gmra.mxu0 %v4913
        %v4952 = vpop.f32.mrf.mxu0
        %v4953 = vadd.f32 0.0, %v4952
        %v4954 = vpop.f32.mrf.mxu0
        %v4955 = vpop.f32.mrf.mxu0
        %v4956 = vpop.f32.mrf.mxu0
        %4957 = vdwg.mxu0
        %v4959 = vsel %vm2637, %v4819, 0
        %v4962 = vsel %vm2637, %v4189, 0
        %4964 = vmatprep.subr.bf16.mxu0 0
        %4965 = vmatpush1.bf16.xpose.msra.mxu0 0
        %4966 = vmatprep.subr.bf16.mxu0 0
        %4967 = vmatpush1.bf16.xpose.msra.mxu0 0
        %4968 = vmatprep.subr.bf16.mxu0 0
        %4969 = vmatpush1.bf16.xpose.msra.mxu0 0
        %4970 = vmatprep.subr.bf16.mxu0 0
        %4971 = vmatpush1.bf16.xpose.msra.mxu0 0
        %4972 = vmatprep.subr.bf16.mxu0 0
        %4973 = vmatpush1.bf16.xpose.msra.mxu0 0
        %4974 = vmatprep.subr.bf16.mxu0 0
        %4975 = vmatpush1.bf16.xpose.msra.mxu0 0
        %4976 = vmatprep.subr.bf16.mxu0 0
        %4977 = vmatpush1.bf16.xpose.msra.mxu0 0
        %4978 = vmatprep.subr.bf16.mxu0 0
        %4979 = vmatpush1.bf16.xpose.msra.mxu0 %v4962
        %4980 = vmatprep.subr.bf16.mxu0 0
        %4981 = vmatpush2.bf16.xpose.msra.mxu0 0
        %4982 = vmatprep.subr.bf16.mxu0 0
        %4983 = vmatpush2.bf16.xpose.msra.mxu0 0
        %4984 = vmatprep.subr.bf16.mxu0 0
        %4985 = vmatpush2.bf16.xpose.msra.mxu0 0
        %4986 = vmatprep.subr.bf16.mxu0 0
        %4987 = vmatpush2.bf16.xpose.msra.mxu0 0
        %4988 = vmatprep.subr.bf16.mxu0 0
        %4989 = vmatpush2.bf16.xpose.msra.mxu0 0
        %4990 = vmatprep.subr.bf16.mxu0 0
        %4991 = vmatpush2.bf16.xpose.msra.mxu0 0
        %4992 = vmatprep.subr.bf16.mxu0 0
        %4993 = vmatpush2.bf16.xpose.msra.mxu0 0
        %4994 = vmatprep.subr.bf16.mxu0 0
        %4995 = vmatpush2.bf16.xpose.msra.mxu0 0
        %4996 = vmatprep.mubr.bf16.mxu0 0
        %4997 = vmatmul.mubr.bf16.gmra.mxu0 %v4959
        %v4998 = vpop.f32.mrf.mxu0
        %v4999 = vadd.f32 0.0, %v4998
        %v5000 = vpop.f32.mrf.mxu0
        %v5001 = vpop.f32.mrf.mxu0
        %v5002 = vpop.f32.mrf.mxu0
        %5003 = vdwg.mxu0
        %5004 = vxpose.xlu0.b32.start [1/16] %v4861, 128
        %5005 = vxpose.xlu0.b32.cont [2/16] 0.0, 128
        %5006 = vxpose.xlu0.b32.cont [3/16] 0.0, 128
        %5007 = vxpose.xlu0.b32.cont [4/16] 0.0, 128
        %5008 = vxpose.xlu0.b32.cont [5/16] 0.0, 128
        %5009 = vxpose.xlu0.b32.cont [6/16] 0.0, 128
        %5010 = vxpose.xlu0.b32.cont [7/16] 0.0, 128
        %5011 = vxpose.xlu0.b32.cont [8/16] 0.0, 128
        %5012 = vxpose.xlu0.b32.cont [9/16] 0.0, 128
        %5013 = vxpose.xlu0.b32.cont [10/16] 0.0, 128
        %5014 = vxpose.xlu0.b32.cont [11/16] 0.0, 128
        %5015 = vxpose.xlu0.b32.cont [12/16] 0.0, 128
        %5016 = vxpose.xlu0.b32.cont [13/16] 0.0, 128
        %5017 = vxpose.xlu0.b32.cont [14/16] 0.0, 128
        %5018 = vxpose.xlu0.b32.cont [15/16] 0.0, 128
        %5019 = vxpose.xlu0.b32.end [16/16] 0.0, 128
        %v5020 = vpop.trf.xlu0
        %v5021 = vpop.trf.xlu0
        %v5022 = vpop.trf.xlu0
        %v5023 = vpop.trf.xlu0
        %v5024 = vpop.trf.xlu0
        %v5025 = vpop.trf.xlu0
        %v5026 = vpop.trf.xlu0
        %v5027 = vpop.trf.xlu0
        %v5028 = vpop.trf.xlu0
        %v5029 = vpop.trf.xlu0
        %v5030 = vpop.trf.xlu0
        %v5031 = vpop.trf.xlu0
        %v5032 = vpop.trf.xlu0
        %v5033 = vpop.trf.xlu0
        %v5034 = vpop.trf.xlu0
        %v5035 = vpop.trf.xlu0
        %5036 = vxpose.xlu0.b32.start [1/16] %v4907, 128
        %5037 = vxpose.xlu0.b32.cont [2/16] 0.0, 128
        %5038 = vxpose.xlu0.b32.cont [3/16] 0.0, 128
        %5039 = vxpose.xlu0.b32.cont [4/16] 0.0, 128
        %5040 = vxpose.xlu0.b32.cont [5/16] 0.0, 128
        %5041 = vxpose.xlu0.b32.cont [6/16] 0.0, 128
        %5042 = vxpose.xlu0.b32.cont [7/16] 0.0, 128
        %5043 = vxpose.xlu0.b32.cont [8/16] 0.0, 128
        %5044 = vxpose.xlu0.b32.cont [9/16] 0.0, 128
        %5045 = vxpose.xlu0.b32.cont [10/16] 0.0, 128
        %5046 = vxpose.xlu0.b32.cont [11/16] 0.0, 128
        %5047 = vxpose.xlu0.b32.cont [12/16] 0.0, 128
        %5048 = vxpose.xlu0.b32.cont [13/16] 0.0, 128
        %5049 = vxpose.xlu0.b32.cont [14/16] 0.0, 128
        %5050 = vxpose.xlu0.b32.cont [15/16] 0.0, 128
        %5051 = vxpose.xlu0.b32.end [16/16] 0.0, 128
        %v5052 = vpop.trf.xlu0
        %v5053 = vpop.trf.xlu0
        %v5054 = vpop.trf.xlu0
        %v5055 = vpop.trf.xlu0
        %v5056 = vpop.trf.xlu0
        %v5057 = vpop.trf.xlu0
        %v5058 = vpop.trf.xlu0
        %v5059 = vpop.trf.xlu0
        %v5060 = vpop.trf.xlu0
        %v5061 = vpop.trf.xlu0
        %v5062 = vpop.trf.xlu0
        %v5063 = vpop.trf.xlu0
        %v5064 = vpop.trf.xlu0
        %v5065 = vpop.trf.xlu0
        %v5066 = vpop.trf.xlu0
        %v5067 = vpop.trf.xlu0
        %5068 = vxpose.xlu0.b32.start [1/16] %v4953, 128
        %5069 = vxpose.xlu0.b32.cont [2/16] 0.0, 128
        %5070 = vxpose.xlu0.b32.cont [3/16] 0.0, 128
        %5071 = vxpose.xlu0.b32.cont [4/16] 0.0, 128
        %5072 = vxpose.xlu0.b32.cont [5/16] 0.0, 128
        %5073 = vxpose.xlu0.b32.cont [6/16] 0.0, 128
        %5074 = vxpose.xlu0.b32.cont [7/16] 0.0, 128
        %5075 = vxpose.xlu0.b32.cont [8/16] 0.0, 128
        %5076 = vxpose.xlu0.b32.cont [9/16] 0.0, 128
        %5077 = vxpose.xlu0.b32.cont [10/16] 0.0, 128
        %5078 = vxpose.xlu0.b32.cont [11/16] 0.0, 128
        %5079 = vxpose.xlu0.b32.cont [12/16] 0.0, 128
        %5080 = vxpose.xlu0.b32.cont [13/16] 0.0, 128
        %5081 = vxpose.xlu0.b32.cont [14/16] 0.0, 128
        %5082 = vxpose.xlu0.b32.cont [15/16] 0.0, 128
        %5083 = vxpose.xlu0.b32.end [16/16] 0.0, 128
        %v5084 = vpop.trf.xlu0
        %v5085 = vpop.trf.xlu0
        %v5086 = vpop.trf.xlu0
        %v5087 = vpop.trf.xlu0
        %v5088 = vpop.trf.xlu0
        %v5089 = vpop.trf.xlu0
        %v5090 = vpop.trf.xlu0
        %v5091 = vpop.trf.xlu0
        %v5092 = vpop.trf.xlu0
        %v5093 = vpop.trf.xlu0
        %v5094 = vpop.trf.xlu0
        %v5095 = vpop.trf.xlu0
        %v5096 = vpop.trf.xlu0
        %v5097 = vpop.trf.xlu0
        %v5098 = vpop.trf.xlu0
        %v5099 = vpop.trf.xlu0
        %5100 = vxpose.xlu0.b32.start [1/16] %v4999, 128
        %5101 = vxpose.xlu0.b32.cont [2/16] 0.0, 128
        %5102 = vxpose.xlu0.b32.cont [3/16] 0.0, 128
        %5103 = vxpose.xlu0.b32.cont [4/16] 0.0, 128
        %5104 = vxpose.xlu0.b32.cont [5/16] 0.0, 128
        %5105 = vxpose.xlu0.b32.cont [6/16] 0.0, 128
        %5106 = vxpose.xlu0.b32.cont [7/16] 0.0, 128
        %5107 = vxpose.xlu0.b32.cont [8/16] 0.0, 128
        %5108 = vxpose.xlu0.b32.cont [9/16] 0.0, 128
        %5109 = vxpose.xlu0.b32.cont [10/16] 0.0, 128
        %5110 = vxpose.xlu0.b32.cont [11/16] 0.0, 128
        %5111 = vxpose.xlu0.b32.cont [12/16] 0.0, 128
        %5112 = vxpose.xlu0.b32.cont [13/16] 0.0, 128
        %5113 = vxpose.xlu0.b32.cont [14/16] 0.0, 128
        %5114 = vxpose.xlu0.b32.cont [15/16] 0.0, 128
        %5115 = vxpose.xlu0.b32.end [16/16] 0.0, 128
        %v5116 = vpop.trf.xlu0
        %v5117 = vpop.trf.xlu0
        %v5118 = vpop.trf.xlu0
        %v5119 = vpop.trf.xlu0
        %v5120 = vpop.trf.xlu0
        %v5121 = vpop.trf.xlu0
        %v5122 = vpop.trf.xlu0
        %v5123 = vpop.trf.xlu0
        %v5124 = vpop.trf.xlu0
        %v5125 = vpop.trf.xlu0
        %v5126 = vpop.trf.xlu0
        %v5127 = vpop.trf.xlu0
        %v5128 = vpop.trf.xlu0
        %v5129 = vpop.trf.xlu0
        %v5130 = vpop.trf.xlu0
        %v5131 = vpop.trf.xlu0
        %v5132 = vcombine.low %v5020, %v5084
        %v5133 = vcombine.high %v5020, %v5084
        %v5135 = vunpack.c.l.s4 1983009808
        %v5136 = vunpack.c.0.s8 %v5135
        %v5137 = vlaneseq
        %v5138 = vshrl.u32 %v5137, 7
        %v5139 = vsub.s32 %v5136, %v5138
        %v5140 = vrot.slane %v5132, %v5139
        %v5142 = vunpack.c.l.s4 1983009808
        %v5143 = vunpack.c.0.s8 %v5142
        %v5144 = vlaneseq
        %v5145 = vshrl.u32 %v5144, 7
        %v5146 = vsub.s32 %v5143, %v5145
        %v5147 = vrot.slane %v5133, %v5146
        %v5148 = vcombine.low %v5052, %v5116
        %v5149 = vcombine.high %v5052, %v5116
        %v5151 = vunpack.c.l.s4 1983009808
        %v5152 = vunpack.c.0.s8 %v5151
        %v5153 = vlaneseq
        %v5154 = vshrl.u32 %v5153, 7
        %v5155 = vsub.s32 %v5152, %v5154
        %v5156 = vrot.slane %v5148, %v5155
        %v5158 = vunpack.c.l.s4 1983009808
        %v5159 = vunpack.c.0.s8 %v5158
        %v5160 = vlaneseq
        %v5161 = vshrl.u32 %v5160, 7
        %v5162 = vsub.s32 %v5159, %v5161
        %v5163 = vrot.slane %v5149, %v5162
        %v5164 = vcombine.low %v5140, %v5156
        %v5165 = vcombine.high %v5140, %v5156
        %v5167 = vunpack.c.l.s4 1934713408
        %v5168 = vunpack.c.0.s8 %v5167
        %v5169 = vlaneseq
        %v5170 = vshrl.u32 %v5169, 7
        %v5171 = vsub.s32 %v5168, %v5170
        %v5172 = vrot.slane %v5164, %v5171
        %v5174 = vunpack.c.l.s4 1934713408
        %v5175 = vunpack.c.0.s8 %v5174
        %v5176 = vlaneseq
        %v5177 = vshrl.u32 %v5176, 7
        %v5178 = vsub.s32 %v5175, %v5177
        %v5179 = vrot.slane %v5165, %v5178
        %v5180 = vcombine.low %v5147, %v5163
        %v5181 = vcombine.high %v5147, %v5163
        %v5183 = vunpack.c.l.s4 1934713408
        %v5184 = vunpack.c.0.s8 %v5183
        %v5185 = vlaneseq
        %v5186 = vshrl.u32 %v5185, 7
        %v5187 = vsub.s32 %v5184, %v5186
        %v5188 = vrot.slane %v5180, %v5187
        %v5190 = vunpack.c.l.s4 1934713408
        %v5191 = vunpack.c.0.s8 %v5190
        %v5192 = vlaneseq
        %v5193 = vshrl.u32 %v5192, 7
        %v5194 = vsub.s32 %v5191, %v5193
        %v5195 = vrot.slane %v5181, %v5194
        %v5196 = vcombine.high %v5172, 0.0
        %v5197 = vcombine.high %v5179, 0.0
        %v5198 = vcombine.high %v5188, 0.0
        %v5199 = vcombine.high %v5195, 0.0
        %v5200 = vcombine.low %v5172, %v5179
        %v5202 = vunpack.c.l.s4 1983009808
        %v5203 = vunpack.c.0.s8 %v5202
        %v5204 = vlaneseq
        %v5205 = vshrl.u32 %v5204, 7
        %v5206 = vsub.s32 %v5203, %v5205
        %v5207 = vrot.slane %v5200, %v5206
        %v5208 = vcombine.low %v5196, %v5197
        %v5210 = vunpack.c.l.s4 1983009808
        %v5211 = vunpack.c.0.s8 %v5210
        %v5212 = vlaneseq
        %v5213 = vshrl.u32 %v5212, 7
        %v5214 = vsub.s32 %v5211, %v5213
        %v5215 = vrot.slane %v5208, %v5214
        %v5216 = vcombine.low %v5188, %v5195
        %v5218 = vunpack.c.l.s4 1983009808
        %v5219 = vunpack.c.0.s8 %v5218
        %v5220 = vlaneseq
        %v5221 = vshrl.u32 %v5220, 7
        %v5222 = vsub.s32 %v5219, %v5221
        %v5223 = vrot.slane %v5216, %v5222
        %v5224 = vcombine.low %v5198, %v5199
        %v5226 = vunpack.c.l.s4 1983009808
        %v5227 = vunpack.c.0.s8 %v5226
        %v5228 = vlaneseq
        %v5229 = vshrl.u32 %v5228, 7
        %v5230 = vsub.s32 %v5227, %v5229
        %v5231 = vrot.slane %v5224, %v5230
        %v5232 = vcombine.low %v5207, %v5215
        %v5233 = vcombine.high %v5207, %v5215
        %v5235 = vunpack.c.l.s4 1934713408
        %v5236 = vunpack.c.0.s8 %v5235
        %v5237 = vlaneseq
        %v5238 = vshrl.u32 %v5237, 7
        %v5239 = vsub.s32 %v5236, %v5238
        %v5240 = vrot.slane %v5232, %v5239
        %v5242 = vunpack.c.l.s4 1934713408
        %v5243 = vunpack.c.0.s8 %v5242
        %v5244 = vlaneseq
        %v5245 = vshrl.u32 %v5244, 7
        %v5246 = vsub.s32 %v5243, %v5245
        %v5247 = vrot.slane %v5233, %v5246
        %v5248 = vcombine.low %v5223, %v5231
        %v5249 = vcombine.high %v5223, %v5231
        %v5251 = vunpack.c.l.s4 1934713408
        %v5252 = vunpack.c.0.s8 %v5251
        %v5253 = vlaneseq
        %v5254 = vshrl.u32 %v5253, 7
        %v5255 = vsub.s32 %v5252, %v5254
        %v5256 = vrot.slane %v5248, %v5255
        %v5258 = vunpack.c.l.s4 1934713408
        %v5259 = vunpack.c.0.s8 %v5258
        %v5260 = vlaneseq
        %v5261 = vshrl.u32 %v5260, 7
        %v5262 = vsub.s32 %v5259, %v5261
        %v5263 = vrot.slane %v5249, %v5262
        %v5264 = vcombine.low %v5240, %v5256
        %v5265 = vcombine.high %v5240, %v5256
        %v5266 = vcombine.low %v5247, %v5263
        %v5267 = vcombine.high %v5247, %v5263
        %5269 = vrot.lane.b32.xlu0 %v5265, 8
        %v5270 = vpop.permute.xlu0 %5269
        %5273 = vrot.lane.b32.xlu0 %v5266, 16
        %v5274 = vpop.permute.xlu0 %5273
        %5277 = vrot.lane.b32.xlu0 %v5267, 24
        %v5278 = vpop.permute.xlu0 %5277
        %v5280 = vsel %vm1516, %v5264, %v5270
        %v5281 = vsel %vm2637, %v5280, %v5274
        %v5282 = vsel %vm2639, %v5281, %v5278
        %v5283 = vpack.c.bf16 %v5282, %v5282
        %v5284 = vld [vmem:[%s631] sm:$0xf]
        %v5285 = vld [vmem:[%s631 + $0x4] sm:$0xf]
        %v5286 = vld [vmem:[%s631 + $0x8] sm:$0xf]
        %v5287 = vld [vmem:[%s631 + $0xc] sm:$0xf]
        %v5288 = vlaneseq
        %v5289 = vshrl.u32 %v5288, 7
        %v5290 = vsub.s32 2, %v5289
        %v5291 = vrot.slane %v645, %v5290
        %v5296 = vunpack.c.l.b16 %v5284
        %v5297 = vunpack.c.l.b16 %v5285
        %v5298 = vunpack.c.l.b16 %v5286
        %v5299 = vunpack.c.l.b16 %v5287
        %v5300 = vpack.c.b16 %v5297, %v5296
        %v5301 = vpack.c.b16 %v5299, %v5298
        %v5305 = vsel %vm693, %v5283, 0
        %5307 = vmatprep.subr.bf16.mxu0 0
        %5308 = vmatpush1.bf16.msra.mxu0 0
        %5309 = vmatprep.subr.bf16.mxu0 0
        %5310 = vmatpush1.bf16.msra.mxu0 0
        %5311 = vmatprep.subr.bf16.mxu0 0
        %5312 = vmatpush1.bf16.msra.mxu0 0
        %5313 = vmatprep.subr.bf16.mxu0 0
        %5314 = vmatpush1.bf16.msra.mxu0 0
        %5315 = vmatprep.subr.bf16.mxu0 0
        %5316 = vmatpush1.bf16.msra.mxu0 0
        %5317 = vmatprep.subr.bf16.mxu0 0
        %5318 = vmatpush1.bf16.msra.mxu0 0
        %5319 = vmatprep.subr.bf16.mxu0 0
        %5320 = vmatpush1.bf16.msra.mxu0 %v5301
        %5321 = vmatprep.subr.bf16.mxu0 0
        %5322 = vmatpush1.bf16.msra.mxu0 %v5300
        %5323 = vmatprep.subr.bf16.mxu0 0
        %5324 = vmatpush2.bf16.msra.mxu0 0
        %5325 = vmatprep.subr.bf16.mxu0 0
        %5326 = vmatpush2.bf16.msra.mxu0 0
        %5327 = vmatprep.subr.bf16.mxu0 0
        %5328 = vmatpush2.bf16.msra.mxu0 0
        %5329 = vmatprep.subr.bf16.mxu0 0
        %5330 = vmatpush2.bf16.msra.mxu0 0
        %5331 = vmatprep.subr.bf16.mxu0 0
        %5332 = vmatpush2.bf16.msra.mxu0 0
        %5333 = vmatprep.subr.bf16.mxu0 0
        %5334 = vmatpush2.bf16.msra.mxu0 0
        %5335 = vmatprep.subr.bf16.mxu0 0
        %5336 = vmatpush2.bf16.msra.mxu0 0
        %5337 = vmatprep.subr.bf16.mxu0 0
        %5338 = vmatpush2.bf16.msra.mxu0 0
        %5339 = vmatprep.mubr.bf16.mxu0 0
        %5340 = vmatmul.mubr.bf16.gmra.mxu0 %v5305
        %v5341 = vpop.f32.mrf.mxu0
        %v5342 = vadd.f32 %v5291, %v5341
        %v5343 = vpop.f32.mrf.mxu0
        %v5344 = vpop.f32.mrf.mxu0
        %v5345 = vpop.f32.mrf.mxu0
        %5346 = vdwg.mxu0
        %v5347 = vadd.f32 %v2705, %v5342
        %v5348 = vsel %vm693, %v5347, 0.0
        %5349 = vadd.xlane.f32.xlu0 %v5348
        %v5350 = vpop.xlane.xlu0 %5349
        %v5351 = vmul.f32 %v5350, %v697
        %v5352 = vsub.f32 %v5347, %v5351
        %v5353 = vmul.f32 %v5352, %v5352
        %v5354 = vsel %vm693, %v5353, 0.0
        %5355 = vadd.xlane.f32.xlu0 %v5354
        %v5356 = vpop.xlane.xlu0 %5355
        %v5357 = vmul.f32 %v5356, %v697
        %v5358 = vadd.f32 %v5357, 1e-05
        %v5359 = vrsqrt.pop %v5358
        %v5360 = vmul.f32 %v5352, %v5359
        %v5361 = vlaneseq
        %v5362 = vshrl.u32 %v5361, 7
        %v5363 = vsub.s32 4, %v5362
        %v5364 = vrot.slane %v644, %v5363
        %v5365 = vmul.f32 %v5360, %v5364
        %v5366 = vlaneseq
        %v5367 = vshrl.u32 %v5366, 7
        %v5368 = vsub.s32 5, %v5367
        %v5369 = vrot.slane %v644, %v5368
        %v5370 = vadd.f32 %v5365, %v5369
        %v5371 = vpack.c.bf16 %v5370, %v5370
        %v5372 = vld [vmem:[%s636] sm:$0xf]
        %v5373 = vld [vmem:[%s636 + $0x4] sm:$0xf]
        %v5374 = vld [vmem:[%s636 + $0x8] sm:$0xf]
        %v5375 = vld [vmem:[%s636 + $0xc] sm:$0xf]
        %v5376 = vlaneseq
        %v5377 = vshrl.u32 %v5376, 7
        %v5378 = vsub.s32 3, %v5377
        %v5379 = vrot.slane %v645, %v5378
        %v5384 = vunpack.c.l.b16 %v5372
        %v5385 = vunpack.c.l.b16 %v5373
        %v5386 = vunpack.c.l.b16 %v5374
        %v5387 = vunpack.c.l.b16 %v5375
        %v5388 = vpack.c.b16 %v5385, %v5384
        %v5389 = vpack.c.b16 %v5387, %v5386
        %v5393 = vsel %vm693, %v5371, 0
        %5395 = vmatprep.subr.bf16.mxu0 0
        %5396 = vmatpush1.bf16.msra.mxu0 0
        %5397 = vmatprep.subr.bf16.mxu0 0
        %5398 = vmatpush1.bf16.msra.mxu0 0
        %5399 = vmatprep.subr.bf16.mxu0 0
        %5400 = vmatpush1.bf16.msra.mxu0 0
        %5401 = vmatprep.subr.bf16.mxu0 0
        %5402 = vmatpush1.bf16.msra.mxu0 0
        %5403 = vmatprep.subr.bf16.mxu0 0
        %5404 = vmatpush1.bf16.msra.mxu0 0
        %5405 = vmatprep.subr.bf16.mxu0 0
        %5406 = vmatpush1.bf16.msra.mxu0 0
        %5407 = vmatprep.subr.bf16.mxu0 0
        %5408 = vmatpush1.bf16.msra.mxu0 %v5389
        %5409 = vmatprep.subr.bf16.mxu0 0
        %5410 = vmatpush1.bf16.msra.mxu0 %v5388
        %5411 = vmatprep.subr.bf16.mxu0 0
        %5412 = vmatpush2.bf16.msra.mxu0 0
        %5413 = vmatprep.subr.bf16.mxu0 0
        %5414 = vmatpush2.bf16.msra.mxu0 0
        %5415 = vmatprep.subr.bf16.mxu0 0
        %5416 = vmatpush2.bf16.msra.mxu0 0
        %5417 = vmatprep.subr.bf16.mxu0 0
        %5418 = vmatpush2.bf16.msra.mxu0 0
        %5419 = vmatprep.subr.bf16.mxu0 0
        %5420 = vmatpush2.bf16.msra.mxu0 0
        %5421 = vmatprep.subr.bf16.mxu0 0
        %5422 = vmatpush2.bf16.msra.mxu0 0
        %5423 = vmatprep.subr.bf16.mxu0 0
        %5424 = vmatpush2.bf16.msra.mxu0 0
        %5425 = vmatprep.subr.bf16.mxu0 0
        %5426 = vmatpush2.bf16.msra.mxu0 0
        %5427 = vmatprep.mubr.bf16.mxu0 0
        %5428 = vmatmul.mubr.bf16.gmra.mxu0 %v5393
        %v5429 = vpop.f32.mrf.mxu0
        %v5430 = vadd.f32 %v5379, %v5429
        %v5431 = vpop.f32.mrf.mxu0
        %v5432 = vpop.f32.mrf.mxu0
        %v5433 = vpop.f32.mrf.mxu0
        %5434 = vdwg.mxu0
        %v5435 = vmul.f32 %v5430, 0.5
        %v5436 = vmul.f32 %v5430, 0.70710677
        %v5437 = verf.f32.pop %v5436
        %v5438 = vadd.f32 %v5437, 1.0
        %v5439 = vmul.f32 %v5435, %v5438
        %v5440 = vpack.c.bf16 %v5439, %v5439
        %v5441 = vld [vmem:[%s641] sm:$0xf]
        %v5442 = vld [vmem:[%s641 + $0x4] sm:$0xf]
        %v5443 = vld [vmem:[%s641 + $0x8] sm:$0xf]
        %v5444 = vld [vmem:[%s641 + $0xc] sm:$0xf]
        %v5445 = vld [vmem:[%s641 + $0x10] sm:$0xf]
        %v5446 = vld [vmem:[%s641 + $0x14] sm:$0xf]
        %v5447 = vld [vmem:[%s641 + $0x18] sm:$0xf]
        %v5448 = vld [vmem:[%s641 + $0x1c] sm:$0xf]
        %v5449 = vlaneseq
        %v5450 = vshrl.u32 %v5449, 7
        %v5451 = vsub.s32 4, %v5450
        %v5452 = vrot.slane %v645, %v5451
        %v5461 = vunpack.c.l.b16 %v5441
        %v5462 = vunpack.c.l.b16 %v5442
        %v5463 = vunpack.c.l.b16 %v5443
        %v5464 = vunpack.c.l.b16 %v5444
        %v5465 = vunpack.c.l.b16 %v5445
        %v5466 = vunpack.c.l.b16 %v5446
        %v5467 = vunpack.c.l.b16 %v5447
        %v5468 = vunpack.c.l.b16 %v5448
        %v5469 = vpack.c.b16 %v5462, %v5461
        %v5470 = vpack.c.b16 %v5464, %v5463
        %v5471 = vpack.c.b16 %v5466, %v5465
        %v5472 = vpack.c.b16 %v5468, %v5467
        %vm5477 = vcmask 523264
        %v5479 = vsel %vm5477, %v5440, 0
        %5481 = vmatprep.subr.bf16.mxu0 0
        %5482 = vmatpush1.bf16.msra.mxu0 0
        %5483 = vmatprep.subr.bf16.mxu0 0
        %5484 = vmatpush1.bf16.msra.mxu0 0
        %5485 = vmatprep.subr.bf16.mxu0 0
        %5486 = vmatpush1.bf16.msra.mxu0 0
        %5487 = vmatprep.subr.bf16.mxu0 0
        %5488 = vmatpush1.bf16.msra.mxu0 0
        %5489 = vmatprep.subr.bf16.mxu0 0
        %5490 = vmatpush1.bf16.msra.mxu0 %v5472
        %5491 = vmatprep.subr.bf16.mxu0 0
        %5492 = vmatpush1.bf16.msra.mxu0 %v5471
        %5493 = vmatprep.subr.bf16.mxu0 0
        %5494 = vmatpush1.bf16.msra.mxu0 %v5470
        %5495 = vmatprep.subr.bf16.mxu0 0
        %5496 = vmatpush1.bf16.msra.mxu0 %v5469
        %5497 = vmatprep.subr.bf16.mxu0 0
        %5498 = vmatpush2.bf16.msra.mxu0 0
        %5499 = vmatprep.subr.bf16.mxu0 0
        %5500 = vmatpush2.bf16.msra.mxu0 0
        %5501 = vmatprep.subr.bf16.mxu0 0
        %5502 = vmatpush2.bf16.msra.mxu0 0
        %5503 = vmatprep.subr.bf16.mxu0 0
        %5504 = vmatpush2.bf16.msra.mxu0 0
        %5505 = vmatprep.subr.bf16.mxu0 0
        %5506 = vmatpush2.bf16.msra.mxu0 0
        %5507 = vmatprep.subr.bf16.mxu0 0
        %5508 = vmatpush2.bf16.msra.mxu0 0
        %5509 = vmatprep.subr.bf16.mxu0 0
        %5510 = vmatpush2.bf16.msra.mxu0 0
        %5511 = vmatprep.subr.bf16.mxu0 0
        %5512 = vmatpush2.bf16.msra.mxu0 0
        %5513 = vmatprep.mubr.bf16.mxu0 0
        %5514 = vmatmul.mubr.bf16.gmra.mxu0 %v5479
        %v5515 = vpop.f32.mrf.mxu0
        %v5516 = vadd.f32 %v5452, %v5515
        %v5517 = vpop.f32.mrf.mxu0
        %v5518 = vpop.f32.mrf.mxu0
        %v5519 = vpop.f32.mrf.mxu0
        %5520 = vdwg.mxu0
        %v5521 = vadd.f32 %v5347, %v5516
        %5522 = vst.msk [vmem:[#allocation2] sm:$0xff] %vm693, %v5521
        %p5523 = scmp.eq.s32.totalorder %s32, 1
        // Predicated region
        $region77: #{bart_decoder_forward.1} parent=71 // pred_check
          %p5524 = pneg %p5523
        $region78: #{bart_decoder_forward.1} parent=71 // pred_check_branch
          %5526 = sbr.rel (%p5524) target = $region80
        $region79: #{bart_decoder_forward.1} parent=71 // pred_region
          %v5527 = vsel %vm693, %v5521, 0.0
          %5528 = vadd.xlane.f32.xlu0 %v5527
          %v5529 = vpop.xlane.xlu0 %5528
          %v5530 = vmul.f32 %v5529, %v697
          %v5531 = vsub.f32 %v5521, %v5530
          %v5532 = vmul.f32 %v5531, %v5531
          %v5533 = vsel %vm693, %v5532, 0.0
          %5534 = vadd.xlane.f32.xlu0 %v5533
          %v5535 = vpop.xlane.xlu0 %5534
          %v5536 = vmul.f32 %v5535, %v697
          %v5537 = vadd.f32 %v5536, 1e-05
          %v5538 = vrsqrt.pop %v5537
          %v5539 = vmul.f32 %v5531, %v5538
          %v5540 = vlaneseq
          %v5541 = vshrl.u32 %v5540, 7
          %v5542 = vsub.s32 2, %v5541
          %v5543 = vrot.slane %v643, %v5542
          %v5544 = vmul.f32 %v5539, %v5543
          %v5545 = vlaneseq
          %v5546 = vshrl.u32 %v5545, 7
          %v5547 = vsub.s32 3, %v5546
          %v5548 = vrot.slane %v643, %v5547
          %v5549 = vadd.f32 %v5544, %v5548
          %v5550 = vpack.c.bf16 %v5549, %v5549
          %v5551 = vld [vmem:[%s12] sm:$0xf]
          %v5552 = vld [vmem:[%s12 + $0x4] sm:$0xf]
          %v5553 = vld [vmem:[%s12 + $0x8] sm:$0xf]
          %v5554 = vld [vmem:[%s12 + $0xc] sm:$0xf]
          %v5559 = vunpack.c.l.b16 %v5551
          %v5560 = vunpack.c.l.b16 %v5552
          %v5561 = vunpack.c.l.b16 %v5553
          %v5562 = vunpack.c.l.b16 %v5554
          %v5563 = vpack.c.b16 %v5560, %v5559
          %v5564 = vpack.c.b16 %v5562, %v5561
          %v5568 = vsel %vm693, %v5550, 0
          %5570 = vmatprep.subr.bf16.mxu0 0
          %5571 = vmatpush1.bf16.msra.mxu0 0
          %5572 = vmatprep.subr.bf16.mxu0 0
          %5573 = vmatpush1.bf16.msra.mxu0 0
          %5574 = vmatprep.subr.bf16.mxu0 0
          %5575 = vmatpush1.bf16.msra.mxu0 0
          %5576 = vmatprep.subr.bf16.mxu0 0
          %5577 = vmatpush1.bf16.msra.mxu0 0
          %5578 = vmatprep.subr.bf16.mxu0 0
          %5579 = vmatpush1.bf16.msra.mxu0 0
          %5580 = vmatprep.subr.bf16.mxu0 0
          %5581 = vmatpush1.bf16.msra.mxu0 0
          %5582 = vmatprep.subr.bf16.mxu0 0
          %5583 = vmatpush1.bf16.msra.mxu0 %v5564
          %5584 = vmatprep.subr.bf16.mxu0 0
          %5585 = vmatpush1.bf16.msra.mxu0 %v5563
          %5586 = vmatprep.subr.bf16.mxu0 0
          %5587 = vmatpush2.bf16.msra.mxu0 0
          %5588 = vmatprep.subr.bf16.mxu0 0
          %5589 = vmatpush2.bf16.msra.mxu0 0
          %5590 = vmatprep.subr.bf16.mxu0 0
          %5591 = vmatpush2.bf16.msra.mxu0 0
          %5592 = vmatprep.subr.bf16.mxu0 0
          %5593 = vmatpush2.bf16.msra.mxu0 0
          %5594 = vmatprep.subr.bf16.mxu0 0
          %5595 = vmatpush2.bf16.msra.mxu0 0
          %5596 = vmatprep.subr.bf16.mxu0 0
          %5597 = vmatpush2.bf16.msra.mxu0 0
          %5598 = vmatprep.subr.bf16.mxu0 0
          %5599 = vmatpush2.bf16.msra.mxu0 0
          %5600 = vmatprep.subr.bf16.mxu0 0
          %5601 = vmatpush2.bf16.msra.mxu0 0
          %5602 = vmatprep.mubr.bf16.mxu0 0
          %5603 = vmatmul.mubr.bf16.gmra.mxu0 %v5568
          %v5604 = vpop.f32.mrf.mxu0
          %v5605 = vadd.f32 0.0, %v5604
          %v5606 = vpop.f32.mrf.mxu0
          %v5607 = vpop.f32.mrf.mxu0
          %v5608 = vpop.f32.mrf.mxu0
          %5609 = vdwg.mxu0
          %5610 = vst.msk [vmem:[%s589] sm:$0xff] %vm5477, %v5605
        $region80: #{bart_decoder_forward.1} parent=71 // pred_fallthru
          _
        %s5611 = sand.u32 %s375, 1
        %s5612 = scalar_lea.sflag [#allocation4], %s5611
        %s5613 = sand.u32 %s375, 1
        %s5614 = smul.addr %s5613, 8
        %s5615 = scalar_lea.vmem [#allocation3], %s5614
        // Predicated region
        $region81: #{bart_decoder_forward.1} parent=71 // pred_check
          %p5616 = pneg %p385
        $region82: #{bart_decoder_forward.1} parent=71 // pred_check_branch
          %5618 = sbr.rel (%p5616) target = $region84
        $region83: #{bart_decoder_forward.1} parent=71 // pred_region
          %s5620 = ssub.s32 128, 128
          %5621 = vsyncadd %s5612, %s5620
          %s5622 = smul.addr %s31, 128
          %s5623 = scalar_lea.hbm %s13, %s5622
          %s5625 = sshll.u32 %s5615, 4
          %s5626 = int_to_ptr.vmem [resolvable:$true] %s5625
          %5628 = dma.vmem_to_hbm [thread:$0]  %s5626, 128, %s5623, %s5612
        $region84: #{bart_decoder_forward.1} parent=71 // pred_fallthru
          _
      $region72: #{bart_decoder_forward.1} parent=5 // pred_fallthru
        _
      %p5629 = scmp.le.s32.totalorder 2, %s22
      // Predicated region
      $region85: #{bart_decoder_forward.1} parent=5 // pred_check
        %p5630 = pneg %p5629
      $region86: #{bart_decoder_forward.1} parent=5 // pred_check_branch
        %5632 = sbr.rel (%p5630) target = $region88
      $region87: #{bart_decoder_forward.1} parent=5 // pred_region
        %s5633 = ssub.s32 %s22, 2
        // Predicated region
        $region89: #{bart_decoder_forward.1} parent=87 // pred_check
          %p5634 = pneg %p391
        $region90: #{bart_decoder_forward.1} parent=87 // pred_check_branch
          %5636 = sbr.rel (%p5634) target = $region92
        $region91: #{bart_decoder_forward.1} parent=87 // pred_region
          %s5637 = sand.u32 %s376, 1
          %s5638 = scalar_lea.sflag [#allocation4], %s5637
          %s5639 = sand.u32 %s376, 1
          %s5640 = smul.addr %s5639, 8
          %s5641 = scalar_lea.vmem [#allocation3], %s5640
          %5642 = dma.done %s5638, 128
        $region92: #{bart_decoder_forward.1} parent=87 // pred_fallthru
          _
      $region88: #{bart_decoder_forward.1} parent=5 // pred_fallthru
        _
    $region6: #{bart_decoder_forward.1} parent=1 // loop_footer
      %s26 = sadd.s32 1, %s22
    $region7: #{bart_decoder_forward.1} parent=1 // loop_footer_branch
      %21 = sbr.rel target = $region3
    $region8: #{bart_decoder_forward.1} parent=1 // loop_exit
      _
    %5643 = vsyncpa [#allocation4], 1
    %s5644 = scalar_lea.sflag [#allocation4], 1
    %5645 = vsyncpa %s5644, 1

</llo_original>
